<compile_context>
chip_gen: v6e
topology: v6e:2x2x1
jax: 0.10.0
libtpu: 0.0.40
codegen_flags: <defaults>
</compile_context>

<pallas_src>
import jax
import jax.numpy as jnp
from jax.experimental import pallas as pl
from jax.experimental.pallas import tpu as pltpu

TILE_N = 128  # point-tile size: sublane aligned, multiple of the MXU M tile


# --------------------- pass 1: linear(+folded BN)+ReLU and vectorized segment max ---------------------
def _pfn_pass1_kernel(x_ref, w_ref, b_ref, inv_ref, y_ref, xmax_ref):
    # x_ref    : (TILE_N, Cin)   f32
    # w_ref    : (Cin, Cout)     f32   (BN-folded weight)
    # b_ref    : (1, Cout)       f32   (BN-folded bias)
    # inv_ref  : (TILE_N, 1)     int32 (segment id per point; padded rows == S_pad)
    # y_ref    : (TILE_N, Cout)  f32   out (per-point features)
    # xmax_ref : (S_pad, Cout)   f32   out (resident per-segment max accumulator)
    i = pl.program_id(0)

    # ReLU guarantees y >= 0, so 0 is a valid identity for the running segment max
    # (empty segments come out as 0, matching scatter_max's zero-initialized out).
    @pl.when(i == 0)
    def _():
        xmax_ref[...] = jnp.zeros_like(xmax_ref)

    y = jnp.dot(x_ref[...], w_ref[...], preferred_element_type=jnp.float32)
    y = jnp.maximum(y + b_ref[...], 0.0)                       # (TILE_N, Cout)
    y_ref[...] = y

    tn = y.shape[0]
    s_pad = xmax_ref.shape[0]
    seg_iota = jax.lax.broadcasted_iota(jnp.int32, (tn, s_pad), 1)
    onehot = (seg_iota == inv_ref[...]).astype(jnp.float32)     # (TILE_N, S_pad)
    # masked[r, s, c] = onehot[r, s] * y[r, c]; padded / out-of-range rows contribute 0.
    masked = onehot[:, :, None] * y[:, None, :]                 # (TILE_N, S_pad, Cout)
    contrib = masked.max(axis=0)                                # (S_pad, Cout)
    xmax_ref[...] = jnp.maximum(xmax_ref[...], contrib)


# --------------------- pass 2: fused gather x_max[unq_inv] + concat with y ---------------------
def _pfn_pass2_kernel(xmax_ref, inv_ref, y_ref, out_ref):
    # xmax_ref : (S_pad, Cout)     f32
    # inv_ref  : (TILE_N, 1)       int32
    # y_ref    : (TILE_N, Cout)    f32
    # out_ref  : (TILE_N, 2*Cout)  f32
    s_pad = xmax_ref.shape[0]
    tn = inv_ref.shape[0]
    seg_iota = jax.lax.broadcasted_iota(jnp.int32, (tn, s_pad), 1)
    onehot = (seg_iota == inv_ref[...]).astype(jnp.float32)     # (TILE_N, S_pad)
    gathered = jnp.dot(onehot, xmax_ref[...],
                       preferred_element_type=jnp.float32)      # exact row copy via MXU
    out_ref[...] = jnp.concatenate([y_ref[...], gathered], axis=1)


def pfn_layer_v2(inputs, unq_inv, params, num_segments, last_layer=False):
    """inputs: (N, Cin) f32, unq_inv: (N,) int32.

    Returns concat (N, 2*Cout) if last_layer=False, else x_max (S, Cout)."""
    n, c_in = inputs.shape
    w = params["weight"]                                         # (Cin, Cout)
    c_out = w.shape[1]
    s = int(num_segments)

    # Fold eval-mode BatchNorm1d (eps=1e-3) into the linear layer.
    eps = 1e-3
    scale = params["gamma"] * jax.lax.rsqrt(params["running_var"] + eps)          # (Cout,)
    w_fold = (w * scale[None, :]).astype(jnp.float32)                             # (Cin, Cout)
    b_fold = (params["beta"] - params["running_mean"] * scale).reshape(1, c_out).astype(jnp.float32)

    # Pad N up to a multiple of TILE_N; padded rows get segment id == S_pad (never matched).
    n_pad = pl.cdiv(n, TILE_N) * TILE_N
    pad = n_pad - n
    s_pad = ((s + 7) // 8) * 8                                   # sublane-align the accumulator

    x_pad = jnp.pad(inputs.astype(jnp.float32), ((0, pad), (0, 0)))
    inv2d = jnp.pad(unq_inv.astype(jnp.int32), (0, pad),
                    constant_values=s_pad).reshape(n_pad, 1)

    grid = (n_pad // TILE_N,)

    y_pad, xmax_pad = pl.pallas_call(
        _pfn_pass1_kernel,
        out_shape=(
            jax.ShapeDtypeStruct((n_pad, c_out), jnp.float32),
            jax.ShapeDtypeStruct((s_pad, c_out), jnp.float32),
        ),
        grid=grid,
        in_specs=[
            pl.BlockSpec((TILE_N, c_in), lambda i: (i, 0)),
            pl.BlockSpec((c_in, c_out), lambda i: (0, 0)),
            pl.BlockSpec((1, c_out), lambda i: (0, 0)),
            pl.BlockSpec((TILE_N, 1), lambda i: (i, 0)),
        ],
        out_specs=(
            pl.BlockSpec((TILE_N, c_out), lambda i: (i, 0)),
            pl.BlockSpec((s_pad, c_out), lambda i: (0, 0)),      # resident accumulator (P3)
        ),
        compiler_params=pltpu.CompilerParams(dimension_semantics=("arbitrary",)),
    )(x_pad, w_fold, b_fold, inv2d)

    if last_layer:
        return xmax_pad[:s]

    out_pad = pl.pallas_call(
        _pfn_pass2_kernel,
        out_shape=jax.ShapeDtypeStruct((n_pad, 2 * c_out), jnp.float32),
        grid=grid,
        in_specs=[
            pl.BlockSpec((s_pad, c_out), lambda i: (0, 0)),
            pl.BlockSpec((TILE_N, 1), lambda i: (i, 0)),
            pl.BlockSpec((TILE_N, c_out), lambda i: (i, 0)),
        ],
        out_specs=pl.BlockSpec((TILE_N, 2 * c_out), lambda i: (i, 0)),
        compiler_params=pltpu.CompilerParams(dimension_semantics=("parallel",)),
    )(xmax_pad, inv2d, y_pad)

    return out_pad[:n]


def make_params(key, in_channels, out_channels, last_layer=False):
    if not last_layer:
        out_channels = out_channels // 2
    k1, k2, k3, k4, k5 = jax.random.split(key, 5)
    return {
        "weight": 0.1 * jax.random.normal(k1, (in_channels, out_channels), jnp.float32),
        "gamma": 1.0 + 0.1 * jax.random.normal(k2, (out_channels,), jnp.float32),
        "beta": 0.1 * jax.random.normal(k3, (out_channels,), jnp.float32),
        "running_mean": 0.1 * jax.random.normal(k4, (out_channels,), jnp.float32),
        "running_var": 0.5 + jnp.abs(jax.random.normal(k5, (out_channels,), jnp.float32)),
    }


def reference_forward(inputs, unq_inv, params, num_segments, last_layer=False):
    y = inputs @ params["weight"]
    inv_std = jax.lax.rsqrt(params["running_var"] + 1e-3)
    y = (y - params["running_mean"]) * inv_std * params["gamma"] + params["beta"]
    y = jnp.maximum(y, 0.0)
    x_max = jax.ops.segment_max(y, unq_inv, num_segments=num_segments)
    if last_layer:
        return x_max
    return jnp.concatenate([y, x_max[unq_inv]], axis=1)


if __name__ == "__main__":
    key = jax.random.PRNGKey(0)
    k_in, k_perm, k_par = jax.random.split(key, 3)

    N = 512           # number of points (multiple tiles: exercises the resident accumulator)
    IN_CH = 16        # in_channels
    OUT_CH = 32       # out_channels (module halves it internally -> Cout=16, concat -> 32)
    S = 32            # number of unique voxels (segments)

    inputs = jax.random.normal(k_in, (N, IN_CH), jnp.float32)
    # every segment id 0..S-1 appears at least once, in shuffled order
    unq_inv = jax.random.permutation(k_perm, jnp.arange(N, dtype=jnp.int32) % S)

    # last_layer=False path (concat output)
    params = make_params(k_par, IN_CH, OUT_CH, last_layer=False)
    out = pfn_layer_v2(inputs, unq_inv, params, num_segments=S, last_layer=False)
    out = jax.block_until_ready(out)
    ref = reference_forward(inputs, unq_inv, params, num_segments=S, last_layer=False)
    assert out.shape == (N, OUT_CH), out.shape
    assert jnp.allclose(out, ref, atol=1e-4, rtol=1e-4), float(jnp.max(jnp.abs(out - ref)))

    # last_layer=True path (per-segment max only)
    params_last = make_params(k_par, IN_CH, OUT_CH, last_layer=True)
    xm = pfn_layer_v2(inputs, unq_inv, params_last, num_segments=S, last_layer=True)
    xm = jax.block_until_ready(xm)
    ref_xm = reference_forward(inputs, unq_inv, params_last, num_segments=S, last_layer=True)
    assert xm.shape == (S, OUT_CH), xm.shape
    assert jnp.allclose(xm, ref_xm, atol=1e-4, rtol=1e-4), float(jnp.max(jnp.abs(xm - ref_xm)))

    print("KERNEL_OK")
</pallas_src>

<mosaic_0001>
module attributes {stable_mosaic.version = 11 : i64} {
  func.func @_pfn_pass1_kernel(%arg0: i32, %arg1: memref<128x16xf32, #tpu.memory_space<vmem>>, %arg2: memref<16x16xf32, #tpu.memory_space<vmem>>, %arg3: memref<1x16xf32, #tpu.memory_space<vmem>>, %arg4: memref<128x1xi32, #tpu.memory_space<vmem>>, %arg5: memref<128x16xf32, #tpu.memory_space<vmem>>, %arg6: memref<32x16xf32, #tpu.memory_space<vmem>>) attributes {dimension_semantics = [#tpu.dimension_semantics<arbitrary>], iteration_bounds = array<i64: 4>, scalar_prefetch = 0 : i64, scratch_operands = 0 : i64, tpu.core_type = #tpu.core_type<tc>, window_params = [{transform_indices = @transform_0, window_bounds = array<i64: 128, 16>}, {pipeline_mode = #tpu.pipeline_mode<synchronous>, transform_indices = @transform_1, window_bounds = array<i64: 16, 16>}, {pipeline_mode = #tpu.pipeline_mode<synchronous>, transform_indices = @transform_2, window_bounds = array<i64: 1, 16>}, {transform_indices = @transform_3, window_bounds = array<i64: 128, 1>}, {transform_indices = @transform_4, window_bounds = array<i64: 128, 16>}, {pipeline_mode = #tpu.pipeline_mode<synchronous>, transform_indices = @transform_5, window_bounds = array<i64: 32, 16>}]} {
    %c0_i32 = arith.constant 0 : i32
    %0 = arith.cmpi eq, %arg0, %c0_i32 : i32
    %1 = arith.extui %0 : i1 to i32
    %c0_i32_0 = arith.constant 0 : i32
    %2 = arith.cmpi ne, %1, %c0_i32_0 : i32
    scf.if %2 {
      %cst_16 = arith.constant 0.000000e+00 : f32
      %27 = vector.broadcast %cst_16 : f32 to vector<32x16xf32>
      %c0_17 = arith.constant 0 : index
      %c0_18 = arith.constant 0 : index
      %28 = vector.load %arg6[%c0_17, %c0_18] : memref<32x16xf32, #tpu.memory_space<vmem>>, vector<32x16xf32>
      tpu.vector_store %arg6[%c0_17, %c0_18], %27 {strides = array<i32>} : memref<32x16xf32, #tpu.memory_space<vmem>>, vector<32x16xf32>,
    } else {
    }
    %c0 = arith.constant 0 : index
    %c0_1 = arith.constant 0 : index
    %3 = vector.load %arg1[%c0, %c0_1] : memref<128x16xf32, #tpu.memory_space<vmem>>, vector<128x16xf32>
    %c0_2 = arith.constant 0 : index
    %c0_3 = arith.constant 0 : index
    %4 = vector.load %arg2[%c0_2, %c0_3] : memref<16x16xf32, #tpu.memory_space<vmem>>, vector<16x16xf32>
    %cst = arith.constant dense<0.000000e+00> : vector<128x16xf32>
    %5 = tpu.matmul %3, %4, %cst {dimension_numbers = #tpu.dot_dimension_numbers<[1], [0], [0], [1], [0, 0, 1, 1], [], []>} : vector<128x16xf32>, vector<16x16xf32>, vector<128x16xf32> -> vector<128x16xf32>
    %c0_4 = arith.constant 0 : index
    %c0_5 = arith.constant 0 : index
    %6 = vector.load %arg3[%c0_4, %c0_5] : memref<1x16xf32, #tpu.memory_space<vmem>>, vector<1x16xf32>
    %7 = vector.broadcast %6 : vector<1x16xf32> to vector<128x16xf32>
    %8 = arith.addf %5, %7 : vector<128x16xf32>
    %cst_6 = arith.constant 0.000000e+00 : f32
    %9 = vector.broadcast %cst_6 : f32 to vector<128x16xf32>
    %10 = arith.maximumf %8, %9 : vector<128x16xf32>
    %c0_7 = arith.constant 0 : index
    %c0_8 = arith.constant 0 : index
    %11 = vector.load %arg5[%c0_7, %c0_8] : memref<128x16xf32, #tpu.memory_space<vmem>>, vector<128x16xf32>
    tpu.vector_store %arg5[%c0_7, %c0_8], %10 {strides = array<i32>} : memref<128x16xf32, #tpu.memory_space<vmem>>, vector<128x16xf32>,
    %12 = tpu.iota {dimensions = array<i32: 1>} : vector<128x32xi32>
    %c0_9 = arith.constant 0 : index
    %c0_10 = arith.constant 0 : index
    %13 = vector.load %arg4[%c0_9, %c0_10] : memref<128x1xi32, #tpu.memory_space<vmem>>, vector<128x1xi32>
    %14 = vector.broadcast %13 : vector<128x1xi32> to vector<128x32xi32>
    %15 = arith.cmpi eq, %12, %14 : vector<128x32xi32>
    %16 = arith.extui %15 : vector<128x32xi1> to vector<128x32xi32>
    %17 = arith.sitofp %16 : vector<128x32xi32> to vector<128x32xf32>
    %18 = vector.shape_cast %17 : vector<128x32xf32> to vector<128x32x1xf32>
    %19 = vector.shape_cast %10 : vector<128x16xf32> to vector<128x1x16xf32>
    %20 = vector.broadcast %18 : vector<128x32x1xf32> to vector<128x32x16xf32>
    %21 = vector.broadcast %19 : vector<128x1x16xf32> to vector<128x32x16xf32>
    %22 = arith.mulf %20, %21 : vector<128x32x16xf32>
    %cst_11 = arith.constant dense<0xFF800000> : vector<32x16xf32>
    %23 = vector.multi_reduction <maximumf>, %22, %cst_11 [0] : vector<128x32x16xf32> to vector<32x16xf32>
    %c0_12 = arith.constant 0 : index
    %c0_13 = arith.constant 0 : index
    %24 = vector.load %arg6[%c0_12, %c0_13] : memref<32x16xf32, #tpu.memory_space<vmem>>, vector<32x16xf32>
    %25 = arith.maximumf %24, %23 : vector<32x16xf32>
    %c0_14 = arith.constant 0 : index
    %c0_15 = arith.constant 0 : index
    %26 = vector.load %arg6[%c0_14, %c0_15] : memref<32x16xf32, #tpu.memory_space<vmem>>, vector<32x16xf32>
    tpu.vector_store %arg6[%c0_14, %c0_15], %25 {strides = array<i32>} : memref<32x16xf32, #tpu.memory_space<vmem>>, vector<32x16xf32>,
    return
  }
  func.func @transform_0(%arg0: i32) -> (i32, i32) {
    %c0_i32 = arith.constant 0 : i32
    %c0_i32_0 = arith.constant 0 : i32
    return %arg0, %c0_i32 : i32, i32
  }
  func.func @transform_1(%arg0: i32) -> (i32, i32) {
    %c0_i32 = arith.constant 0 : i32
    %c0_i32_0 = arith.constant 0 : i32
    %c0_i32_1 = arith.constant 0 : i32
    return %c0_i32, %c0_i32_0 : i32, i32
  }
  func.func @transform_2(%arg0: i32) -> (i32, i32) {
    %c0_i32 = arith.constant 0 : i32
    %c0_i32_0 = arith.constant 0 : i32
    %c0_i32_1 = arith.constant 0 : i32
    return %c0_i32, %c0_i32_0 : i32, i32
  }
  func.func @transform_3(%arg0: i32) -> (i32, i32) {
    %c0_i32 = arith.constant 0 : i32
    %c0_i32_0 = arith.constant 0 : i32
    return %arg0, %c0_i32 : i32, i32
  }
  func.func @transform_4(%arg0: i32) -> (i32, i32) {
    %c0_i32 = arith.constant 0 : i32
    %c0_i32_0 = arith.constant 0 : i32
    return %arg0, %c0_i32 : i32, i32
  }
  func.func @transform_5(%arg0: i32) -> (i32, i32) {
    %c0_i32 = arith.constant 0 : i32
    %c0_i32_0 = arith.constant 0 : i32
    %c0_i32_1 = arith.constant 0 : i32
    return %c0_i32, %c0_i32_0 : i32, i32
  }
}

</mosaic_0001>

<llo_original>
// kernel: tpu_custom_call.1
$region0: #{tpu_custom_call.1}
  #allocation0 [shape = 'u32[]', space=smem, size = 0x4, offset = 0x4, fixed_abs, tag = 'smem constant byte address 0x4 - core index']
  #allocation1 [shape = 'u32[144,128]{1,0:T(1,128)}', space=vmem, size = 0x12000, scoped, tag = 'internal scratch']
  %s0 = inlined_call_operand.vmem [shape: f32[512,16], index: 0, kind: input, shape index: {}]
  %s1 = inlined_call_operand.vmem [shape: f32[16,16], index: 1, kind: input, shape index: {}]
  %s2 = inlined_call_operand.vmem [shape: f32[1,16], index: 2, kind: input, shape index: {}]
  %s3 = inlined_call_operand.vmem [shape: s32[512,1], index: 3, kind: input, shape index: {}]
  %s4 = inlined_call_operand.vmem [shape: f32[512,16], index: 4, kind: output, shape index: {0}]
  %s5 = inlined_call_operand.vmem [shape: f32[32,16], index: 5, kind: output, shape index: {1}]
  %6 = xla_tuple %s4, %s5
  %s7 = sld [smem:[#allocation0]]
  $region61: #{tpu_custom_call.1} parent=0
    _
  %s9 = ssub.s32 1, %s7
  %s10 = scalar_select 0, %s9, %s7
  loop: start=0, step=1, limit=6
  $region2: #{tpu_custom_call.1} parent=0 // loop_pre_header
    _
  $region3: #{tpu_custom_call.1} parent=0 // loop_header
    %s12 = sphi 0, %s16
    %p13 = scmp.ge.s32.totalorder %s12, 6
    %s22 = sphi 0, %s24
    %s25 = sphi 0, %s22
    %s26 = sphi 0, %s25
    %s42 = sphi 0, %s26
    %s46 = sphi 0, %s46
    %s48 = sphi 0, %s46
    %s49 = sphi 0, %s48
    %s63 = sphi 0, %s49
    %s67 = sphi 0, %s67
    %s69 = sphi 0, %s67
    %s70 = sphi 0, %s69
    %s84 = sphi 0, %s70
    %s90 = sphi 0, %s92
    %s93 = sphi 0, %s90
    %s94 = sphi 0, %s93
    %s110 = sphi 0, %s94
    %s116 = sphi 0, %s118
    %s119 = sphi 0, %s116
    %s120 = sphi 0, %s119
    %s136 = sphi 0, %s120
    %s140 = sphi 0, %s140
    %s142 = sphi 0, %s140
    %s143 = sphi 0, %s142
    %s157 = sphi 0, %s143
  $region4: #{tpu_custom_call.1} parent=0 // loop_header_branch
    %15 = sbr.rel (%p13) target = $region8
  $region5: #{tpu_custom_call.1} parent=0 // loop_body
    %s17 = ssub.s32 %s12, 1
    %s18 = ssub.s32 %s12, 2
    %s19 = sadd.s32 %s12, 1
    %s20 = ssub.s32 %s12, %s19
    %p21 = scmp.eq.s32.totalorder %s20, 0
    %s23 = sadd.s32 %s22, 1
    %s24 = scalar_select %p21, %s22, %s23
    %p27 = pneg %p21
    %p28 = scmp.eq.s32.totalorder %s12, 3
    %p29 = por %p27, %p28
    %p30 = scmp.ne.s32.totalorder %s22, %s25
    %p31 = scmp.eq.s32.totalorder %s12, 0
    %p32 = por %p30, %p31
    %p33 = scmp.ne.s32.totalorder %s22, %s25
    %p34 = scmp.eq.s32.totalorder %s17, 3
    %p35 = por %p33, %p34
    %p36 = scmp.ne.s32.totalorder %s25, %s26
    %p37 = scmp.eq.s32.totalorder %s17, 0
    %p38 = por %p36, %p37
    %p39 = scmp.ne.s32.totalorder %s25, %s26
    %p40 = scmp.eq.s32.totalorder %s18, 3
    %p41 = por %p39, %p40
    %p43 = scmp.ne.s32.totalorder %s26, %s42
    %p44 = scmp.eq.s32.totalorder %s18, 0
    %p45 = por %p43, %p44
    %s47 = sadd.s32 %s46, 1
    %p50 = scmp.eq.s32.totalorder %s12, 3
    %p51 = scmp.ne.s32.totalorder %s46, %s48
    %p52 = scmp.eq.s32.totalorder %s12, 0
    %p53 = por %p51, %p52
    %p54 = scmp.ne.s32.totalorder %s46, %s48
    %p55 = scmp.eq.s32.totalorder %s17, 3
    %p56 = por %p54, %p55
    %p57 = scmp.ne.s32.totalorder %s48, %s49
    %p58 = scmp.eq.s32.totalorder %s17, 0
    %p59 = por %p57, %p58
    %p60 = scmp.ne.s32.totalorder %s48, %s49
    %p61 = scmp.eq.s32.totalorder %s18, 3
    %p62 = por %p60, %p61
    %p64 = scmp.ne.s32.totalorder %s49, %s63
    %p65 = scmp.eq.s32.totalorder %s18, 0
    %p66 = por %p64, %p65
    %s68 = sadd.s32 %s67, 1
    %p71 = scmp.eq.s32.totalorder %s12, 3
    %p72 = scmp.ne.s32.totalorder %s67, %s69
    %p73 = scmp.eq.s32.totalorder %s12, 0
    %p74 = por %p72, %p73
    %p75 = scmp.ne.s32.totalorder %s67, %s69
    %p76 = scmp.eq.s32.totalorder %s17, 3
    %p77 = por %p75, %p76
    %p78 = scmp.ne.s32.totalorder %s69, %s70
    %p79 = scmp.eq.s32.totalorder %s17, 0
    %p80 = por %p78, %p79
    %p81 = scmp.ne.s32.totalorder %s69, %s70
    %p82 = scmp.eq.s32.totalorder %s18, 3
    %p83 = por %p81, %p82
    %p85 = scmp.ne.s32.totalorder %s70, %s84
    %p86 = scmp.eq.s32.totalorder %s18, 0
    %p87 = por %p85, %p86
    %s88 = ssub.s32 %s12, %s19
    %p89 = scmp.eq.s32.totalorder %s88, 0
    %s91 = sadd.s32 %s90, 1
    %s92 = scalar_select %p89, %s90, %s91
    %p95 = pneg %p89
    %p96 = scmp.eq.s32.totalorder %s12, 3
    %p97 = por %p95, %p96
    %p98 = scmp.ne.s32.totalorder %s90, %s93
    %p99 = scmp.eq.s32.totalorder %s12, 0
    %p100 = por %p98, %p99
    %p101 = scmp.ne.s32.totalorder %s90, %s93
    %p102 = scmp.eq.s32.totalorder %s17, 3
    %p103 = por %p101, %p102
    %p104 = scmp.ne.s32.totalorder %s93, %s94
    %p105 = scmp.eq.s32.totalorder %s17, 0
    %p106 = por %p104, %p105
    %p107 = scmp.ne.s32.totalorder %s93, %s94
    %p108 = scmp.eq.s32.totalorder %s18, 3
    %p109 = por %p107, %p108
    %p111 = scmp.ne.s32.totalorder %s94, %s110
    %p112 = scmp.eq.s32.totalorder %s18, 0
    %p113 = por %p111, %p112
    %s114 = ssub.s32 %s12, %s19
    %p115 = scmp.eq.s32.totalorder %s114, 0
    %s117 = sadd.s32 %s116, 1
    %s118 = scalar_select %p115, %s116, %s117
    %p121 = pneg %p115
    %p122 = scmp.eq.s32.totalorder %s12, 3
    %p123 = por %p121, %p122
    %p124 = scmp.ne.s32.totalorder %s116, %s119
    %p125 = scmp.eq.s32.totalorder %s12, 0
    %p126 = por %p124, %p125
    %p127 = scmp.ne.s32.totalorder %s116, %s119
    %p128 = scmp.eq.s32.totalorder %s17, 3
    %p129 = por %p127, %p128
    %p130 = scmp.ne.s32.totalorder %s119, %s120
    %p131 = scmp.eq.s32.totalorder %s17, 0
    %p132 = por %p130, %p131
    %p133 = scmp.ne.s32.totalorder %s119, %s120
    %p134 = scmp.eq.s32.totalorder %s18, 3
    %p135 = por %p133, %p134
    %p137 = scmp.ne.s32.totalorder %s120, %s136
    %p138 = scmp.eq.s32.totalorder %s18, 0
    %p139 = por %p137, %p138
    %s141 = sadd.s32 %s140, 1
    %p144 = scmp.eq.s32.totalorder %s12, 3
    %p145 = scmp.ne.s32.totalorder %s140, %s142
    %p146 = scmp.eq.s32.totalorder %s12, 0
    %p147 = por %p145, %p146
    %p148 = scmp.ne.s32.totalorder %s140, %s142
    %p149 = scmp.eq.s32.totalorder %s17, 3
    %p150 = por %p148, %p149
    %p151 = scmp.ne.s32.totalorder %s142, %s143
    %p152 = scmp.eq.s32.totalorder %s17, 0
    %p153 = por %p151, %p152
    %p154 = scmp.ne.s32.totalorder %s142, %s143
    %p155 = scmp.eq.s32.totalorder %s18, 3
    %p156 = por %p154, %p155
    %p158 = scmp.ne.s32.totalorder %s143, %s157
    %p159 = scmp.eq.s32.totalorder %s18, 0
    %p160 = por %p158, %p159
    %p161 = scmp.le.s32.totalorder 1, %s12
    %p162 = scmp.lt.s32.totalorder %s12, 5
    %p163 = pnand %p161, %p162
    %p164 = pneg %p163
    // Predicated region
    $region9: #{tpu_custom_call.1} parent=5 // pred_check
      _
    $region10: #{tpu_custom_call.1} parent=5 // pred_check_branch
      %166 = sbr.rel (%p163) target = $region12
    $region11: #{tpu_custom_call.1} parent=5 // pred_region
      %s167 = ssub.s32 %s12, 1
      // Predicated region
      $region13: #{tpu_custom_call.1} parent=11 // pred_check
        %p168 = pneg %p59
      $region14: #{tpu_custom_call.1} parent=11 // pred_check_branch
        %170 = sbr.rel (%p168) target = $region16
      $region15: #{tpu_custom_call.1} parent=11 // pred_region
        _
      $region16: #{tpu_custom_call.1} parent=11 // pred_fallthru
        _
      // Predicated region
      $region17: #{tpu_custom_call.1} parent=11 // pred_check
        %p171 = pneg %p80
      $region18: #{tpu_custom_call.1} parent=11 // pred_check_branch
        %173 = sbr.rel (%p171) target = $region20
      $region19: #{tpu_custom_call.1} parent=11 // pred_region
        _
      $region20: #{tpu_custom_call.1} parent=11 // pred_fallthru
        _
    $region12: #{tpu_custom_call.1} parent=5 // pred_fallthru
      _
    %p174 = scmp.lt.s32.totalorder %s12, 4
    // Predicated region
    $region21: #{tpu_custom_call.1} parent=5 // pred_check
      %p175 = pneg %p174
    $region22: #{tpu_custom_call.1} parent=5 // pred_check_branch
      %177 = sbr.rel (%p175) target = $region24
    $region23: #{tpu_custom_call.1} parent=5 // pred_region
      // Predicated region
      $region25: #{tpu_custom_call.1} parent=23 // pred_check
        %p178 = pneg %p32
      $region26: #{tpu_custom_call.1} parent=23 // pred_check_branch
        %180 = sbr.rel (%p178) target = $region28
      $region27: #{tpu_custom_call.1} parent=23 // pred_region
        %s181 = smul.u32 16, %s12
        %p182 = scmp.lt.s32.totalorder %s181, 63
        %s183 = scalar_select %p182, %s181, 63
        %s184 = smul.addr %s183, 8
        %s185 = scalar_lea.vmem %s0, %s184
        %s186 = smul.u32 16, %s12
      $region28: #{tpu_custom_call.1} parent=23 // pred_fallthru
        _
      // Predicated region
      $region29: #{tpu_custom_call.1} parent=23 // pred_check
        %p187 = pneg %p100
      $region30: #{tpu_custom_call.1} parent=23 // pred_check_branch
        %189 = sbr.rel (%p187) target = $region32
      $region31: #{tpu_custom_call.1} parent=23 // pred_region
        %s190 = smul.u32 16, %s12
        %p191 = scmp.lt.s32.totalorder %s190, 63
        %s192 = scalar_select %p191, %s190, 63
        %s193 = smul.addr %s192, 8
        %s194 = scalar_lea.vmem %s3, %s193
        %s195 = smul.u32 16, %s12
      $region32: #{tpu_custom_call.1} parent=23 // pred_fallthru
        _
    $region24: #{tpu_custom_call.1} parent=5 // pred_fallthru
      _
    %p196 = scmp.le.s32.totalorder 1, %s12
    %p197 = scmp.lt.s32.totalorder %s12, 5
    %p198 = pnand %p196, %p197
    %p199 = pneg %p198
    // Predicated region
    $region33: #{tpu_custom_call.1} parent=5 // pred_check
      _
    $region34: #{tpu_custom_call.1} parent=5 // pred_check_branch
      %201 = sbr.rel (%p198) target = $region36
    $region35: #{tpu_custom_call.1} parent=5 // pred_region
      %s202 = ssub.s32 %s12, 1
      %s203 = smul.u32 16, %s17
      %p204 = scmp.lt.s32.totalorder %s203, 63
      %s205 = scalar_select %p204, %s203, 63
      %s206 = smul.addr %s205, 8
      %s207 = scalar_lea.vmem %s0, %s206
      %p208 = pneg %p38
      %p209 = pneg %p35
      %p210 = pneg %p59
      %p211 = pneg %p56
      %p212 = pneg %p80
      %p213 = pneg %p77
      %s214 = smul.u32 16, %s17
      %p215 = scmp.lt.s32.totalorder %s214, 63
      %s216 = scalar_select %p215, %s214, 63
      %s217 = smul.addr %s216, 8
      %s218 = scalar_lea.vmem %s3, %s217
      %p219 = pneg %p106
      %p220 = pneg %p103
      %p221 = pneg %p132
      %p222 = pneg %p129
      %s223 = smul.u32 16, %s17
      %p224 = scmp.lt.s32.totalorder %s223, 63
      %s225 = scalar_select %p224, %s223, 63
      %s226 = smul.addr %s225, 8
      %s227 = scalar_lea.vmem %s4, %s226
      %p228 = pneg %p153
      %p229 = pneg %p150
      %s230 = smul.u32 16, %s17
      %p231 = scmp.lt.s32.totalorder %s230, 63
      %s232 = scalar_select %p231, %s230, 63
      %s233 = smul.addr %s232, 8
      %s234 = scalar_lea.vmem %s0, %s233
      %s235 = smul.u32 16, %s17
      %s236 = smul.u32 16, %s17
      %p237 = scmp.lt.s32.totalorder %s236, 63
      %s238 = scalar_select %p237, %s236, 63
      %s239 = smul.addr %s238, 8
      %s240 = scalar_lea.vmem %s3, %s239
      %s241 = smul.u32 16, %s17
      %s242 = smul.u32 16, %s17
      %p243 = scmp.lt.s32.totalorder %s242, 63
      %s244 = scalar_select %p243, %s242, 63
      %s245 = smul.addr %s244, 8
      %s246 = scalar_lea.vmem %s4, %s245
      %s247 = smul.u32 16, %s17
      %p248 = scmp.eq.s32.totalorder %s17, 0
      // Predicated region
      $region37: #{tpu_custom_call.1} parent=35 // pred_check
        %p249 = pneg %p248
      $region38: #{tpu_custom_call.1} parent=35 // pred_check_branch
        %251 = sbr.rel (%p249) target = $region40
      $region39: #{tpu_custom_call.1} parent=35 // pred_region
        %vm252 = vcmask 130048
        %253 = vst.msk [vmem:[%s5] sm:$0xff] %vm252, 0.0
        %254 = vst.msk [vmem:[%s5 + $0x8] sm:$0xff] %vm252, 0.0
        %255 = vst.msk [vmem:[%s5 + $0x10] sm:$0xff] %vm252, 0.0
        %256 = vst.msk [vmem:[%s5 + $0x18] sm:$0xff] %vm252, 0.0
      $region40: #{tpu_custom_call.1} parent=35 // pred_fallthru
        _
      %v257 = vld [vmem:[%s234] sm:$0xff]
      %v258 = vld [vmem:[%s234 + $0x8] sm:$0xff]
      %v259 = vld [vmem:[%s234 + $0x10] sm:$0xff]
      %v260 = vld [vmem:[%s234 + $0x18] sm:$0xff]
      %v261 = vld [vmem:[%s234 + $0x20] sm:$0xff]
      %v262 = vld [vmem:[%s234 + $0x28] sm:$0xff]
      %v263 = vld [vmem:[%s234 + $0x30] sm:$0xff]
      %v264 = vld [vmem:[%s234 + $0x38] sm:$0xff]
      %v265 = vld [vmem:[%s234 + $0x40] sm:$0xff]
      %v266 = vld [vmem:[%s234 + $0x48] sm:$0xff]
      %v267 = vld [vmem:[%s234 + $0x50] sm:$0xff]
      %v268 = vld [vmem:[%s234 + $0x58] sm:$0xff]
      %v269 = vld [vmem:[%s234 + $0x60] sm:$0xff]
      %v270 = vld [vmem:[%s234 + $0x68] sm:$0xff]
      %v271 = vld [vmem:[%s234 + $0x70] sm:$0xff]
      %v272 = vld [vmem:[%s234 + $0x78] sm:$0xff]
      %v273 = vld [vmem:[%s1] sm:$0xff]
      %v274 = vld [vmem:[%s1 + $0x8] sm:$0xff]
      %v275 = vld [vmem:[%s2] sm:$0x1]
      %v277 = vlaneseq
      %v278 = vshrl.u32 %v277, 7
      %v279 = vsub.s32 0, %v278
      %v280 = vrot.slane %v275, %v279
      %vm282 = vcmask 130048
      %v284 = vsel %vm282, %v257, 0
      %v287 = vsel %vm282, %v258, 0
      %v290 = vsel %vm282, %v259, 0
      %v293 = vsel %vm282, %v260, 0
      %v296 = vsel %vm282, %v261, 0
      %v299 = vsel %vm282, %v262, 0
      %v302 = vsel %vm282, %v263, 0
      %v305 = vsel %vm282, %v264, 0
      %v308 = vsel %vm282, %v265, 0
      %v311 = vsel %vm282, %v266, 0
      %v314 = vsel %vm282, %v267, 0
      %v317 = vsel %vm282, %v268, 0
      %v320 = vsel %vm282, %v269, 0
      %v323 = vsel %vm282, %v270, 0
      %v326 = vsel %vm282, %v271, 0
      %v329 = vsel %vm282, %v272, 0
      %331 = vmatprep.subr.mxu0 0.0
      %332 = vmatpush1.msra.mxu0 0.0
      %333 = vmatprep.subr.mxu0 0.0
      %334 = vmatpush1.msra.mxu0 0.0
      %335 = vmatprep.subr.mxu0 0.0
      %336 = vmatpush1.msra.mxu0 0.0
      %337 = vmatprep.subr.mxu0 0.0
      %338 = vmatpush1.msra.mxu0 0.0
      %339 = vmatprep.subr.mxu0 0.0
      %340 = vmatpush1.msra.mxu0 0.0
      %341 = vmatprep.subr.mxu0 0.0
      %342 = vmatpush1.msra.mxu0 0.0
      %343 = vmatprep.subr.mxu0 0.0
      %344 = vmatpush1.msra.mxu0 0.0
      %345 = vmatprep.subr.mxu0 0.0
      %346 = vmatpush1.msra.mxu0 0.0
      %347 = vmatprep.subr.mxu0 0.0
      %348 = vmatpush1.msra.mxu0 0.0
      %349 = vmatprep.subr.mxu0 0.0
      %350 = vmatpush1.msra.mxu0 0.0
      %351 = vmatprep.subr.mxu0 0.0
      %352 = vmatpush1.msra.mxu0 0.0
      %353 = vmatprep.subr.mxu0 0.0
      %354 = vmatpush1.msra.mxu0 0.0
      %355 = vmatprep.subr.mxu0 0.0
      %356 = vmatpush1.msra.mxu0 0.0
      %357 = vmatprep.subr.mxu0 0.0
      %358 = vmatpush1.msra.mxu0 0.0
      %359 = vmatprep.subr.mxu0 0.0
      %360 = vmatpush1.msra.mxu0 %v274
      %361 = vmatprep.subr.mxu0 0.0
      %362 = vmatpush1.msra.mxu0 %v273
      %363 = vmatprep.subr.mxu0 0.0
      %364 = vmatpush2.msra.mxu0 0.0
      %365 = vmatprep.subr.mxu0 0.0
      %366 = vmatpush2.msra.mxu0 0.0
      %367 = vmatprep.subr.mxu0 0.0
      %368 = vmatpush2.msra.mxu0 0.0
      %369 = vmatprep.subr.mxu0 0.0
      %370 = vmatpush2.msra.mxu0 0.0
      %371 = vmatprep.subr.mxu0 0.0
      %372 = vmatpush2.msra.mxu0 0.0
      %373 = vmatprep.subr.mxu0 0.0
      %374 = vmatpush2.msra.mxu0 0.0
      %375 = vmatprep.subr.mxu0 0.0
      %376 = vmatpush2.msra.mxu0 0.0
      %377 = vmatprep.subr.mxu0 0.0
      %378 = vmatpush2.msra.mxu0 0.0
      %379 = vmatprep.subr.mxu0 0.0
      %380 = vmatpush2.msra.mxu0 0.0
      %381 = vmatprep.subr.mxu0 0.0
      %382 = vmatpush2.msra.mxu0 0.0
      %383 = vmatprep.subr.mxu0 0.0
      %384 = vmatpush2.msra.mxu0 0.0
      %385 = vmatprep.subr.mxu0 0.0
      %386 = vmatpush2.msra.mxu0 0.0
      %387 = vmatprep.subr.mxu0 0.0
      %388 = vmatpush2.msra.mxu0 0.0
      %389 = vmatprep.subr.mxu0 0.0
      %390 = vmatpush2.msra.mxu0 0.0
      %391 = vmatprep.subr.mxu0 0.0
      %392 = vmatpush2.msra.mxu0 0.0
      %393 = vmatprep.subr.mxu0 0.0
      %394 = vmatpush2.msra.mxu0 0.0
      %395 = vmatprep.mubr.f32.mxu0 0.0
      %396 = vmatmul.mubr.f32.gmra.mxu0 %v284
      %v397 = vpop.f32.mrf.mxu0
      %v398 = vadd.f32 %v280, %v397
      %v399 = vpop.f32.mrf.mxu0
      %400 = vmatprep.mubr.f32.mxu0 0.0
      %401 = vmatmul.mubr.f32.gmra.mxu0 %v287
      %v402 = vpop.f32.mrf.mxu0
      %v403 = vadd.f32 %v280, %v402
      %v404 = vpop.f32.mrf.mxu0
      %405 = vmatprep.mubr.f32.mxu0 0.0
      %406 = vmatmul.mubr.f32.gmra.mxu0 %v290
      %v407 = vpop.f32.mrf.mxu0
      %v408 = vadd.f32 %v280, %v407
      %v409 = vpop.f32.mrf.mxu0
      %410 = vmatprep.mubr.f32.mxu0 0.0
      %411 = vmatmul.mubr.f32.gmra.mxu0 %v293
      %v412 = vpop.f32.mrf.mxu0
      %v413 = vadd.f32 %v280, %v412
      %v414 = vpop.f32.mrf.mxu0
      %415 = vmatprep.mubr.f32.mxu0 0.0
      %416 = vmatmul.mubr.f32.gmra.mxu0 %v296
      %v417 = vpop.f32.mrf.mxu0
      %v418 = vadd.f32 %v280, %v417
      %v419 = vpop.f32.mrf.mxu0
      %420 = vmatprep.mubr.f32.mxu0 0.0
      %421 = vmatmul.mubr.f32.gmra.mxu0 %v299
      %v422 = vpop.f32.mrf.mxu0
      %v423 = vadd.f32 %v280, %v422
      %v424 = vpop.f32.mrf.mxu0
      %425 = vmatprep.mubr.f32.mxu0 0.0
      %426 = vmatmul.mubr.f32.gmra.mxu0 %v302
      %v427 = vpop.f32.mrf.mxu0
      %v428 = vadd.f32 %v280, %v427
      %v429 = vpop.f32.mrf.mxu0
      %430 = vmatprep.mubr.f32.mxu0 0.0
      %431 = vmatmul.mubr.f32.gmra.mxu0 %v305
      %v432 = vpop.f32.mrf.mxu0
      %v433 = vadd.f32 %v280, %v432
      %v434 = vpop.f32.mrf.mxu0
      %435 = vmatprep.mubr.f32.mxu0 0.0
      %436 = vmatmul.mubr.f32.gmra.mxu0 %v308
      %v437 = vpop.f32.mrf.mxu0
      %v438 = vadd.f32 %v280, %v437
      %v439 = vpop.f32.mrf.mxu0
      %440 = vmatprep.mubr.f32.mxu0 0.0
      %441 = vmatmul.mubr.f32.gmra.mxu0 %v311
      %v442 = vpop.f32.mrf.mxu0
      %v443 = vadd.f32 %v280, %v442
      %v444 = vpop.f32.mrf.mxu0
      %445 = vmatprep.mubr.f32.mxu0 0.0
      %446 = vmatmul.mubr.f32.gmra.mxu0 %v314
      %v447 = vpop.f32.mrf.mxu0
      %v448 = vadd.f32 %v280, %v447
      %v449 = vpop.f32.mrf.mxu0
      %450 = vmatprep.mubr.f32.mxu0 0.0
      %451 = vmatmul.mubr.f32.gmra.mxu0 %v317
      %v452 = vpop.f32.mrf.mxu0
      %v453 = vadd.f32 %v280, %v452
      %v454 = vpop.f32.mrf.mxu0
      %455 = vmatprep.mubr.f32.mxu0 0.0
      %456 = vmatmul.mubr.f32.gmra.mxu0 %v320
      %v457 = vpop.f32.mrf.mxu0
      %v458 = vadd.f32 %v280, %v457
      %v459 = vpop.f32.mrf.mxu0
      %460 = vmatprep.mubr.f32.mxu0 0.0
      %461 = vmatmul.mubr.f32.gmra.mxu0 %v323
      %v462 = vpop.f32.mrf.mxu0
      %v463 = vadd.f32 %v280, %v462
      %v464 = vpop.f32.mrf.mxu0
      %465 = vmatprep.mubr.f32.mxu0 0.0
      %466 = vmatmul.mubr.f32.gmra.mxu0 %v326
      %v467 = vpop.f32.mrf.mxu0
      %v468 = vadd.f32 %v280, %v467
      %v469 = vpop.f32.mrf.mxu0
      %470 = vmatprep.mubr.f32.mxu0 0.0
      %471 = vmatmul.mubr.f32.gmra.mxu0 %v329
      %v472 = vpop.f32.mrf.mxu0
      %v473 = vadd.f32 %v280, %v472
      %v474 = vpop.f32.mrf.mxu0
      %475 = vdwg.mxu0
      %v476 = vmax.f32 %v398, 0.0
      %v477 = vmax.f32 %v403, 0.0
      %v478 = vmax.f32 %v408, 0.0
      %v479 = vmax.f32 %v413, 0.0
      %v480 = vmax.f32 %v418, 0.0
      %v481 = vmax.f32 %v423, 0.0
      %v482 = vmax.f32 %v428, 0.0
      %v483 = vmax.f32 %v433, 0.0
      %v484 = vmax.f32 %v438, 0.0
      %v485 = vmax.f32 %v443, 0.0
      %v486 = vmax.f32 %v448, 0.0
      %v487 = vmax.f32 %v453, 0.0
      %v488 = vmax.f32 %v458, 0.0
      %v489 = vmax.f32 %v463, 0.0
      %v490 = vmax.f32 %v468, 0.0
      %v491 = vmax.f32 %v473, 0.0
      %492 = vst.msk [vmem:[%s246] sm:$0xff] %vm282, %v476
      %493 = vst.msk [vmem:[%s246 + $0x8] sm:$0xff] %vm282, %v477
      %494 = vst.msk [vmem:[%s246 + $0x10] sm:$0xff] %vm282, %v478
      %495 = vst.msk [vmem:[%s246 + $0x18] sm:$0xff] %vm282, %v479
      %496 = vst.msk [vmem:[%s246 + $0x20] sm:$0xff] %vm282, %v480
      %497 = vst.msk [vmem:[%s246 + $0x28] sm:$0xff] %vm282, %v481
      %498 = vst.msk [vmem:[%s246 + $0x30] sm:$0xff] %vm282, %v482
      %499 = vst.msk [vmem:[%s246 + $0x38] sm:$0xff] %vm282, %v483
      %500 = vst.msk [vmem:[%s246 + $0x40] sm:$0xff] %vm282, %v484
      %501 = vst.msk [vmem:[%s246 + $0x48] sm:$0xff] %vm282, %v485
      %502 = vst.msk [vmem:[%s246 + $0x50] sm:$0xff] %vm282, %v486
      %503 = vst.msk [vmem:[%s246 + $0x58] sm:$0xff] %vm282, %v487
      %504 = vst.msk [vmem:[%s246 + $0x60] sm:$0xff] %vm282, %v488
      %505 = vst.msk [vmem:[%s246 + $0x68] sm:$0xff] %vm282, %v489
      %506 = vst.msk [vmem:[%s246 + $0x70] sm:$0xff] %vm282, %v490
      %507 = vst.msk [vmem:[%s246 + $0x78] sm:$0xff] %vm282, %v491
      %v508 = vlaneseq
      %v509 = vand.u32 %v508, 127
      %v510 = vld [vmem:[%s240] sm:$0xff]
      %v511 = vld [vmem:[%s240 + $0x8] sm:$0xff]
      %v512 = vld [vmem:[%s240 + $0x10] sm:$0xff]
      %v513 = vld [vmem:[%s240 + $0x18] sm:$0xff]
      %v514 = vld [vmem:[%s240 + $0x20] sm:$0xff]
      %v515 = vld [vmem:[%s240 + $0x28] sm:$0xff]
      %v516 = vld [vmem:[%s240 + $0x30] sm:$0xff]
      %v517 = vld [vmem:[%s240 + $0x38] sm:$0xff]
      %v518 = vld [vmem:[%s240 + $0x40] sm:$0xff]
      %v519 = vld [vmem:[%s240 + $0x48] sm:$0xff]
      %v520 = vld [vmem:[%s240 + $0x50] sm:$0xff]
      %v521 = vld [vmem:[%s240 + $0x58] sm:$0xff]
      %v522 = vld [vmem:[%s240 + $0x60] sm:$0xff]
      %v523 = vld [vmem:[%s240 + $0x68] sm:$0xff]
      %v524 = vld [vmem:[%s240 + $0x70] sm:$0xff]
      %v525 = vld [vmem:[%s240 + $0x78] sm:$0xff]
      %526 = vset.pattern.permute.xlu0 0
      %527 = vperm.xlu0 %526, %v510
      %v528 = vpop.permute.xlu0 %527
      %529 = vset.pattern.permute.xlu0 0
      %530 = vperm.xlu0 %529, %v511
      %v531 = vpop.permute.xlu0 %530
      %532 = vset.pattern.permute.xlu0 0
      %533 = vperm.xlu0 %532, %v512
      %v534 = vpop.permute.xlu0 %533
      %535 = vset.pattern.permute.xlu0 0
      %536 = vperm.xlu0 %535, %v513
      %v537 = vpop.permute.xlu0 %536
      %538 = vset.pattern.permute.xlu0 0
      %539 = vperm.xlu0 %538, %v514
      %v540 = vpop.permute.xlu0 %539
      %541 = vset.pattern.permute.xlu0 0
      %542 = vperm.xlu0 %541, %v515
      %v543 = vpop.permute.xlu0 %542
      %544 = vset.pattern.permute.xlu0 0
      %545 = vperm.xlu0 %544, %v516
      %v546 = vpop.permute.xlu0 %545
      %547 = vset.pattern.permute.xlu0 0
      %548 = vperm.xlu0 %547, %v517
      %v549 = vpop.permute.xlu0 %548
      %550 = vset.pattern.permute.xlu0 0
      %551 = vperm.xlu0 %550, %v518
      %v552 = vpop.permute.xlu0 %551
      %553 = vset.pattern.permute.xlu0 0
      %554 = vperm.xlu0 %553, %v519
      %v555 = vpop.permute.xlu0 %554
      %556 = vset.pattern.permute.xlu0 0
      %557 = vperm.xlu0 %556, %v520
      %v558 = vpop.permute.xlu0 %557
      %559 = vset.pattern.permute.xlu0 0
      %560 = vperm.xlu0 %559, %v521
      %v561 = vpop.permute.xlu0 %560
      %562 = vset.pattern.permute.xlu0 0
      %563 = vperm.xlu0 %562, %v522
      %v564 = vpop.permute.xlu0 %563
      %565 = vset.pattern.permute.xlu0 0
      %566 = vperm.xlu0 %565, %v523
      %v567 = vpop.permute.xlu0 %566
      %568 = vset.pattern.permute.xlu0 0
      %569 = vperm.xlu0 %568, %v524
      %v570 = vpop.permute.xlu0 %569
      %571 = vset.pattern.permute.xlu0 0
      %572 = vperm.xlu0 %571, %v525
      %v573 = vpop.permute.xlu0 %572
      %vm574 = vcmp.eq.s32.totalorder %v509, %v528
      %vm575 = vcmp.eq.s32.totalorder %v509, %v531
      %vm576 = vcmp.eq.s32.totalorder %v509, %v534
      %vm577 = vcmp.eq.s32.totalorder %v509, %v537
      %vm578 = vcmp.eq.s32.totalorder %v509, %v540
      %vm579 = vcmp.eq.s32.totalorder %v509, %v543
      %vm580 = vcmp.eq.s32.totalorder %v509, %v546
      %vm581 = vcmp.eq.s32.totalorder %v509, %v549
      %vm582 = vcmp.eq.s32.totalorder %v509, %v552
      %vm583 = vcmp.eq.s32.totalorder %v509, %v555
      %vm584 = vcmp.eq.s32.totalorder %v509, %v558
      %vm585 = vcmp.eq.s32.totalorder %v509, %v561
      %vm586 = vcmp.eq.s32.totalorder %v509, %v564
      %vm587 = vcmp.eq.s32.totalorder %v509, %v567
      %vm588 = vcmp.eq.s32.totalorder %v509, %v570
      %vm589 = vcmp.eq.s32.totalorder %v509, %v573
      %v590 = vsel %vm574, 1, 0
      %v591 = vsel %vm575, 1, 0
      %v592 = vsel %vm576, 1, 0
      %v593 = vsel %vm577, 1, 0
      %v594 = vsel %vm578, 1, 0
      %v595 = vsel %vm579, 1, 0
      %v596 = vsel %vm580, 1, 0
      %v597 = vsel %vm581, 1, 0
      %v598 = vsel %vm582, 1, 0
      %v599 = vsel %vm583, 1, 0
      %v600 = vsel %vm584, 1, 0
      %v601 = vsel %vm585, 1, 0
      %v602 = vsel %vm586, 1, 0
      %v603 = vsel %vm587, 1, 0
      %v604 = vsel %vm588, 1, 0
      %v605 = vsel %vm589, 1, 0
      %v606 = vcvt.s32.f32 %v590
      %v607 = vcvt.s32.f32 %v591
      %v608 = vcvt.s32.f32 %v592
      %v609 = vcvt.s32.f32 %v593
      %v610 = vcvt.s32.f32 %v594
      %v611 = vcvt.s32.f32 %v595
      %v612 = vcvt.s32.f32 %v596
      %v613 = vcvt.s32.f32 %v597
      %v614 = vcvt.s32.f32 %v598
      %v615 = vcvt.s32.f32 %v599
      %v616 = vcvt.s32.f32 %v600
      %v617 = vcvt.s32.f32 %v601
      %v618 = vcvt.s32.f32 %v602
      %v619 = vcvt.s32.f32 %v603
      %v620 = vcvt.s32.f32 %v604
      %v621 = vcvt.s32.f32 %v605
      %v622 = vlaneseq
      %v623 = vshrl.u32 %v622, 7
      %v624 = vsub.s32 0, %v623
      %v625 = vrot.slane %v606, %v624
      %627 = vbcast.lane.b32.xlu0 %v625, 256
      %v628 = vpop.permute.xlu0 %627
      %s630 = sor.u32 256, 8
      %631 = vbcast.lane.b32.xlu0 %v625, %s630
      %v632 = vpop.permute.xlu0 %631
      %s634 = sor.u32 256, 16
      %635 = vbcast.lane.b32.xlu0 %v625, %s634
      %v636 = vpop.permute.xlu0 %635
      %s638 = sor.u32 256, 24
      %639 = vbcast.lane.b32.xlu0 %v625, %s638
      %v640 = vpop.permute.xlu0 %639
      %v641 = vlaneseq
      %v642 = vshrl.u32 %v641, 7
      %v643 = vsub.s32 1, %v642
      %v644 = vrot.slane %v606, %v643
      %646 = vbcast.lane.b32.xlu0 %v644, 256
      %v647 = vpop.permute.xlu0 %646
      %s649 = sor.u32 256, 8
      %650 = vbcast.lane.b32.xlu0 %v644, %s649
      %v651 = vpop.permute.xlu0 %650
      %s653 = sor.u32 256, 16
      %654 = vbcast.lane.b32.xlu0 %v644, %s653
      %v655 = vpop.permute.xlu0 %654
      %s657 = sor.u32 256, 24
      %658 = vbcast.lane.b32.xlu0 %v644, %s657
      %v659 = vpop.permute.xlu0 %658
      %v660 = vlaneseq
      %v661 = vshrl.u32 %v660, 7
      %v662 = vsub.s32 2, %v661
      %v663 = vrot.slane %v606, %v662
      %665 = vbcast.lane.b32.xlu0 %v663, 256
      %v666 = vpop.permute.xlu0 %665
      %s668 = sor.u32 256, 8
      %669 = vbcast.lane.b32.xlu0 %v663, %s668
      %v670 = vpop.permute.xlu0 %669
      %s672 = sor.u32 256, 16
      %673 = vbcast.lane.b32.xlu0 %v663, %s672
      %v674 = vpop.permute.xlu0 %673
      %s676 = sor.u32 256, 24
      %677 = vbcast.lane.b32.xlu0 %v663, %s676
      %v678 = vpop.permute.xlu0 %677
      %v679 = vlaneseq
      %v680 = vshrl.u32 %v679, 7
      %v681 = vsub.s32 3, %v680
      %v682 = vrot.slane %v606, %v681
      %684 = vbcast.lane.b32.xlu0 %v682, 256
      %v685 = vpop.permute.xlu0 %684
      %s687 = sor.u32 256, 8
      %688 = vbcast.lane.b32.xlu0 %v682, %s687
      %v689 = vpop.permute.xlu0 %688
      %s691 = sor.u32 256, 16
      %692 = vbcast.lane.b32.xlu0 %v682, %s691
      %v693 = vpop.permute.xlu0 %692
      %s695 = sor.u32 256, 24
      %696 = vbcast.lane.b32.xlu0 %v682, %s695
      %v697 = vpop.permute.xlu0 %696
      %v698 = vlaneseq
      %v699 = vshrl.u32 %v698, 7
      %v700 = vsub.s32 4, %v699
      %v701 = vrot.slane %v606, %v700
      %703 = vbcast.lane.b32.xlu0 %v701, 256
      %v704 = vpop.permute.xlu0 %703
      %s706 = sor.u32 256, 8
      %707 = vbcast.lane.b32.xlu0 %v701, %s706
      %v708 = vpop.permute.xlu0 %707
      %s710 = sor.u32 256, 16
      %711 = vbcast.lane.b32.xlu0 %v701, %s710
      %v712 = vpop.permute.xlu0 %711
      %s714 = sor.u32 256, 24
      %715 = vbcast.lane.b32.xlu0 %v701, %s714
      %v716 = vpop.permute.xlu0 %715
      %v717 = vlaneseq
      %v718 = vshrl.u32 %v717, 7
      %v719 = vsub.s32 5, %v718
      %v720 = vrot.slane %v606, %v719
      %722 = vbcast.lane.b32.xlu0 %v720, 256
      %v723 = vpop.permute.xlu0 %722
      %s725 = sor.u32 256, 8
      %726 = vbcast.lane.b32.xlu0 %v720, %s725
      %v727 = vpop.permute.xlu0 %726
      %s729 = sor.u32 256, 16
      %730 = vbcast.lane.b32.xlu0 %v720, %s729
      %v731 = vpop.permute.xlu0 %730
      %s733 = sor.u32 256, 24
      %734 = vbcast.lane.b32.xlu0 %v720, %s733
      %v735 = vpop.permute.xlu0 %734
      %v736 = vlaneseq
      %v737 = vshrl.u32 %v736, 7
      %v738 = vsub.s32 6, %v737
      %v739 = vrot.slane %v606, %v738
      %741 = vbcast.lane.b32.xlu0 %v739, 256
      %v742 = vpop.permute.xlu0 %741
      %s744 = sor.u32 256, 8
      %745 = vbcast.lane.b32.xlu0 %v739, %s744
      %v746 = vpop.permute.xlu0 %745
      %s748 = sor.u32 256, 16
      %749 = vbcast.lane.b32.xlu0 %v739, %s748
      %v750 = vpop.permute.xlu0 %749
      %s752 = sor.u32 256, 24
      %753 = vbcast.lane.b32.xlu0 %v739, %s752
      %v754 = vpop.permute.xlu0 %753
      %v755 = vlaneseq
      %v756 = vshrl.u32 %v755, 7
      %v757 = vsub.s32 7, %v756
      %v758 = vrot.slane %v606, %v757
      %760 = vbcast.lane.b32.xlu0 %v758, 256
      %v761 = vpop.permute.xlu0 %760
      %s763 = sor.u32 256, 8
      %764 = vbcast.lane.b32.xlu0 %v758, %s763
      %v765 = vpop.permute.xlu0 %764
      %s767 = sor.u32 256, 16
      %768 = vbcast.lane.b32.xlu0 %v758, %s767
      %v769 = vpop.permute.xlu0 %768
      %s771 = sor.u32 256, 24
      %772 = vbcast.lane.b32.xlu0 %v758, %s771
      %v773 = vpop.permute.xlu0 %772
      %v774 = vlaneseq
      %v775 = vshrl.u32 %v774, 7
      %v776 = vsub.s32 0, %v775
      %v777 = vrot.slane %v607, %v776
      %779 = vbcast.lane.b32.xlu0 %v777, 256
      %v780 = vpop.permute.xlu0 %779
      %s782 = sor.u32 256, 8
      %783 = vbcast.lane.b32.xlu0 %v777, %s782
      %v784 = vpop.permute.xlu0 %783
      %s786 = sor.u32 256, 16
      %787 = vbcast.lane.b32.xlu0 %v777, %s786
      %v788 = vpop.permute.xlu0 %787
      %s790 = sor.u32 256, 24
      %791 = vbcast.lane.b32.xlu0 %v777, %s790
      %v792 = vpop.permute.xlu0 %791
      %v793 = vlaneseq
      %v794 = vshrl.u32 %v793, 7
      %v795 = vsub.s32 1, %v794
      %v796 = vrot.slane %v607, %v795
      %798 = vbcast.lane.b32.xlu0 %v796, 256
      %v799 = vpop.permute.xlu0 %798
      %s801 = sor.u32 256, 8
      %802 = vbcast.lane.b32.xlu0 %v796, %s801
      %v803 = vpop.permute.xlu0 %802
      %s805 = sor.u32 256, 16
      %806 = vbcast.lane.b32.xlu0 %v796, %s805
      %v807 = vpop.permute.xlu0 %806
      %s809 = sor.u32 256, 24
      %810 = vbcast.lane.b32.xlu0 %v796, %s809
      %v811 = vpop.permute.xlu0 %810
      %v812 = vlaneseq
      %v813 = vshrl.u32 %v812, 7
      %v814 = vsub.s32 2, %v813
      %v815 = vrot.slane %v607, %v814
      %817 = vbcast.lane.b32.xlu0 %v815, 256
      %v818 = vpop.permute.xlu0 %817
      %s820 = sor.u32 256, 8
      %821 = vbcast.lane.b32.xlu0 %v815, %s820
      %v822 = vpop.permute.xlu0 %821
      %s824 = sor.u32 256, 16
      %825 = vbcast.lane.b32.xlu0 %v815, %s824
      %v826 = vpop.permute.xlu0 %825
      %s828 = sor.u32 256, 24
      %829 = vbcast.lane.b32.xlu0 %v815, %s828
      %v830 = vpop.permute.xlu0 %829
      %v831 = vlaneseq
      %v832 = vshrl.u32 %v831, 7
      %v833 = vsub.s32 3, %v832
      %v834 = vrot.slane %v607, %v833
      %836 = vbcast.lane.b32.xlu0 %v834, 256
      %v837 = vpop.permute.xlu0 %836
      %s839 = sor.u32 256, 8
      %840 = vbcast.lane.b32.xlu0 %v834, %s839
      %v841 = vpop.permute.xlu0 %840
      %s843 = sor.u32 256, 16
      %844 = vbcast.lane.b32.xlu0 %v834, %s843
      %v845 = vpop.permute.xlu0 %844
      %s847 = sor.u32 256, 24
      %848 = vbcast.lane.b32.xlu0 %v834, %s847
      %v849 = vpop.permute.xlu0 %848
      %v850 = vlaneseq
      %v851 = vshrl.u32 %v850, 7
      %v852 = vsub.s32 4, %v851
      %v853 = vrot.slane %v607, %v852
      %855 = vbcast.lane.b32.xlu0 %v853, 256
      %v856 = vpop.permute.xlu0 %855
      %s858 = sor.u32 256, 8
      %859 = vbcast.lane.b32.xlu0 %v853, %s858
      %v860 = vpop.permute.xlu0 %859
      %s862 = sor.u32 256, 16
      %863 = vbcast.lane.b32.xlu0 %v853, %s862
      %v864 = vpop.permute.xlu0 %863
      %s866 = sor.u32 256, 24
      %867 = vbcast.lane.b32.xlu0 %v853, %s866
      %v868 = vpop.permute.xlu0 %867
      %v869 = vlaneseq
      %v870 = vshrl.u32 %v869, 7
      %v871 = vsub.s32 5, %v870
      %v872 = vrot.slane %v607, %v871
      %874 = vbcast.lane.b32.xlu0 %v872, 256
      %v875 = vpop.permute.xlu0 %874
      %s877 = sor.u32 256, 8
      %878 = vbcast.lane.b32.xlu0 %v872, %s877
      %v879 = vpop.permute.xlu0 %878
      %s881 = sor.u32 256, 16
      %882 = vbcast.lane.b32.xlu0 %v872, %s881
      %v883 = vpop.permute.xlu0 %882
      %s885 = sor.u32 256, 24
      %886 = vbcast.lane.b32.xlu0 %v872, %s885
      %v887 = vpop.permute.xlu0 %886
      %v888 = vlaneseq
      %v889 = vshrl.u32 %v888, 7
      %v890 = vsub.s32 6, %v889
      %v891 = vrot.slane %v607, %v890
      %893 = vbcast.lane.b32.xlu0 %v891, 256
      %v894 = vpop.permute.xlu0 %893
      %s896 = sor.u32 256, 8
      %897 = vbcast.lane.b32.xlu0 %v891, %s896
      %v898 = vpop.permute.xlu0 %897
      %s900 = sor.u32 256, 16
      %901 = vbcast.lane.b32.xlu0 %v891, %s900
      %v902 = vpop.permute.xlu0 %901
      %s904 = sor.u32 256, 24
      %905 = vbcast.lane.b32.xlu0 %v891, %s904
      %v906 = vpop.permute.xlu0 %905
      %v907 = vlaneseq
      %v908 = vshrl.u32 %v907, 7
      %v909 = vsub.s32 7, %v908
      %v910 = vrot.slane %v607, %v909
      %912 = vbcast.lane.b32.xlu0 %v910, 256
      %v913 = vpop.permute.xlu0 %912
      %s915 = sor.u32 256, 8
      %916 = vbcast.lane.b32.xlu0 %v910, %s915
      %v917 = vpop.permute.xlu0 %916
      %s919 = sor.u32 256, 16
      %920 = vbcast.lane.b32.xlu0 %v910, %s919
      %v921 = vpop.permute.xlu0 %920
      %s923 = sor.u32 256, 24
      %924 = vbcast.lane.b32.xlu0 %v910, %s923
      %v925 = vpop.permute.xlu0 %924
      %v926 = vlaneseq
      %v927 = vshrl.u32 %v926, 7
      %v928 = vsub.s32 0, %v927
      %v929 = vrot.slane %v608, %v928
      %931 = vbcast.lane.b32.xlu0 %v929, 256
      %v932 = vpop.permute.xlu0 %931
      %s934 = sor.u32 256, 8
      %935 = vbcast.lane.b32.xlu0 %v929, %s934
      %v936 = vpop.permute.xlu0 %935
      %s938 = sor.u32 256, 16
      %939 = vbcast.lane.b32.xlu0 %v929, %s938
      %v940 = vpop.permute.xlu0 %939
      %s942 = sor.u32 256, 24
      %943 = vbcast.lane.b32.xlu0 %v929, %s942
      %v944 = vpop.permute.xlu0 %943
      %v945 = vlaneseq
      %v946 = vshrl.u32 %v945, 7
      %v947 = vsub.s32 1, %v946
      %v948 = vrot.slane %v608, %v947
      %950 = vbcast.lane.b32.xlu0 %v948, 256
      %v951 = vpop.permute.xlu0 %950
      %s953 = sor.u32 256, 8
      %954 = vbcast.lane.b32.xlu0 %v948, %s953
      %v955 = vpop.permute.xlu0 %954
      %s957 = sor.u32 256, 16
      %958 = vbcast.lane.b32.xlu0 %v948, %s957
      %v959 = vpop.permute.xlu0 %958
      %s961 = sor.u32 256, 24
      %962 = vbcast.lane.b32.xlu0 %v948, %s961
      %v963 = vpop.permute.xlu0 %962
      %v964 = vlaneseq
      %v965 = vshrl.u32 %v964, 7
      %v966 = vsub.s32 2, %v965
      %v967 = vrot.slane %v608, %v966
      %969 = vbcast.lane.b32.xlu0 %v967, 256
      %v970 = vpop.permute.xlu0 %969
      %s972 = sor.u32 256, 8
      %973 = vbcast.lane.b32.xlu0 %v967, %s972
      %v974 = vpop.permute.xlu0 %973
      %s976 = sor.u32 256, 16
      %977 = vbcast.lane.b32.xlu0 %v967, %s976
      %v978 = vpop.permute.xlu0 %977
      %s980 = sor.u32 256, 24
      %981 = vbcast.lane.b32.xlu0 %v967, %s980
      %v982 = vpop.permute.xlu0 %981
      %v983 = vlaneseq
      %v984 = vshrl.u32 %v983, 7
      %v985 = vsub.s32 3, %v984
      %v986 = vrot.slane %v608, %v985
      %988 = vbcast.lane.b32.xlu0 %v986, 256
      %v989 = vpop.permute.xlu0 %988
      %s991 = sor.u32 256, 8
      %992 = vbcast.lane.b32.xlu0 %v986, %s991
      %v993 = vpop.permute.xlu0 %992
      %s995 = sor.u32 256, 16
      %996 = vbcast.lane.b32.xlu0 %v986, %s995
      %v997 = vpop.permute.xlu0 %996
      %s999 = sor.u32 256, 24
      %1000 = vbcast.lane.b32.xlu0 %v986, %s999
      %v1001 = vpop.permute.xlu0 %1000
      %v1002 = vlaneseq
      %v1003 = vshrl.u32 %v1002, 7
      %v1004 = vsub.s32 4, %v1003
      %v1005 = vrot.slane %v608, %v1004
      %1007 = vbcast.lane.b32.xlu0 %v1005, 256
      %v1008 = vpop.permute.xlu0 %1007
      %s1010 = sor.u32 256, 8
      %1011 = vbcast.lane.b32.xlu0 %v1005, %s1010
      %v1012 = vpop.permute.xlu0 %1011
      %s1014 = sor.u32 256, 16
      %1015 = vbcast.lane.b32.xlu0 %v1005, %s1014
      %v1016 = vpop.permute.xlu0 %1015
      %s1018 = sor.u32 256, 24
      %1019 = vbcast.lane.b32.xlu0 %v1005, %s1018
      %v1020 = vpop.permute.xlu0 %1019
      %v1021 = vlaneseq
      %v1022 = vshrl.u32 %v1021, 7
      %v1023 = vsub.s32 5, %v1022
      %v1024 = vrot.slane %v608, %v1023
      %1026 = vbcast.lane.b32.xlu0 %v1024, 256
      %v1027 = vpop.permute.xlu0 %1026
      %s1029 = sor.u32 256, 8
      %1030 = vbcast.lane.b32.xlu0 %v1024, %s1029
      %v1031 = vpop.permute.xlu0 %1030
      %s1033 = sor.u32 256, 16
      %1034 = vbcast.lane.b32.xlu0 %v1024, %s1033
      %v1035 = vpop.permute.xlu0 %1034
      %s1037 = sor.u32 256, 24
      %1038 = vbcast.lane.b32.xlu0 %v1024, %s1037
      %v1039 = vpop.permute.xlu0 %1038
      %v1040 = vlaneseq
      %v1041 = vshrl.u32 %v1040, 7
      %v1042 = vsub.s32 6, %v1041
      %v1043 = vrot.slane %v608, %v1042
      %1045 = vbcast.lane.b32.xlu0 %v1043, 256
      %v1046 = vpop.permute.xlu0 %1045
      %s1048 = sor.u32 256, 8
      %1049 = vbcast.lane.b32.xlu0 %v1043, %s1048
      %v1050 = vpop.permute.xlu0 %1049
      %s1052 = sor.u32 256, 16
      %1053 = vbcast.lane.b32.xlu0 %v1043, %s1052
      %v1054 = vpop.permute.xlu0 %1053
      %s1056 = sor.u32 256, 24
      %1057 = vbcast.lane.b32.xlu0 %v1043, %s1056
      %v1058 = vpop.permute.xlu0 %1057
      %v1059 = vlaneseq
      %v1060 = vshrl.u32 %v1059, 7
      %v1061 = vsub.s32 7, %v1060
      %v1062 = vrot.slane %v608, %v1061
      %1064 = vbcast.lane.b32.xlu0 %v1062, 256
      %v1065 = vpop.permute.xlu0 %1064
      %s1067 = sor.u32 256, 8
      %1068 = vbcast.lane.b32.xlu0 %v1062, %s1067
      %v1069 = vpop.permute.xlu0 %1068
      %s1071 = sor.u32 256, 16
      %1072 = vbcast.lane.b32.xlu0 %v1062, %s1071
      %v1073 = vpop.permute.xlu0 %1072
      %s1075 = sor.u32 256, 24
      %1076 = vbcast.lane.b32.xlu0 %v1062, %s1075
      %v1077 = vpop.permute.xlu0 %1076
      %v1078 = vlaneseq
      %v1079 = vshrl.u32 %v1078, 7
      %v1080 = vsub.s32 0, %v1079
      %v1081 = vrot.slane %v609, %v1080
      %1083 = vbcast.lane.b32.xlu0 %v1081, 256
      %v1084 = vpop.permute.xlu0 %1083
      %s1086 = sor.u32 256, 8
      %1087 = vbcast.lane.b32.xlu0 %v1081, %s1086
      %v1088 = vpop.permute.xlu0 %1087
      %s1090 = sor.u32 256, 16
      %1091 = vbcast.lane.b32.xlu0 %v1081, %s1090
      %v1092 = vpop.permute.xlu0 %1091
      %s1094 = sor.u32 256, 24
      %1095 = vbcast.lane.b32.xlu0 %v1081, %s1094
      %v1096 = vpop.permute.xlu0 %1095
      %v1097 = vlaneseq
      %v1098 = vshrl.u32 %v1097, 7
      %v1099 = vsub.s32 1, %v1098
      %v1100 = vrot.slane %v609, %v1099
      %1102 = vbcast.lane.b32.xlu0 %v1100, 256
      %v1103 = vpop.permute.xlu0 %1102
      %s1105 = sor.u32 256, 8
      %1106 = vbcast.lane.b32.xlu0 %v1100, %s1105
      %v1107 = vpop.permute.xlu0 %1106
      %s1109 = sor.u32 256, 16
      %1110 = vbcast.lane.b32.xlu0 %v1100, %s1109
      %v1111 = vpop.permute.xlu0 %1110
      %s1113 = sor.u32 256, 24
      %1114 = vbcast.lane.b32.xlu0 %v1100, %s1113
      %v1115 = vpop.permute.xlu0 %1114
      %v1116 = vlaneseq
      %v1117 = vshrl.u32 %v1116, 7
      %v1118 = vsub.s32 2, %v1117
      %v1119 = vrot.slane %v609, %v1118
      %1121 = vbcast.lane.b32.xlu0 %v1119, 256
      %v1122 = vpop.permute.xlu0 %1121
      %s1124 = sor.u32 256, 8
      %1125 = vbcast.lane.b32.xlu0 %v1119, %s1124
      %v1126 = vpop.permute.xlu0 %1125
      %s1128 = sor.u32 256, 16
      %1129 = vbcast.lane.b32.xlu0 %v1119, %s1128
      %v1130 = vpop.permute.xlu0 %1129
      %s1132 = sor.u32 256, 24
      %1133 = vbcast.lane.b32.xlu0 %v1119, %s1132
      %v1134 = vpop.permute.xlu0 %1133
      %v1135 = vlaneseq
      %v1136 = vshrl.u32 %v1135, 7
      %v1137 = vsub.s32 3, %v1136
      %v1138 = vrot.slane %v609, %v1137
      %1140 = vbcast.lane.b32.xlu0 %v1138, 256
      %v1141 = vpop.permute.xlu0 %1140
      %s1143 = sor.u32 256, 8
      %1144 = vbcast.lane.b32.xlu0 %v1138, %s1143
      %v1145 = vpop.permute.xlu0 %1144
      %s1147 = sor.u32 256, 16
      %1148 = vbcast.lane.b32.xlu0 %v1138, %s1147
      %v1149 = vpop.permute.xlu0 %1148
      %s1151 = sor.u32 256, 24
      %1152 = vbcast.lane.b32.xlu0 %v1138, %s1151
      %v1153 = vpop.permute.xlu0 %1152
      %v1154 = vlaneseq
      %v1155 = vshrl.u32 %v1154, 7
      %v1156 = vsub.s32 4, %v1155
      %v1157 = vrot.slane %v609, %v1156
      %1159 = vbcast.lane.b32.xlu0 %v1157, 256
      %v1160 = vpop.permute.xlu0 %1159
      %s1162 = sor.u32 256, 8
      %1163 = vbcast.lane.b32.xlu0 %v1157, %s1162
      %v1164 = vpop.permute.xlu0 %1163
      %s1166 = sor.u32 256, 16
      %1167 = vbcast.lane.b32.xlu0 %v1157, %s1166
      %v1168 = vpop.permute.xlu0 %1167
      %s1170 = sor.u32 256, 24
      %1171 = vbcast.lane.b32.xlu0 %v1157, %s1170
      %v1172 = vpop.permute.xlu0 %1171
      %v1173 = vlaneseq
      %v1174 = vshrl.u32 %v1173, 7
      %v1175 = vsub.s32 5, %v1174
      %v1176 = vrot.slane %v609, %v1175
      %1178 = vbcast.lane.b32.xlu0 %v1176, 256
      %v1179 = vpop.permute.xlu0 %1178
      %s1181 = sor.u32 256, 8
      %1182 = vbcast.lane.b32.xlu0 %v1176, %s1181
      %v1183 = vpop.permute.xlu0 %1182
      %s1185 = sor.u32 256, 16
      %1186 = vbcast.lane.b32.xlu0 %v1176, %s1185
      %v1187 = vpop.permute.xlu0 %1186
      %s1189 = sor.u32 256, 24
      %1190 = vbcast.lane.b32.xlu0 %v1176, %s1189
      %v1191 = vpop.permute.xlu0 %1190
      %v1192 = vlaneseq
      %v1193 = vshrl.u32 %v1192, 7
      %v1194 = vsub.s32 6, %v1193
      %v1195 = vrot.slane %v609, %v1194
      %1197 = vbcast.lane.b32.xlu0 %v1195, 256
      %v1198 = vpop.permute.xlu0 %1197
      %s1200 = sor.u32 256, 8
      %1201 = vbcast.lane.b32.xlu0 %v1195, %s1200
      %v1202 = vpop.permute.xlu0 %1201
      %s1204 = sor.u32 256, 16
      %1205 = vbcast.lane.b32.xlu0 %v1195, %s1204
      %v1206 = vpop.permute.xlu0 %1205
      %s1208 = sor.u32 256, 24
      %1209 = vbcast.lane.b32.xlu0 %v1195, %s1208
      %v1210 = vpop.permute.xlu0 %1209
      %v1211 = vlaneseq
      %v1212 = vshrl.u32 %v1211, 7
      %v1213 = vsub.s32 7, %v1212
      %v1214 = vrot.slane %v609, %v1213
      %1216 = vbcast.lane.b32.xlu0 %v1214, 256
      %v1217 = vpop.permute.xlu0 %1216
      %s1219 = sor.u32 256, 8
      %1220 = vbcast.lane.b32.xlu0 %v1214, %s1219
      %v1221 = vpop.permute.xlu0 %1220
      %s1223 = sor.u32 256, 16
      %1224 = vbcast.lane.b32.xlu0 %v1214, %s1223
      %v1225 = vpop.permute.xlu0 %1224
      %s1227 = sor.u32 256, 24
      %1228 = vbcast.lane.b32.xlu0 %v1214, %s1227
      %v1229 = vpop.permute.xlu0 %1228
      %v1230 = vlaneseq
      %v1231 = vshrl.u32 %v1230, 7
      %v1232 = vsub.s32 0, %v1231
      %v1233 = vrot.slane %v610, %v1232
      %1235 = vbcast.lane.b32.xlu0 %v1233, 256
      %v1236 = vpop.permute.xlu0 %1235
      %s1238 = sor.u32 256, 8
      %1239 = vbcast.lane.b32.xlu0 %v1233, %s1238
      %v1240 = vpop.permute.xlu0 %1239
      %s1242 = sor.u32 256, 16
      %1243 = vbcast.lane.b32.xlu0 %v1233, %s1242
      %v1244 = vpop.permute.xlu0 %1243
      %s1246 = sor.u32 256, 24
      %1247 = vbcast.lane.b32.xlu0 %v1233, %s1246
      %v1248 = vpop.permute.xlu0 %1247
      %v1249 = vlaneseq
      %v1250 = vshrl.u32 %v1249, 7
      %v1251 = vsub.s32 1, %v1250
      %v1252 = vrot.slane %v610, %v1251
      %1254 = vbcast.lane.b32.xlu0 %v1252, 256
      %v1255 = vpop.permute.xlu0 %1254
      %s1257 = sor.u32 256, 8
      %1258 = vbcast.lane.b32.xlu0 %v1252, %s1257
      %v1259 = vpop.permute.xlu0 %1258
      %s1261 = sor.u32 256, 16
      %1262 = vbcast.lane.b32.xlu0 %v1252, %s1261
      %v1263 = vpop.permute.xlu0 %1262
      %s1265 = sor.u32 256, 24
      %1266 = vbcast.lane.b32.xlu0 %v1252, %s1265
      %v1267 = vpop.permute.xlu0 %1266
      %v1268 = vlaneseq
      %v1269 = vshrl.u32 %v1268, 7
      %v1270 = vsub.s32 2, %v1269
      %v1271 = vrot.slane %v610, %v1270
      %1273 = vbcast.lane.b32.xlu0 %v1271, 256
      %v1274 = vpop.permute.xlu0 %1273
      %s1276 = sor.u32 256, 8
      %1277 = vbcast.lane.b32.xlu0 %v1271, %s1276
      %v1278 = vpop.permute.xlu0 %1277
      %s1280 = sor.u32 256, 16
      %1281 = vbcast.lane.b32.xlu0 %v1271, %s1280
      %v1282 = vpop.permute.xlu0 %1281
      %s1284 = sor.u32 256, 24
      %1285 = vbcast.lane.b32.xlu0 %v1271, %s1284
      %v1286 = vpop.permute.xlu0 %1285
      %v1287 = vlaneseq
      %v1288 = vshrl.u32 %v1287, 7
      %v1289 = vsub.s32 3, %v1288
      %v1290 = vrot.slane %v610, %v1289
      %1292 = vbcast.lane.b32.xlu0 %v1290, 256
      %v1293 = vpop.permute.xlu0 %1292
      %s1295 = sor.u32 256, 8
      %1296 = vbcast.lane.b32.xlu0 %v1290, %s1295
      %v1297 = vpop.permute.xlu0 %1296
      %s1299 = sor.u32 256, 16
      %1300 = vbcast.lane.b32.xlu0 %v1290, %s1299
      %v1301 = vpop.permute.xlu0 %1300
      %s1303 = sor.u32 256, 24
      %1304 = vbcast.lane.b32.xlu0 %v1290, %s1303
      %v1305 = vpop.permute.xlu0 %1304
      %v1306 = vlaneseq
      %v1307 = vshrl.u32 %v1306, 7
      %v1308 = vsub.s32 4, %v1307
      %v1309 = vrot.slane %v610, %v1308
      %1311 = vbcast.lane.b32.xlu0 %v1309, 256
      %v1312 = vpop.permute.xlu0 %1311
      %s1314 = sor.u32 256, 8
      %1315 = vbcast.lane.b32.xlu0 %v1309, %s1314
      %v1316 = vpop.permute.xlu0 %1315
      %s1318 = sor.u32 256, 16
      %1319 = vbcast.lane.b32.xlu0 %v1309, %s1318
      %v1320 = vpop.permute.xlu0 %1319
      %s1322 = sor.u32 256, 24
      %1323 = vbcast.lane.b32.xlu0 %v1309, %s1322
      %v1324 = vpop.permute.xlu0 %1323
      %v1325 = vlaneseq
      %v1326 = vshrl.u32 %v1325, 7
      %v1327 = vsub.s32 5, %v1326
      %v1328 = vrot.slane %v610, %v1327
      %1330 = vbcast.lane.b32.xlu0 %v1328, 256
      %v1331 = vpop.permute.xlu0 %1330
      %s1333 = sor.u32 256, 8
      %1334 = vbcast.lane.b32.xlu0 %v1328, %s1333
      %v1335 = vpop.permute.xlu0 %1334
      %s1337 = sor.u32 256, 16
      %1338 = vbcast.lane.b32.xlu0 %v1328, %s1337
      %v1339 = vpop.permute.xlu0 %1338
      %s1341 = sor.u32 256, 24
      %1342 = vbcast.lane.b32.xlu0 %v1328, %s1341
      %v1343 = vpop.permute.xlu0 %1342
      %v1344 = vlaneseq
      %v1345 = vshrl.u32 %v1344, 7
      %v1346 = vsub.s32 6, %v1345
      %v1347 = vrot.slane %v610, %v1346
      %1349 = vbcast.lane.b32.xlu0 %v1347, 256
      %v1350 = vpop.permute.xlu0 %1349
      %s1352 = sor.u32 256, 8
      %1353 = vbcast.lane.b32.xlu0 %v1347, %s1352
      %v1354 = vpop.permute.xlu0 %1353
      %s1356 = sor.u32 256, 16
      %1357 = vbcast.lane.b32.xlu0 %v1347, %s1356
      %v1358 = vpop.permute.xlu0 %1357
      %s1360 = sor.u32 256, 24
      %1361 = vbcast.lane.b32.xlu0 %v1347, %s1360
      %v1362 = vpop.permute.xlu0 %1361
      %v1363 = vlaneseq
      %v1364 = vshrl.u32 %v1363, 7
      %v1365 = vsub.s32 7, %v1364
      %v1366 = vrot.slane %v610, %v1365
      %1368 = vbcast.lane.b32.xlu0 %v1366, 256
      %v1369 = vpop.permute.xlu0 %1368
      %s1371 = sor.u32 256, 8
      %1372 = vbcast.lane.b32.xlu0 %v1366, %s1371
      %v1373 = vpop.permute.xlu0 %1372
      %s1375 = sor.u32 256, 16
      %1376 = vbcast.lane.b32.xlu0 %v1366, %s1375
      %v1377 = vpop.permute.xlu0 %1376
      %s1379 = sor.u32 256, 24
      %1380 = vbcast.lane.b32.xlu0 %v1366, %s1379
      %v1381 = vpop.permute.xlu0 %1380
      %v1382 = vlaneseq
      %v1383 = vshrl.u32 %v1382, 7
      %v1384 = vsub.s32 0, %v1383
      %v1385 = vrot.slane %v611, %v1384
      %1387 = vbcast.lane.b32.xlu0 %v1385, 256
      %v1388 = vpop.permute.xlu0 %1387
      %s1390 = sor.u32 256, 8
      %1391 = vbcast.lane.b32.xlu0 %v1385, %s1390
      %v1392 = vpop.permute.xlu0 %1391
      %s1394 = sor.u32 256, 16
      %1395 = vbcast.lane.b32.xlu0 %v1385, %s1394
      %v1396 = vpop.permute.xlu0 %1395
      %s1398 = sor.u32 256, 24
      %1399 = vbcast.lane.b32.xlu0 %v1385, %s1398
      %v1400 = vpop.permute.xlu0 %1399
      %v1401 = vlaneseq
      %v1402 = vshrl.u32 %v1401, 7
      %v1403 = vsub.s32 1, %v1402
      %v1404 = vrot.slane %v611, %v1403
      %1406 = vbcast.lane.b32.xlu0 %v1404, 256
      %v1407 = vpop.permute.xlu0 %1406
      %s1409 = sor.u32 256, 8
      %1410 = vbcast.lane.b32.xlu0 %v1404, %s1409
      %v1411 = vpop.permute.xlu0 %1410
      %s1413 = sor.u32 256, 16
      %1414 = vbcast.lane.b32.xlu0 %v1404, %s1413
      %v1415 = vpop.permute.xlu0 %1414
      %s1417 = sor.u32 256, 24
      %1418 = vbcast.lane.b32.xlu0 %v1404, %s1417
      %v1419 = vpop.permute.xlu0 %1418
      %v1420 = vlaneseq
      %v1421 = vshrl.u32 %v1420, 7
      %v1422 = vsub.s32 2, %v1421
      %v1423 = vrot.slane %v611, %v1422
      %1425 = vbcast.lane.b32.xlu0 %v1423, 256
      %v1426 = vpop.permute.xlu0 %1425
      %s1428 = sor.u32 256, 8
      %1429 = vbcast.lane.b32.xlu0 %v1423, %s1428
      %v1430 = vpop.permute.xlu0 %1429
      %s1432 = sor.u32 256, 16
      %1433 = vbcast.lane.b32.xlu0 %v1423, %s1432
      %v1434 = vpop.permute.xlu0 %1433
      %s1436 = sor.u32 256, 24
      %1437 = vbcast.lane.b32.xlu0 %v1423, %s1436
      %v1438 = vpop.permute.xlu0 %1437
      %v1439 = vlaneseq
      %v1440 = vshrl.u32 %v1439, 7
      %v1441 = vsub.s32 3, %v1440
      %v1442 = vrot.slane %v611, %v1441
      %1444 = vbcast.lane.b32.xlu0 %v1442, 256
      %v1445 = vpop.permute.xlu0 %1444
      %s1447 = sor.u32 256, 8
      %1448 = vbcast.lane.b32.xlu0 %v1442, %s1447
      %v1449 = vpop.permute.xlu0 %1448
      %s1451 = sor.u32 256, 16
      %1452 = vbcast.lane.b32.xlu0 %v1442, %s1451
      %v1453 = vpop.permute.xlu0 %1452
      %s1455 = sor.u32 256, 24
      %1456 = vbcast.lane.b32.xlu0 %v1442, %s1455
      %v1457 = vpop.permute.xlu0 %1456
      %v1458 = vlaneseq
      %v1459 = vshrl.u32 %v1458, 7
      %v1460 = vsub.s32 4, %v1459
      %v1461 = vrot.slane %v611, %v1460
      %1463 = vbcast.lane.b32.xlu0 %v1461, 256
      %v1464 = vpop.permute.xlu0 %1463
      %s1466 = sor.u32 256, 8
      %1467 = vbcast.lane.b32.xlu0 %v1461, %s1466
      %v1468 = vpop.permute.xlu0 %1467
      %s1470 = sor.u32 256, 16
      %1471 = vbcast.lane.b32.xlu0 %v1461, %s1470
      %v1472 = vpop.permute.xlu0 %1471
      %s1474 = sor.u32 256, 24
      %1475 = vbcast.lane.b32.xlu0 %v1461, %s1474
      %v1476 = vpop.permute.xlu0 %1475
      %v1477 = vlaneseq
      %v1478 = vshrl.u32 %v1477, 7
      %v1479 = vsub.s32 5, %v1478
      %v1480 = vrot.slane %v611, %v1479
      %1482 = vbcast.lane.b32.xlu0 %v1480, 256
      %v1483 = vpop.permute.xlu0 %1482
      %s1485 = sor.u32 256, 8
      %1486 = vbcast.lane.b32.xlu0 %v1480, %s1485
      %v1487 = vpop.permute.xlu0 %1486
      %s1489 = sor.u32 256, 16
      %1490 = vbcast.lane.b32.xlu0 %v1480, %s1489
      %v1491 = vpop.permute.xlu0 %1490
      %s1493 = sor.u32 256, 24
      %1494 = vbcast.lane.b32.xlu0 %v1480, %s1493
      %v1495 = vpop.permute.xlu0 %1494
      %v1496 = vlaneseq
      %v1497 = vshrl.u32 %v1496, 7
      %v1498 = vsub.s32 6, %v1497
      %v1499 = vrot.slane %v611, %v1498
      %1501 = vbcast.lane.b32.xlu0 %v1499, 256
      %v1502 = vpop.permute.xlu0 %1501
      %s1504 = sor.u32 256, 8
      %1505 = vbcast.lane.b32.xlu0 %v1499, %s1504
      %v1506 = vpop.permute.xlu0 %1505
      %s1508 = sor.u32 256, 16
      %1509 = vbcast.lane.b32.xlu0 %v1499, %s1508
      %v1510 = vpop.permute.xlu0 %1509
      %s1512 = sor.u32 256, 24
      %1513 = vbcast.lane.b32.xlu0 %v1499, %s1512
      %v1514 = vpop.permute.xlu0 %1513
      %v1515 = vlaneseq
      %v1516 = vshrl.u32 %v1515, 7
      %v1517 = vsub.s32 7, %v1516
      %v1518 = vrot.slane %v611, %v1517
      %1520 = vbcast.lane.b32.xlu0 %v1518, 256
      %v1521 = vpop.permute.xlu0 %1520
      %s1523 = sor.u32 256, 8
      %1524 = vbcast.lane.b32.xlu0 %v1518, %s1523
      %v1525 = vpop.permute.xlu0 %1524
      %s1527 = sor.u32 256, 16
      %1528 = vbcast.lane.b32.xlu0 %v1518, %s1527
      %v1529 = vpop.permute.xlu0 %1528
      %s1531 = sor.u32 256, 24
      %1532 = vbcast.lane.b32.xlu0 %v1518, %s1531
      %v1533 = vpop.permute.xlu0 %1532
      %v1534 = vlaneseq
      %v1535 = vshrl.u32 %v1534, 7
      %v1536 = vsub.s32 0, %v1535
      %v1537 = vrot.slane %v612, %v1536
      %1539 = vbcast.lane.b32.xlu0 %v1537, 256
      %v1540 = vpop.permute.xlu0 %1539
      %s1542 = sor.u32 256, 8
      %1543 = vbcast.lane.b32.xlu0 %v1537, %s1542
      %v1544 = vpop.permute.xlu0 %1543
      %s1546 = sor.u32 256, 16
      %1547 = vbcast.lane.b32.xlu0 %v1537, %s1546
      %v1548 = vpop.permute.xlu0 %1547
      %s1550 = sor.u32 256, 24
      %1551 = vbcast.lane.b32.xlu0 %v1537, %s1550
      %v1552 = vpop.permute.xlu0 %1551
      %v1553 = vlaneseq
      %v1554 = vshrl.u32 %v1553, 7
      %v1555 = vsub.s32 1, %v1554
      %v1556 = vrot.slane %v612, %v1555
      %1558 = vbcast.lane.b32.xlu0 %v1556, 256
      %v1559 = vpop.permute.xlu0 %1558
      %s1561 = sor.u32 256, 8
      %1562 = vbcast.lane.b32.xlu0 %v1556, %s1561
      %v1563 = vpop.permute.xlu0 %1562
      %s1565 = sor.u32 256, 16
      %1566 = vbcast.lane.b32.xlu0 %v1556, %s1565
      %v1567 = vpop.permute.xlu0 %1566
      %s1569 = sor.u32 256, 24
      %1570 = vbcast.lane.b32.xlu0 %v1556, %s1569
      %v1571 = vpop.permute.xlu0 %1570
      %v1572 = vlaneseq
      %v1573 = vshrl.u32 %v1572, 7
      %v1574 = vsub.s32 2, %v1573
      %v1575 = vrot.slane %v612, %v1574
      %1577 = vbcast.lane.b32.xlu0 %v1575, 256
      %v1578 = vpop.permute.xlu0 %1577
      %s1580 = sor.u32 256, 8
      %1581 = vbcast.lane.b32.xlu0 %v1575, %s1580
      %v1582 = vpop.permute.xlu0 %1581
      %s1584 = sor.u32 256, 16
      %1585 = vbcast.lane.b32.xlu0 %v1575, %s1584
      %v1586 = vpop.permute.xlu0 %1585
      %s1588 = sor.u32 256, 24
      %1589 = vbcast.lane.b32.xlu0 %v1575, %s1588
      %v1590 = vpop.permute.xlu0 %1589
      %v1591 = vlaneseq
      %v1592 = vshrl.u32 %v1591, 7
      %v1593 = vsub.s32 3, %v1592
      %v1594 = vrot.slane %v612, %v1593
      %1596 = vbcast.lane.b32.xlu0 %v1594, 256
      %v1597 = vpop.permute.xlu0 %1596
      %s1599 = sor.u32 256, 8
      %1600 = vbcast.lane.b32.xlu0 %v1594, %s1599
      %v1601 = vpop.permute.xlu0 %1600
      %s1603 = sor.u32 256, 16
      %1604 = vbcast.lane.b32.xlu0 %v1594, %s1603
      %v1605 = vpop.permute.xlu0 %1604
      %s1607 = sor.u32 256, 24
      %1608 = vbcast.lane.b32.xlu0 %v1594, %s1607
      %v1609 = vpop.permute.xlu0 %1608
      %v1610 = vlaneseq
      %v1611 = vshrl.u32 %v1610, 7
      %v1612 = vsub.s32 4, %v1611
      %v1613 = vrot.slane %v612, %v1612
      %1615 = vbcast.lane.b32.xlu0 %v1613, 256
      %v1616 = vpop.permute.xlu0 %1615
      %s1618 = sor.u32 256, 8
      %1619 = vbcast.lane.b32.xlu0 %v1613, %s1618
      %v1620 = vpop.permute.xlu0 %1619
      %s1622 = sor.u32 256, 16
      %1623 = vbcast.lane.b32.xlu0 %v1613, %s1622
      %v1624 = vpop.permute.xlu0 %1623
      %s1626 = sor.u32 256, 24
      %1627 = vbcast.lane.b32.xlu0 %v1613, %s1626
      %v1628 = vpop.permute.xlu0 %1627
      %v1629 = vlaneseq
      %v1630 = vshrl.u32 %v1629, 7
      %v1631 = vsub.s32 5, %v1630
      %v1632 = vrot.slane %v612, %v1631
      %1634 = vbcast.lane.b32.xlu0 %v1632, 256
      %v1635 = vpop.permute.xlu0 %1634
      %s1637 = sor.u32 256, 8
      %1638 = vbcast.lane.b32.xlu0 %v1632, %s1637
      %v1639 = vpop.permute.xlu0 %1638
      %s1641 = sor.u32 256, 16
      %1642 = vbcast.lane.b32.xlu0 %v1632, %s1641
      %v1643 = vpop.permute.xlu0 %1642
      %s1645 = sor.u32 256, 24
      %1646 = vbcast.lane.b32.xlu0 %v1632, %s1645
      %v1647 = vpop.permute.xlu0 %1646
      %v1648 = vlaneseq
      %v1649 = vshrl.u32 %v1648, 7
      %v1650 = vsub.s32 6, %v1649
      %v1651 = vrot.slane %v612, %v1650
      %1653 = vbcast.lane.b32.xlu0 %v1651, 256
      %v1654 = vpop.permute.xlu0 %1653
      %s1656 = sor.u32 256, 8
      %1657 = vbcast.lane.b32.xlu0 %v1651, %s1656
      %v1658 = vpop.permute.xlu0 %1657
      %s1660 = sor.u32 256, 16
      %1661 = vbcast.lane.b32.xlu0 %v1651, %s1660
      %v1662 = vpop.permute.xlu0 %1661
      %s1664 = sor.u32 256, 24
      %1665 = vbcast.lane.b32.xlu0 %v1651, %s1664
      %v1666 = vpop.permute.xlu0 %1665
      %v1667 = vlaneseq
      %v1668 = vshrl.u32 %v1667, 7
      %v1669 = vsub.s32 7, %v1668
      %v1670 = vrot.slane %v612, %v1669
      %1672 = vbcast.lane.b32.xlu0 %v1670, 256
      %v1673 = vpop.permute.xlu0 %1672
      %s1675 = sor.u32 256, 8
      %1676 = vbcast.lane.b32.xlu0 %v1670, %s1675
      %v1677 = vpop.permute.xlu0 %1676
      %s1679 = sor.u32 256, 16
      %1680 = vbcast.lane.b32.xlu0 %v1670, %s1679
      %v1681 = vpop.permute.xlu0 %1680
      %s1683 = sor.u32 256, 24
      %1684 = vbcast.lane.b32.xlu0 %v1670, %s1683
      %v1685 = vpop.permute.xlu0 %1684
      %v1686 = vlaneseq
      %v1687 = vshrl.u32 %v1686, 7
      %v1688 = vsub.s32 0, %v1687
      %v1689 = vrot.slane %v613, %v1688
      %1691 = vbcast.lane.b32.xlu0 %v1689, 256
      %v1692 = vpop.permute.xlu0 %1691
      %s1694 = sor.u32 256, 8
      %1695 = vbcast.lane.b32.xlu0 %v1689, %s1694
      %v1696 = vpop.permute.xlu0 %1695
      %s1698 = sor.u32 256, 16
      %1699 = vbcast.lane.b32.xlu0 %v1689, %s1698
      %v1700 = vpop.permute.xlu0 %1699
      %s1702 = sor.u32 256, 24
      %1703 = vbcast.lane.b32.xlu0 %v1689, %s1702
      %v1704 = vpop.permute.xlu0 %1703
      %v1705 = vlaneseq
      %v1706 = vshrl.u32 %v1705, 7
      %v1707 = vsub.s32 1, %v1706
      %v1708 = vrot.slane %v613, %v1707
      %1710 = vbcast.lane.b32.xlu0 %v1708, 256
      %v1711 = vpop.permute.xlu0 %1710
      %s1713 = sor.u32 256, 8
      %1714 = vbcast.lane.b32.xlu0 %v1708, %s1713
      %v1715 = vpop.permute.xlu0 %1714
      %s1717 = sor.u32 256, 16
      %1718 = vbcast.lane.b32.xlu0 %v1708, %s1717
      %v1719 = vpop.permute.xlu0 %1718
      %s1721 = sor.u32 256, 24
      %1722 = vbcast.lane.b32.xlu0 %v1708, %s1721
      %v1723 = vpop.permute.xlu0 %1722
      %v1724 = vlaneseq
      %v1725 = vshrl.u32 %v1724, 7
      %v1726 = vsub.s32 2, %v1725
      %v1727 = vrot.slane %v613, %v1726
      %1729 = vbcast.lane.b32.xlu0 %v1727, 256
      %v1730 = vpop.permute.xlu0 %1729
      %s1732 = sor.u32 256, 8
      %1733 = vbcast.lane.b32.xlu0 %v1727, %s1732
      %v1734 = vpop.permute.xlu0 %1733
      %s1736 = sor.u32 256, 16
      %1737 = vbcast.lane.b32.xlu0 %v1727, %s1736
      %v1738 = vpop.permute.xlu0 %1737
      %s1740 = sor.u32 256, 24
      %1741 = vbcast.lane.b32.xlu0 %v1727, %s1740
      %v1742 = vpop.permute.xlu0 %1741
      %v1743 = vlaneseq
      %v1744 = vshrl.u32 %v1743, 7
      %v1745 = vsub.s32 3, %v1744
      %v1746 = vrot.slane %v613, %v1745
      %1748 = vbcast.lane.b32.xlu0 %v1746, 256
      %v1749 = vpop.permute.xlu0 %1748
      %s1751 = sor.u32 256, 8
      %1752 = vbcast.lane.b32.xlu0 %v1746, %s1751
      %v1753 = vpop.permute.xlu0 %1752
      %s1755 = sor.u32 256, 16
      %1756 = vbcast.lane.b32.xlu0 %v1746, %s1755
      %v1757 = vpop.permute.xlu0 %1756
      %s1759 = sor.u32 256, 24
      %1760 = vbcast.lane.b32.xlu0 %v1746, %s1759
      %v1761 = vpop.permute.xlu0 %1760
      %v1762 = vlaneseq
      %v1763 = vshrl.u32 %v1762, 7
      %v1764 = vsub.s32 4, %v1763
      %v1765 = vrot.slane %v613, %v1764
      %1767 = vbcast.lane.b32.xlu0 %v1765, 256
      %v1768 = vpop.permute.xlu0 %1767
      %s1770 = sor.u32 256, 8
      %1771 = vbcast.lane.b32.xlu0 %v1765, %s1770
      %v1772 = vpop.permute.xlu0 %1771
      %s1774 = sor.u32 256, 16
      %1775 = vbcast.lane.b32.xlu0 %v1765, %s1774
      %v1776 = vpop.permute.xlu0 %1775
      %s1778 = sor.u32 256, 24
      %1779 = vbcast.lane.b32.xlu0 %v1765, %s1778
      %v1780 = vpop.permute.xlu0 %1779
      %v1781 = vlaneseq
      %v1782 = vshrl.u32 %v1781, 7
      %v1783 = vsub.s32 5, %v1782
      %v1784 = vrot.slane %v613, %v1783
      %1786 = vbcast.lane.b32.xlu0 %v1784, 256
      %v1787 = vpop.permute.xlu0 %1786
      %s1789 = sor.u32 256, 8
      %1790 = vbcast.lane.b32.xlu0 %v1784, %s1789
      %v1791 = vpop.permute.xlu0 %1790
      %s1793 = sor.u32 256, 16
      %1794 = vbcast.lane.b32.xlu0 %v1784, %s1793
      %v1795 = vpop.permute.xlu0 %1794
      %s1797 = sor.u32 256, 24
      %1798 = vbcast.lane.b32.xlu0 %v1784, %s1797
      %v1799 = vpop.permute.xlu0 %1798
      %v1800 = vlaneseq
      %v1801 = vshrl.u32 %v1800, 7
      %v1802 = vsub.s32 6, %v1801
      %v1803 = vrot.slane %v613, %v1802
      %1805 = vbcast.lane.b32.xlu0 %v1803, 256
      %v1806 = vpop.permute.xlu0 %1805
      %s1808 = sor.u32 256, 8
      %1809 = vbcast.lane.b32.xlu0 %v1803, %s1808
      %v1810 = vpop.permute.xlu0 %1809
      %s1812 = sor.u32 256, 16
      %1813 = vbcast.lane.b32.xlu0 %v1803, %s1812
      %v1814 = vpop.permute.xlu0 %1813
      %s1816 = sor.u32 256, 24
      %1817 = vbcast.lane.b32.xlu0 %v1803, %s1816
      %v1818 = vpop.permute.xlu0 %1817
      %v1819 = vlaneseq
      %v1820 = vshrl.u32 %v1819, 7
      %v1821 = vsub.s32 7, %v1820
      %v1822 = vrot.slane %v613, %v1821
      %1824 = vbcast.lane.b32.xlu0 %v1822, 256
      %v1825 = vpop.permute.xlu0 %1824
      %s1827 = sor.u32 256, 8
      %1828 = vbcast.lane.b32.xlu0 %v1822, %s1827
      %v1829 = vpop.permute.xlu0 %1828
      %s1831 = sor.u32 256, 16
      %1832 = vbcast.lane.b32.xlu0 %v1822, %s1831
      %v1833 = vpop.permute.xlu0 %1832
      %s1835 = sor.u32 256, 24
      %1836 = vbcast.lane.b32.xlu0 %v1822, %s1835
      %v1837 = vpop.permute.xlu0 %1836
      %v1838 = vlaneseq
      %v1839 = vshrl.u32 %v1838, 7
      %v1840 = vsub.s32 0, %v1839
      %v1841 = vrot.slane %v614, %v1840
      %1843 = vbcast.lane.b32.xlu0 %v1841, 256
      %v1844 = vpop.permute.xlu0 %1843
      %s1846 = sor.u32 256, 8
      %1847 = vbcast.lane.b32.xlu0 %v1841, %s1846
      %v1848 = vpop.permute.xlu0 %1847
      %s1850 = sor.u32 256, 16
      %1851 = vbcast.lane.b32.xlu0 %v1841, %s1850
      %v1852 = vpop.permute.xlu0 %1851
      %s1854 = sor.u32 256, 24
      %1855 = vbcast.lane.b32.xlu0 %v1841, %s1854
      %v1856 = vpop.permute.xlu0 %1855
      %v1857 = vlaneseq
      %v1858 = vshrl.u32 %v1857, 7
      %v1859 = vsub.s32 1, %v1858
      %v1860 = vrot.slane %v614, %v1859
      %1862 = vbcast.lane.b32.xlu0 %v1860, 256
      %v1863 = vpop.permute.xlu0 %1862
      %s1865 = sor.u32 256, 8
      %1866 = vbcast.lane.b32.xlu0 %v1860, %s1865
      %v1867 = vpop.permute.xlu0 %1866
      %s1869 = sor.u32 256, 16
      %1870 = vbcast.lane.b32.xlu0 %v1860, %s1869
      %v1871 = vpop.permute.xlu0 %1870
      %s1873 = sor.u32 256, 24
      %1874 = vbcast.lane.b32.xlu0 %v1860, %s1873
      %v1875 = vpop.permute.xlu0 %1874
      %v1876 = vlaneseq
      %v1877 = vshrl.u32 %v1876, 7
      %v1878 = vsub.s32 2, %v1877
      %v1879 = vrot.slane %v614, %v1878
      %1881 = vbcast.lane.b32.xlu0 %v1879, 256
      %v1882 = vpop.permute.xlu0 %1881
      %s1884 = sor.u32 256, 8
      %1885 = vbcast.lane.b32.xlu0 %v1879, %s1884
      %v1886 = vpop.permute.xlu0 %1885
      %s1888 = sor.u32 256, 16
      %1889 = vbcast.lane.b32.xlu0 %v1879, %s1888
      %v1890 = vpop.permute.xlu0 %1889
      %s1892 = sor.u32 256, 24
      %1893 = vbcast.lane.b32.xlu0 %v1879, %s1892
      %v1894 = vpop.permute.xlu0 %1893
      %v1895 = vlaneseq
      %v1896 = vshrl.u32 %v1895, 7
      %v1897 = vsub.s32 3, %v1896
      %v1898 = vrot.slane %v614, %v1897
      %1900 = vbcast.lane.b32.xlu0 %v1898, 256
      %v1901 = vpop.permute.xlu0 %1900
      %s1903 = sor.u32 256, 8
      %1904 = vbcast.lane.b32.xlu0 %v1898, %s1903
      %v1905 = vpop.permute.xlu0 %1904
      %s1907 = sor.u32 256, 16
      %1908 = vbcast.lane.b32.xlu0 %v1898, %s1907
      %v1909 = vpop.permute.xlu0 %1908
      %s1911 = sor.u32 256, 24
      %1912 = vbcast.lane.b32.xlu0 %v1898, %s1911
      %v1913 = vpop.permute.xlu0 %1912
      %v1914 = vlaneseq
      %v1915 = vshrl.u32 %v1914, 7
      %v1916 = vsub.s32 4, %v1915
      %v1917 = vrot.slane %v614, %v1916
      %1919 = vbcast.lane.b32.xlu0 %v1917, 256
      %v1920 = vpop.permute.xlu0 %1919
      %s1922 = sor.u32 256, 8
      %1923 = vbcast.lane.b32.xlu0 %v1917, %s1922
      %v1924 = vpop.permute.xlu0 %1923
      %s1926 = sor.u32 256, 16
      %1927 = vbcast.lane.b32.xlu0 %v1917, %s1926
      %v1928 = vpop.permute.xlu0 %1927
      %s1930 = sor.u32 256, 24
      %1931 = vbcast.lane.b32.xlu0 %v1917, %s1930
      %v1932 = vpop.permute.xlu0 %1931
      %v1933 = vlaneseq
      %v1934 = vshrl.u32 %v1933, 7
      %v1935 = vsub.s32 5, %v1934
      %v1936 = vrot.slane %v614, %v1935
      %1938 = vbcast.lane.b32.xlu0 %v1936, 256
      %v1939 = vpop.permute.xlu0 %1938
      %s1941 = sor.u32 256, 8
      %1942 = vbcast.lane.b32.xlu0 %v1936, %s1941
      %v1943 = vpop.permute.xlu0 %1942
      %s1945 = sor.u32 256, 16
      %1946 = vbcast.lane.b32.xlu0 %v1936, %s1945
      %v1947 = vpop.permute.xlu0 %1946
      %s1949 = sor.u32 256, 24
      %1950 = vbcast.lane.b32.xlu0 %v1936, %s1949
      %v1951 = vpop.permute.xlu0 %1950
      %v1952 = vlaneseq
      %v1953 = vshrl.u32 %v1952, 7
      %v1954 = vsub.s32 6, %v1953
      %v1955 = vrot.slane %v614, %v1954
      %1957 = vbcast.lane.b32.xlu0 %v1955, 256
      %v1958 = vpop.permute.xlu0 %1957
      %s1960 = sor.u32 256, 8
      %1961 = vbcast.lane.b32.xlu0 %v1955, %s1960
      %v1962 = vpop.permute.xlu0 %1961
      %s1964 = sor.u32 256, 16
      %1965 = vbcast.lane.b32.xlu0 %v1955, %s1964
      %v1966 = vpop.permute.xlu0 %1965
      %s1968 = sor.u32 256, 24
      %1969 = vbcast.lane.b32.xlu0 %v1955, %s1968
      %v1970 = vpop.permute.xlu0 %1969
      %v1971 = vlaneseq
      %v1972 = vshrl.u32 %v1971, 7
      %v1973 = vsub.s32 7, %v1972
      %v1974 = vrot.slane %v614, %v1973
      %1976 = vbcast.lane.b32.xlu0 %v1974, 256
      %v1977 = vpop.permute.xlu0 %1976
      %s1979 = sor.u32 256, 8
      %1980 = vbcast.lane.b32.xlu0 %v1974, %s1979
      %v1981 = vpop.permute.xlu0 %1980
      %s1983 = sor.u32 256, 16
      %1984 = vbcast.lane.b32.xlu0 %v1974, %s1983
      %v1985 = vpop.permute.xlu0 %1984
      %s1987 = sor.u32 256, 24
      %1988 = vbcast.lane.b32.xlu0 %v1974, %s1987
      %v1989 = vpop.permute.xlu0 %1988
      %v1990 = vlaneseq
      %v1991 = vshrl.u32 %v1990, 7
      %v1992 = vsub.s32 0, %v1991
      %v1993 = vrot.slane %v615, %v1992
      %1995 = vbcast.lane.b32.xlu0 %v1993, 256
      %v1996 = vpop.permute.xlu0 %1995
      %s1998 = sor.u32 256, 8
      %1999 = vbcast.lane.b32.xlu0 %v1993, %s1998
      %v2000 = vpop.permute.xlu0 %1999
      %s2002 = sor.u32 256, 16
      %2003 = vbcast.lane.b32.xlu0 %v1993, %s2002
      %v2004 = vpop.permute.xlu0 %2003
      %s2006 = sor.u32 256, 24
      %2007 = vbcast.lane.b32.xlu0 %v1993, %s2006
      %v2008 = vpop.permute.xlu0 %2007
      %v2009 = vlaneseq
      %v2010 = vshrl.u32 %v2009, 7
      %v2011 = vsub.s32 1, %v2010
      %v2012 = vrot.slane %v615, %v2011
      %2014 = vbcast.lane.b32.xlu0 %v2012, 256
      %v2015 = vpop.permute.xlu0 %2014
      %s2017 = sor.u32 256, 8
      %2018 = vbcast.lane.b32.xlu0 %v2012, %s2017
      %v2019 = vpop.permute.xlu0 %2018
      %s2021 = sor.u32 256, 16
      %2022 = vbcast.lane.b32.xlu0 %v2012, %s2021
      %v2023 = vpop.permute.xlu0 %2022
      %s2025 = sor.u32 256, 24
      %2026 = vbcast.lane.b32.xlu0 %v2012, %s2025
      %v2027 = vpop.permute.xlu0 %2026
      %v2028 = vlaneseq
      %v2029 = vshrl.u32 %v2028, 7
      %v2030 = vsub.s32 2, %v2029
      %v2031 = vrot.slane %v615, %v2030
      %2033 = vbcast.lane.b32.xlu0 %v2031, 256
      %v2034 = vpop.permute.xlu0 %2033
      %s2036 = sor.u32 256, 8
      %2037 = vbcast.lane.b32.xlu0 %v2031, %s2036
      %v2038 = vpop.permute.xlu0 %2037
      %s2040 = sor.u32 256, 16
      %2041 = vbcast.lane.b32.xlu0 %v2031, %s2040
      %v2042 = vpop.permute.xlu0 %2041
      %s2044 = sor.u32 256, 24
      %2045 = vbcast.lane.b32.xlu0 %v2031, %s2044
      %v2046 = vpop.permute.xlu0 %2045
      %v2047 = vlaneseq
      %v2048 = vshrl.u32 %v2047, 7
      %v2049 = vsub.s32 3, %v2048
      %v2050 = vrot.slane %v615, %v2049
      %2052 = vbcast.lane.b32.xlu0 %v2050, 256
      %v2053 = vpop.permute.xlu0 %2052
      %s2055 = sor.u32 256, 8
      %2056 = vbcast.lane.b32.xlu0 %v2050, %s2055
      %v2057 = vpop.permute.xlu0 %2056
      %s2059 = sor.u32 256, 16
      %2060 = vbcast.lane.b32.xlu0 %v2050, %s2059
      %v2061 = vpop.permute.xlu0 %2060
      %s2063 = sor.u32 256, 24
      %2064 = vbcast.lane.b32.xlu0 %v2050, %s2063
      %v2065 = vpop.permute.xlu0 %2064
      %v2066 = vlaneseq
      %v2067 = vshrl.u32 %v2066, 7
      %v2068 = vsub.s32 4, %v2067
      %v2069 = vrot.slane %v615, %v2068
      %2071 = vbcast.lane.b32.xlu0 %v2069, 256
      %v2072 = vpop.permute.xlu0 %2071
      %s2074 = sor.u32 256, 8
      %2075 = vbcast.lane.b32.xlu0 %v2069, %s2074
      %v2076 = vpop.permute.xlu0 %2075
      %s2078 = sor.u32 256, 16
      %2079 = vbcast.lane.b32.xlu0 %v2069, %s2078
      %v2080 = vpop.permute.xlu0 %2079
      %s2082 = sor.u32 256, 24
      %2083 = vbcast.lane.b32.xlu0 %v2069, %s2082
      %v2084 = vpop.permute.xlu0 %2083
      %v2085 = vlaneseq
      %v2086 = vshrl.u32 %v2085, 7
      %v2087 = vsub.s32 5, %v2086
      %v2088 = vrot.slane %v615, %v2087
      %2090 = vbcast.lane.b32.xlu0 %v2088, 256
      %v2091 = vpop.permute.xlu0 %2090
      %s2093 = sor.u32 256, 8
      %2094 = vbcast.lane.b32.xlu0 %v2088, %s2093
      %v2095 = vpop.permute.xlu0 %2094
      %s2097 = sor.u32 256, 16
      %2098 = vbcast.lane.b32.xlu0 %v2088, %s2097
      %v2099 = vpop.permute.xlu0 %2098
      %s2101 = sor.u32 256, 24
      %2102 = vbcast.lane.b32.xlu0 %v2088, %s2101
      %v2103 = vpop.permute.xlu0 %2102
      %v2104 = vlaneseq
      %v2105 = vshrl.u32 %v2104, 7
      %v2106 = vsub.s32 6, %v2105
      %v2107 = vrot.slane %v615, %v2106
      %2109 = vbcast.lane.b32.xlu0 %v2107, 256
      %v2110 = vpop.permute.xlu0 %2109
      %s2112 = sor.u32 256, 8
      %2113 = vbcast.lane.b32.xlu0 %v2107, %s2112
      %v2114 = vpop.permute.xlu0 %2113
      %s2116 = sor.u32 256, 16
      %2117 = vbcast.lane.b32.xlu0 %v2107, %s2116
      %v2118 = vpop.permute.xlu0 %2117
      %s2120 = sor.u32 256, 24
      %2121 = vbcast.lane.b32.xlu0 %v2107, %s2120
      %v2122 = vpop.permute.xlu0 %2121
      %v2123 = vlaneseq
      %v2124 = vshrl.u32 %v2123, 7
      %v2125 = vsub.s32 7, %v2124
      %v2126 = vrot.slane %v615, %v2125
      %2128 = vbcast.lane.b32.xlu0 %v2126, 256
      %v2129 = vpop.permute.xlu0 %2128
      %s2131 = sor.u32 256, 8
      %2132 = vbcast.lane.b32.xlu0 %v2126, %s2131
      %v2133 = vpop.permute.xlu0 %2132
      %s2135 = sor.u32 256, 16
      %2136 = vbcast.lane.b32.xlu0 %v2126, %s2135
      %v2137 = vpop.permute.xlu0 %2136
      %s2139 = sor.u32 256, 24
      %2140 = vbcast.lane.b32.xlu0 %v2126, %s2139
      %v2141 = vpop.permute.xlu0 %2140
      %v2142 = vlaneseq
      %v2143 = vshrl.u32 %v2142, 7
      %v2144 = vsub.s32 0, %v2143
      %v2145 = vrot.slane %v616, %v2144
      %2147 = vbcast.lane.b32.xlu0 %v2145, 256
      %v2148 = vpop.permute.xlu0 %2147
      %s2150 = sor.u32 256, 8
      %2151 = vbcast.lane.b32.xlu0 %v2145, %s2150
      %v2152 = vpop.permute.xlu0 %2151
      %s2154 = sor.u32 256, 16
      %2155 = vbcast.lane.b32.xlu0 %v2145, %s2154
      %v2156 = vpop.permute.xlu0 %2155
      %s2158 = sor.u32 256, 24
      %2159 = vbcast.lane.b32.xlu0 %v2145, %s2158
      %v2160 = vpop.permute.xlu0 %2159
      %v2161 = vlaneseq
      %v2162 = vshrl.u32 %v2161, 7
      %v2163 = vsub.s32 1, %v2162
      %v2164 = vrot.slane %v616, %v2163
      %2166 = vbcast.lane.b32.xlu0 %v2164, 256
      %v2167 = vpop.permute.xlu0 %2166
      %s2169 = sor.u32 256, 8
      %2170 = vbcast.lane.b32.xlu0 %v2164, %s2169
      %v2171 = vpop.permute.xlu0 %2170
      %s2173 = sor.u32 256, 16
      %2174 = vbcast.lane.b32.xlu0 %v2164, %s2173
      %v2175 = vpop.permute.xlu0 %2174
      %s2177 = sor.u32 256, 24
      %2178 = vbcast.lane.b32.xlu0 %v2164, %s2177
      %v2179 = vpop.permute.xlu0 %2178
      %v2180 = vlaneseq
      %v2181 = vshrl.u32 %v2180, 7
      %v2182 = vsub.s32 2, %v2181
      %v2183 = vrot.slane %v616, %v2182
      %2185 = vbcast.lane.b32.xlu0 %v2183, 256
      %v2186 = vpop.permute.xlu0 %2185
      %s2188 = sor.u32 256, 8
      %2189 = vbcast.lane.b32.xlu0 %v2183, %s2188
      %v2190 = vpop.permute.xlu0 %2189
      %s2192 = sor.u32 256, 16
      %2193 = vbcast.lane.b32.xlu0 %v2183, %s2192
      %v2194 = vpop.permute.xlu0 %2193
      %s2196 = sor.u32 256, 24
      %2197 = vbcast.lane.b32.xlu0 %v2183, %s2196
      %v2198 = vpop.permute.xlu0 %2197
      %v2199 = vlaneseq
      %v2200 = vshrl.u32 %v2199, 7
      %v2201 = vsub.s32 3, %v2200
      %v2202 = vrot.slane %v616, %v2201
      %2204 = vbcast.lane.b32.xlu0 %v2202, 256
      %v2205 = vpop.permute.xlu0 %2204
      %s2207 = sor.u32 256, 8
      %2208 = vbcast.lane.b32.xlu0 %v2202, %s2207
      %v2209 = vpop.permute.xlu0 %2208
      %s2211 = sor.u32 256, 16
      %2212 = vbcast.lane.b32.xlu0 %v2202, %s2211
      %v2213 = vpop.permute.xlu0 %2212
      %s2215 = sor.u32 256, 24
      %2216 = vbcast.lane.b32.xlu0 %v2202, %s2215
      %v2217 = vpop.permute.xlu0 %2216
      %v2218 = vlaneseq
      %v2219 = vshrl.u32 %v2218, 7
      %v2220 = vsub.s32 4, %v2219
      %v2221 = vrot.slane %v616, %v2220
      %2223 = vbcast.lane.b32.xlu0 %v2221, 256
      %v2224 = vpop.permute.xlu0 %2223
      %s2226 = sor.u32 256, 8
      %2227 = vbcast.lane.b32.xlu0 %v2221, %s2226
      %v2228 = vpop.permute.xlu0 %2227
      %s2230 = sor.u32 256, 16
      %2231 = vbcast.lane.b32.xlu0 %v2221, %s2230
      %v2232 = vpop.permute.xlu0 %2231
      %s2234 = sor.u32 256, 24
      %2235 = vbcast.lane.b32.xlu0 %v2221, %s2234
      %v2236 = vpop.permute.xlu0 %2235
      %v2237 = vlaneseq
      %v2238 = vshrl.u32 %v2237, 7
      %v2239 = vsub.s32 5, %v2238
      %v2240 = vrot.slane %v616, %v2239
      %2242 = vbcast.lane.b32.xlu0 %v2240, 256
      %v2243 = vpop.permute.xlu0 %2242
      %s2245 = sor.u32 256, 8
      %2246 = vbcast.lane.b32.xlu0 %v2240, %s2245
      %v2247 = vpop.permute.xlu0 %2246
      %s2249 = sor.u32 256, 16
      %2250 = vbcast.lane.b32.xlu0 %v2240, %s2249
      %v2251 = vpop.permute.xlu0 %2250
      %s2253 = sor.u32 256, 24
      %2254 = vbcast.lane.b32.xlu0 %v2240, %s2253
      %v2255 = vpop.permute.xlu0 %2254
      %v2256 = vlaneseq
      %v2257 = vshrl.u32 %v2256, 7
      %v2258 = vsub.s32 6, %v2257
      %v2259 = vrot.slane %v616, %v2258
      %2261 = vbcast.lane.b32.xlu0 %v2259, 256
      %v2262 = vpop.permute.xlu0 %2261
      %s2264 = sor.u32 256, 8
      %2265 = vbcast.lane.b32.xlu0 %v2259, %s2264
      %v2266 = vpop.permute.xlu0 %2265
      %s2268 = sor.u32 256, 16
      %2269 = vbcast.lane.b32.xlu0 %v2259, %s2268
      %v2270 = vpop.permute.xlu0 %2269
      %s2272 = sor.u32 256, 24
      %2273 = vbcast.lane.b32.xlu0 %v2259, %s2272
      %v2274 = vpop.permute.xlu0 %2273
      %v2275 = vlaneseq
      %v2276 = vshrl.u32 %v2275, 7
      %v2277 = vsub.s32 7, %v2276
      %v2278 = vrot.slane %v616, %v2277
      %2280 = vbcast.lane.b32.xlu0 %v2278, 256
      %v2281 = vpop.permute.xlu0 %2280
      %s2283 = sor.u32 256, 8
      %2284 = vbcast.lane.b32.xlu0 %v2278, %s2283
      %v2285 = vpop.permute.xlu0 %2284
      %s2287 = sor.u32 256, 16
      %2288 = vbcast.lane.b32.xlu0 %v2278, %s2287
      %v2289 = vpop.permute.xlu0 %2288
      %s2291 = sor.u32 256, 24
      %2292 = vbcast.lane.b32.xlu0 %v2278, %s2291
      %v2293 = vpop.permute.xlu0 %2292
      %v2294 = vlaneseq
      %v2295 = vshrl.u32 %v2294, 7
      %v2296 = vsub.s32 0, %v2295
      %v2297 = vrot.slane %v617, %v2296
      %2299 = vbcast.lane.b32.xlu0 %v2297, 256
      %v2300 = vpop.permute.xlu0 %2299
      %s2302 = sor.u32 256, 8
      %2303 = vbcast.lane.b32.xlu0 %v2297, %s2302
      %v2304 = vpop.permute.xlu0 %2303
      %s2306 = sor.u32 256, 16
      %2307 = vbcast.lane.b32.xlu0 %v2297, %s2306
      %v2308 = vpop.permute.xlu0 %2307
      %s2310 = sor.u32 256, 24
      %2311 = vbcast.lane.b32.xlu0 %v2297, %s2310
      %v2312 = vpop.permute.xlu0 %2311
      %v2313 = vlaneseq
      %v2314 = vshrl.u32 %v2313, 7
      %v2315 = vsub.s32 1, %v2314
      %v2316 = vrot.slane %v617, %v2315
      %2318 = vbcast.lane.b32.xlu0 %v2316, 256
      %v2319 = vpop.permute.xlu0 %2318
      %s2321 = sor.u32 256, 8
      %2322 = vbcast.lane.b32.xlu0 %v2316, %s2321
      %v2323 = vpop.permute.xlu0 %2322
      %s2325 = sor.u32 256, 16
      %2326 = vbcast.lane.b32.xlu0 %v2316, %s2325
      %v2327 = vpop.permute.xlu0 %2326
      %s2329 = sor.u32 256, 24
      %2330 = vbcast.lane.b32.xlu0 %v2316, %s2329
      %v2331 = vpop.permute.xlu0 %2330
      %v2332 = vlaneseq
      %v2333 = vshrl.u32 %v2332, 7
      %v2334 = vsub.s32 2, %v2333
      %v2335 = vrot.slane %v617, %v2334
      %2337 = vbcast.lane.b32.xlu0 %v2335, 256
      %v2338 = vpop.permute.xlu0 %2337
      %s2340 = sor.u32 256, 8
      %2341 = vbcast.lane.b32.xlu0 %v2335, %s2340
      %v2342 = vpop.permute.xlu0 %2341
      %s2344 = sor.u32 256, 16
      %2345 = vbcast.lane.b32.xlu0 %v2335, %s2344
      %v2346 = vpop.permute.xlu0 %2345
      %s2348 = sor.u32 256, 24
      %2349 = vbcast.lane.b32.xlu0 %v2335, %s2348
      %v2350 = vpop.permute.xlu0 %2349
      %v2351 = vlaneseq
      %v2352 = vshrl.u32 %v2351, 7
      %v2353 = vsub.s32 3, %v2352
      %v2354 = vrot.slane %v617, %v2353
      %2356 = vbcast.lane.b32.xlu0 %v2354, 256
      %v2357 = vpop.permute.xlu0 %2356
      %s2359 = sor.u32 256, 8
      %2360 = vbcast.lane.b32.xlu0 %v2354, %s2359
      %v2361 = vpop.permute.xlu0 %2360
      %s2363 = sor.u32 256, 16
      %2364 = vbcast.lane.b32.xlu0 %v2354, %s2363
      %v2365 = vpop.permute.xlu0 %2364
      %s2367 = sor.u32 256, 24
      %2368 = vbcast.lane.b32.xlu0 %v2354, %s2367
      %v2369 = vpop.permute.xlu0 %2368
      %v2370 = vlaneseq
      %v2371 = vshrl.u32 %v2370, 7
      %v2372 = vsub.s32 4, %v2371
      %v2373 = vrot.slane %v617, %v2372
      %2375 = vbcast.lane.b32.xlu0 %v2373, 256
      %v2376 = vpop.permute.xlu0 %2375
      %s2378 = sor.u32 256, 8
      %2379 = vbcast.lane.b32.xlu0 %v2373, %s2378
      %v2380 = vpop.permute.xlu0 %2379
      %s2382 = sor.u32 256, 16
      %2383 = vbcast.lane.b32.xlu0 %v2373, %s2382
      %v2384 = vpop.permute.xlu0 %2383
      %s2386 = sor.u32 256, 24
      %2387 = vbcast.lane.b32.xlu0 %v2373, %s2386
      %v2388 = vpop.permute.xlu0 %2387
      %v2389 = vlaneseq
      %v2390 = vshrl.u32 %v2389, 7
      %v2391 = vsub.s32 5, %v2390
      %v2392 = vrot.slane %v617, %v2391
      %2394 = vbcast.lane.b32.xlu0 %v2392, 256
      %v2395 = vpop.permute.xlu0 %2394
      %s2397 = sor.u32 256, 8
      %2398 = vbcast.lane.b32.xlu0 %v2392, %s2397
      %v2399 = vpop.permute.xlu0 %2398
      %s2401 = sor.u32 256, 16
      %2402 = vbcast.lane.b32.xlu0 %v2392, %s2401
      %v2403 = vpop.permute.xlu0 %2402
      %s2405 = sor.u32 256, 24
      %2406 = vbcast.lane.b32.xlu0 %v2392, %s2405
      %v2407 = vpop.permute.xlu0 %2406
      %v2408 = vlaneseq
      %v2409 = vshrl.u32 %v2408, 7
      %v2410 = vsub.s32 6, %v2409
      %v2411 = vrot.slane %v617, %v2410
      %2413 = vbcast.lane.b32.xlu0 %v2411, 256
      %v2414 = vpop.permute.xlu0 %2413
      %s2416 = sor.u32 256, 8
      %2417 = vbcast.lane.b32.xlu0 %v2411, %s2416
      %v2418 = vpop.permute.xlu0 %2417
      %s2420 = sor.u32 256, 16
      %2421 = vbcast.lane.b32.xlu0 %v2411, %s2420
      %v2422 = vpop.permute.xlu0 %2421
      %s2424 = sor.u32 256, 24
      %2425 = vbcast.lane.b32.xlu0 %v2411, %s2424
      %v2426 = vpop.permute.xlu0 %2425
      %v2427 = vlaneseq
      %v2428 = vshrl.u32 %v2427, 7
      %v2429 = vsub.s32 7, %v2428
      %v2430 = vrot.slane %v617, %v2429
      %2432 = vbcast.lane.b32.xlu0 %v2430, 256
      %v2433 = vpop.permute.xlu0 %2432
      %s2435 = sor.u32 256, 8
      %2436 = vbcast.lane.b32.xlu0 %v2430, %s2435
      %v2437 = vpop.permute.xlu0 %2436
      %s2439 = sor.u32 256, 16
      %2440 = vbcast.lane.b32.xlu0 %v2430, %s2439
      %v2441 = vpop.permute.xlu0 %2440
      %s2443 = sor.u32 256, 24
      %2444 = vbcast.lane.b32.xlu0 %v2430, %s2443
      %v2445 = vpop.permute.xlu0 %2444
      %v2446 = vlaneseq
      %v2447 = vshrl.u32 %v2446, 7
      %v2448 = vsub.s32 0, %v2447
      %v2449 = vrot.slane %v618, %v2448
      %2451 = vbcast.lane.b32.xlu0 %v2449, 256
      %v2452 = vpop.permute.xlu0 %2451
      %s2454 = sor.u32 256, 8
      %2455 = vbcast.lane.b32.xlu0 %v2449, %s2454
      %v2456 = vpop.permute.xlu0 %2455
      %s2458 = sor.u32 256, 16
      %2459 = vbcast.lane.b32.xlu0 %v2449, %s2458
      %v2460 = vpop.permute.xlu0 %2459
      %s2462 = sor.u32 256, 24
      %2463 = vbcast.lane.b32.xlu0 %v2449, %s2462
      %v2464 = vpop.permute.xlu0 %2463
      %v2465 = vlaneseq
      %v2466 = vshrl.u32 %v2465, 7
      %v2467 = vsub.s32 1, %v2466
      %v2468 = vrot.slane %v618, %v2467
      %2470 = vbcast.lane.b32.xlu0 %v2468, 256
      %v2471 = vpop.permute.xlu0 %2470
      %s2473 = sor.u32 256, 8
      %2474 = vbcast.lane.b32.xlu0 %v2468, %s2473
      %v2475 = vpop.permute.xlu0 %2474
      %s2477 = sor.u32 256, 16
      %2478 = vbcast.lane.b32.xlu0 %v2468, %s2477
      %v2479 = vpop.permute.xlu0 %2478
      %s2481 = sor.u32 256, 24
      %2482 = vbcast.lane.b32.xlu0 %v2468, %s2481
      %v2483 = vpop.permute.xlu0 %2482
      %v2484 = vlaneseq
      %v2485 = vshrl.u32 %v2484, 7
      %v2486 = vsub.s32 2, %v2485
      %v2487 = vrot.slane %v618, %v2486
      %2489 = vbcast.lane.b32.xlu0 %v2487, 256
      %v2490 = vpop.permute.xlu0 %2489
      %s2492 = sor.u32 256, 8
      %2493 = vbcast.lane.b32.xlu0 %v2487, %s2492
      %v2494 = vpop.permute.xlu0 %2493
      %s2496 = sor.u32 256, 16
      %2497 = vbcast.lane.b32.xlu0 %v2487, %s2496
      %v2498 = vpop.permute.xlu0 %2497
      %s2500 = sor.u32 256, 24
      %2501 = vbcast.lane.b32.xlu0 %v2487, %s2500
      %v2502 = vpop.permute.xlu0 %2501
      %v2503 = vlaneseq
      %v2504 = vshrl.u32 %v2503, 7
      %v2505 = vsub.s32 3, %v2504
      %v2506 = vrot.slane %v618, %v2505
      %2508 = vbcast.lane.b32.xlu0 %v2506, 256
      %v2509 = vpop.permute.xlu0 %2508
      %s2511 = sor.u32 256, 8
      %2512 = vbcast.lane.b32.xlu0 %v2506, %s2511
      %v2513 = vpop.permute.xlu0 %2512
      %s2515 = sor.u32 256, 16
      %2516 = vbcast.lane.b32.xlu0 %v2506, %s2515
      %v2517 = vpop.permute.xlu0 %2516
      %s2519 = sor.u32 256, 24
      %2520 = vbcast.lane.b32.xlu0 %v2506, %s2519
      %v2521 = vpop.permute.xlu0 %2520
      %v2522 = vlaneseq
      %v2523 = vshrl.u32 %v2522, 7
      %v2524 = vsub.s32 4, %v2523
      %v2525 = vrot.slane %v618, %v2524
      %2527 = vbcast.lane.b32.xlu0 %v2525, 256
      %v2528 = vpop.permute.xlu0 %2527
      %s2530 = sor.u32 256, 8
      %2531 = vbcast.lane.b32.xlu0 %v2525, %s2530
      %v2532 = vpop.permute.xlu0 %2531
      %s2534 = sor.u32 256, 16
      %2535 = vbcast.lane.b32.xlu0 %v2525, %s2534
      %v2536 = vpop.permute.xlu0 %2535
      %s2538 = sor.u32 256, 24
      %2539 = vbcast.lane.b32.xlu0 %v2525, %s2538
      %v2540 = vpop.permute.xlu0 %2539
      %v2541 = vlaneseq
      %v2542 = vshrl.u32 %v2541, 7
      %v2543 = vsub.s32 5, %v2542
      %v2544 = vrot.slane %v618, %v2543
      %2546 = vbcast.lane.b32.xlu0 %v2544, 256
      %v2547 = vpop.permute.xlu0 %2546
      %s2549 = sor.u32 256, 8
      %2550 = vbcast.lane.b32.xlu0 %v2544, %s2549
      %v2551 = vpop.permute.xlu0 %2550
      %s2553 = sor.u32 256, 16
      %2554 = vbcast.lane.b32.xlu0 %v2544, %s2553
      %v2555 = vpop.permute.xlu0 %2554
      %s2557 = sor.u32 256, 24
      %2558 = vbcast.lane.b32.xlu0 %v2544, %s2557
      %v2559 = vpop.permute.xlu0 %2558
      %v2560 = vlaneseq
      %v2561 = vshrl.u32 %v2560, 7
      %v2562 = vsub.s32 6, %v2561
      %v2563 = vrot.slane %v618, %v2562
      %2565 = vbcast.lane.b32.xlu0 %v2563, 256
      %v2566 = vpop.permute.xlu0 %2565
      %s2568 = sor.u32 256, 8
      %2569 = vbcast.lane.b32.xlu0 %v2563, %s2568
      %v2570 = vpop.permute.xlu0 %2569
      %s2572 = sor.u32 256, 16
      %2573 = vbcast.lane.b32.xlu0 %v2563, %s2572
      %v2574 = vpop.permute.xlu0 %2573
      %s2576 = sor.u32 256, 24
      %2577 = vbcast.lane.b32.xlu0 %v2563, %s2576
      %v2578 = vpop.permute.xlu0 %2577
      %v2579 = vlaneseq
      %v2580 = vshrl.u32 %v2579, 7
      %v2581 = vsub.s32 7, %v2580
      %v2582 = vrot.slane %v618, %v2581
      %2584 = vbcast.lane.b32.xlu0 %v2582, 256
      %v2585 = vpop.permute.xlu0 %2584
      %s2587 = sor.u32 256, 8
      %2588 = vbcast.lane.b32.xlu0 %v2582, %s2587
      %v2589 = vpop.permute.xlu0 %2588
      %s2591 = sor.u32 256, 16
      %2592 = vbcast.lane.b32.xlu0 %v2582, %s2591
      %v2593 = vpop.permute.xlu0 %2592
      %s2595 = sor.u32 256, 24
      %2596 = vbcast.lane.b32.xlu0 %v2582, %s2595
      %v2597 = vpop.permute.xlu0 %2596
      %v2598 = vlaneseq
      %v2599 = vshrl.u32 %v2598, 7
      %v2600 = vsub.s32 0, %v2599
      %v2601 = vrot.slane %v619, %v2600
      %2603 = vbcast.lane.b32.xlu0 %v2601, 256
      %v2604 = vpop.permute.xlu0 %2603
      %s2606 = sor.u32 256, 8
      %2607 = vbcast.lane.b32.xlu0 %v2601, %s2606
      %v2608 = vpop.permute.xlu0 %2607
      %s2610 = sor.u32 256, 16
      %2611 = vbcast.lane.b32.xlu0 %v2601, %s2610
      %v2612 = vpop.permute.xlu0 %2611
      %s2614 = sor.u32 256, 24
      %2615 = vbcast.lane.b32.xlu0 %v2601, %s2614
      %v2616 = vpop.permute.xlu0 %2615
      %v2617 = vlaneseq
      %v2618 = vshrl.u32 %v2617, 7
      %v2619 = vsub.s32 1, %v2618
      %v2620 = vrot.slane %v619, %v2619
      %2622 = vbcast.lane.b32.xlu0 %v2620, 256
      %v2623 = vpop.permute.xlu0 %2622
      %s2625 = sor.u32 256, 8
      %2626 = vbcast.lane.b32.xlu0 %v2620, %s2625
      %v2627 = vpop.permute.xlu0 %2626
      %s2629 = sor.u32 256, 16
      %2630 = vbcast.lane.b32.xlu0 %v2620, %s2629
      %v2631 = vpop.permute.xlu0 %2630
      %s2633 = sor.u32 256, 24
      %2634 = vbcast.lane.b32.xlu0 %v2620, %s2633
      %v2635 = vpop.permute.xlu0 %2634
      %v2636 = vlaneseq
      %v2637 = vshrl.u32 %v2636, 7
      %v2638 = vsub.s32 2, %v2637
      %v2639 = vrot.slane %v619, %v2638
      %2641 = vbcast.lane.b32.xlu0 %v2639, 256
      %v2642 = vpop.permute.xlu0 %2641
      %s2644 = sor.u32 256, 8
      %2645 = vbcast.lane.b32.xlu0 %v2639, %s2644
      %v2646 = vpop.permute.xlu0 %2645
      %s2648 = sor.u32 256, 16
      %2649 = vbcast.lane.b32.xlu0 %v2639, %s2648
      %v2650 = vpop.permute.xlu0 %2649
      %s2652 = sor.u32 256, 24
      %2653 = vbcast.lane.b32.xlu0 %v2639, %s2652
      %v2654 = vpop.permute.xlu0 %2653
      %v2655 = vlaneseq
      %v2656 = vshrl.u32 %v2655, 7
      %v2657 = vsub.s32 3, %v2656
      %v2658 = vrot.slane %v619, %v2657
      %2660 = vbcast.lane.b32.xlu0 %v2658, 256
      %v2661 = vpop.permute.xlu0 %2660
      %s2663 = sor.u32 256, 8
      %2664 = vbcast.lane.b32.xlu0 %v2658, %s2663
      %v2665 = vpop.permute.xlu0 %2664
      %s2667 = sor.u32 256, 16
      %2668 = vbcast.lane.b32.xlu0 %v2658, %s2667
      %v2669 = vpop.permute.xlu0 %2668
      %s2671 = sor.u32 256, 24
      %2672 = vbcast.lane.b32.xlu0 %v2658, %s2671
      %v2673 = vpop.permute.xlu0 %2672
      %v2674 = vlaneseq
      %v2675 = vshrl.u32 %v2674, 7
      %v2676 = vsub.s32 4, %v2675
      %v2677 = vrot.slane %v619, %v2676
      %2679 = vbcast.lane.b32.xlu0 %v2677, 256
      %v2680 = vpop.permute.xlu0 %2679
      %s2682 = sor.u32 256, 8
      %2683 = vbcast.lane.b32.xlu0 %v2677, %s2682
      %v2684 = vpop.permute.xlu0 %2683
      %s2686 = sor.u32 256, 16
      %2687 = vbcast.lane.b32.xlu0 %v2677, %s2686
      %v2688 = vpop.permute.xlu0 %2687
      %s2690 = sor.u32 256, 24
      %2691 = vbcast.lane.b32.xlu0 %v2677, %s2690
      %v2692 = vpop.permute.xlu0 %2691
      %v2693 = vlaneseq
      %v2694 = vshrl.u32 %v2693, 7
      %v2695 = vsub.s32 5, %v2694
      %v2696 = vrot.slane %v619, %v2695
      %2698 = vbcast.lane.b32.xlu0 %v2696, 256
      %v2699 = vpop.permute.xlu0 %2698
      %s2701 = sor.u32 256, 8
      %2702 = vbcast.lane.b32.xlu0 %v2696, %s2701
      %v2703 = vpop.permute.xlu0 %2702
      %s2705 = sor.u32 256, 16
      %2706 = vbcast.lane.b32.xlu0 %v2696, %s2705
      %v2707 = vpop.permute.xlu0 %2706
      %s2709 = sor.u32 256, 24
      %2710 = vbcast.lane.b32.xlu0 %v2696, %s2709
      %v2711 = vpop.permute.xlu0 %2710
      %v2712 = vlaneseq
      %v2713 = vshrl.u32 %v2712, 7
      %v2714 = vsub.s32 6, %v2713
      %v2715 = vrot.slane %v619, %v2714
      %2717 = vbcast.lane.b32.xlu0 %v2715, 256
      %v2718 = vpop.permute.xlu0 %2717
      %s2720 = sor.u32 256, 8
      %2721 = vbcast.lane.b32.xlu0 %v2715, %s2720
      %v2722 = vpop.permute.xlu0 %2721
      %s2724 = sor.u32 256, 16
      %2725 = vbcast.lane.b32.xlu0 %v2715, %s2724
      %v2726 = vpop.permute.xlu0 %2725
      %s2728 = sor.u32 256, 24
      %2729 = vbcast.lane.b32.xlu0 %v2715, %s2728
      %v2730 = vpop.permute.xlu0 %2729
      %v2731 = vlaneseq
      %v2732 = vshrl.u32 %v2731, 7
      %v2733 = vsub.s32 7, %v2732
      %v2734 = vrot.slane %v619, %v2733
      %2736 = vbcast.lane.b32.xlu0 %v2734, 256
      %v2737 = vpop.permute.xlu0 %2736
      %s2739 = sor.u32 256, 8
      %2740 = vbcast.lane.b32.xlu0 %v2734, %s2739
      %v2741 = vpop.permute.xlu0 %2740
      %s2743 = sor.u32 256, 16
      %2744 = vbcast.lane.b32.xlu0 %v2734, %s2743
      %v2745 = vpop.permute.xlu0 %2744
      %s2747 = sor.u32 256, 24
      %2748 = vbcast.lane.b32.xlu0 %v2734, %s2747
      %v2749 = vpop.permute.xlu0 %2748
      %v2750 = vlaneseq
      %v2751 = vshrl.u32 %v2750, 7
      %v2752 = vsub.s32 0, %v2751
      %v2753 = vrot.slane %v620, %v2752
      %2755 = vbcast.lane.b32.xlu0 %v2753, 256
      %v2756 = vpop.permute.xlu0 %2755
      %s2758 = sor.u32 256, 8
      %2759 = vbcast.lane.b32.xlu0 %v2753, %s2758
      %v2760 = vpop.permute.xlu0 %2759
      %s2762 = sor.u32 256, 16
      %2763 = vbcast.lane.b32.xlu0 %v2753, %s2762
      %v2764 = vpop.permute.xlu0 %2763
      %s2766 = sor.u32 256, 24
      %2767 = vbcast.lane.b32.xlu0 %v2753, %s2766
      %v2768 = vpop.permute.xlu0 %2767
      %v2769 = vlaneseq
      %v2770 = vshrl.u32 %v2769, 7
      %v2771 = vsub.s32 1, %v2770
      %v2772 = vrot.slane %v620, %v2771
      %2774 = vbcast.lane.b32.xlu0 %v2772, 256
      %v2775 = vpop.permute.xlu0 %2774
      %s2777 = sor.u32 256, 8
      %2778 = vbcast.lane.b32.xlu0 %v2772, %s2777
      %v2779 = vpop.permute.xlu0 %2778
      %s2781 = sor.u32 256, 16
      %2782 = vbcast.lane.b32.xlu0 %v2772, %s2781
      %v2783 = vpop.permute.xlu0 %2782
      %s2785 = sor.u32 256, 24
      %2786 = vbcast.lane.b32.xlu0 %v2772, %s2785
      %v2787 = vpop.permute.xlu0 %2786
      %v2788 = vlaneseq
      %v2789 = vshrl.u32 %v2788, 7
      %v2790 = vsub.s32 2, %v2789
      %v2791 = vrot.slane %v620, %v2790
      %2793 = vbcast.lane.b32.xlu0 %v2791, 256
      %v2794 = vpop.permute.xlu0 %2793
      %s2796 = sor.u32 256, 8
      %2797 = vbcast.lane.b32.xlu0 %v2791, %s2796
      %v2798 = vpop.permute.xlu0 %2797
      %s2800 = sor.u32 256, 16
      %2801 = vbcast.lane.b32.xlu0 %v2791, %s2800
      %v2802 = vpop.permute.xlu0 %2801
      %s2804 = sor.u32 256, 24
      %2805 = vbcast.lane.b32.xlu0 %v2791, %s2804
      %v2806 = vpop.permute.xlu0 %2805
      %v2807 = vlaneseq
      %v2808 = vshrl.u32 %v2807, 7
      %v2809 = vsub.s32 3, %v2808
      %v2810 = vrot.slane %v620, %v2809
      %2812 = vbcast.lane.b32.xlu0 %v2810, 256
      %v2813 = vpop.permute.xlu0 %2812
      %s2815 = sor.u32 256, 8
      %2816 = vbcast.lane.b32.xlu0 %v2810, %s2815
      %v2817 = vpop.permute.xlu0 %2816
      %s2819 = sor.u32 256, 16
      %2820 = vbcast.lane.b32.xlu0 %v2810, %s2819
      %v2821 = vpop.permute.xlu0 %2820
      %s2823 = sor.u32 256, 24
      %2824 = vbcast.lane.b32.xlu0 %v2810, %s2823
      %v2825 = vpop.permute.xlu0 %2824
      %v2826 = vlaneseq
      %v2827 = vshrl.u32 %v2826, 7
      %v2828 = vsub.s32 4, %v2827
      %v2829 = vrot.slane %v620, %v2828
      %2831 = vbcast.lane.b32.xlu0 %v2829, 256
      %v2832 = vpop.permute.xlu0 %2831
      %s2834 = sor.u32 256, 8
      %2835 = vbcast.lane.b32.xlu0 %v2829, %s2834
      %v2836 = vpop.permute.xlu0 %2835
      %s2838 = sor.u32 256, 16
      %2839 = vbcast.lane.b32.xlu0 %v2829, %s2838
      %v2840 = vpop.permute.xlu0 %2839
      %s2842 = sor.u32 256, 24
      %2843 = vbcast.lane.b32.xlu0 %v2829, %s2842
      %v2844 = vpop.permute.xlu0 %2843
      %v2845 = vlaneseq
      %v2846 = vshrl.u32 %v2845, 7
      %v2847 = vsub.s32 5, %v2846
      %v2848 = vrot.slane %v620, %v2847
      %2850 = vbcast.lane.b32.xlu0 %v2848, 256
      %v2851 = vpop.permute.xlu0 %2850
      %s2853 = sor.u32 256, 8
      %2854 = vbcast.lane.b32.xlu0 %v2848, %s2853
      %v2855 = vpop.permute.xlu0 %2854
      %s2857 = sor.u32 256, 16
      %2858 = vbcast.lane.b32.xlu0 %v2848, %s2857
      %v2859 = vpop.permute.xlu0 %2858
      %s2861 = sor.u32 256, 24
      %2862 = vbcast.lane.b32.xlu0 %v2848, %s2861
      %v2863 = vpop.permute.xlu0 %2862
      %v2864 = vlaneseq
      %v2865 = vshrl.u32 %v2864, 7
      %v2866 = vsub.s32 6, %v2865
      %v2867 = vrot.slane %v620, %v2866
      %2869 = vbcast.lane.b32.xlu0 %v2867, 256
      %v2870 = vpop.permute.xlu0 %2869
      %s2872 = sor.u32 256, 8
      %2873 = vbcast.lane.b32.xlu0 %v2867, %s2872
      %v2874 = vpop.permute.xlu0 %2873
      %s2876 = sor.u32 256, 16
      %2877 = vbcast.lane.b32.xlu0 %v2867, %s2876
      %v2878 = vpop.permute.xlu0 %2877
      %s2880 = sor.u32 256, 24
      %2881 = vbcast.lane.b32.xlu0 %v2867, %s2880
      %v2882 = vpop.permute.xlu0 %2881
      %v2883 = vlaneseq
      %v2884 = vshrl.u32 %v2883, 7
      %v2885 = vsub.s32 7, %v2884
      %v2886 = vrot.slane %v620, %v2885
      %2888 = vbcast.lane.b32.xlu0 %v2886, 256
      %v2889 = vpop.permute.xlu0 %2888
      %s2891 = sor.u32 256, 8
      %2892 = vbcast.lane.b32.xlu0 %v2886, %s2891
      %v2893 = vpop.permute.xlu0 %2892
      %s2895 = sor.u32 256, 16
      %2896 = vbcast.lane.b32.xlu0 %v2886, %s2895
      %v2897 = vpop.permute.xlu0 %2896
      %s2899 = sor.u32 256, 24
      %2900 = vbcast.lane.b32.xlu0 %v2886, %s2899
      %v2901 = vpop.permute.xlu0 %2900
      %v2902 = vlaneseq
      %v2903 = vshrl.u32 %v2902, 7
      %v2904 = vsub.s32 0, %v2903
      %v2905 = vrot.slane %v621, %v2904
      %2907 = vbcast.lane.b32.xlu0 %v2905, 256
      %v2908 = vpop.permute.xlu0 %2907
      %s2910 = sor.u32 256, 8
      %2911 = vbcast.lane.b32.xlu0 %v2905, %s2910
      %v2912 = vpop.permute.xlu0 %2911
      %s2914 = sor.u32 256, 16
      %2915 = vbcast.lane.b32.xlu0 %v2905, %s2914
      %v2916 = vpop.permute.xlu0 %2915
      %s2918 = sor.u32 256, 24
      %2919 = vbcast.lane.b32.xlu0 %v2905, %s2918
      %v2920 = vpop.permute.xlu0 %2919
      %v2921 = vlaneseq
      %v2922 = vshrl.u32 %v2921, 7
      %v2923 = vsub.s32 1, %v2922
      %v2924 = vrot.slane %v621, %v2923
      %2926 = vbcast.lane.b32.xlu0 %v2924, 256
      %v2927 = vpop.permute.xlu0 %2926
      %s2929 = sor.u32 256, 8
      %2930 = vbcast.lane.b32.xlu0 %v2924, %s2929
      %v2931 = vpop.permute.xlu0 %2930
      %s2933 = sor.u32 256, 16
      %2934 = vbcast.lane.b32.xlu0 %v2924, %s2933
      %v2935 = vpop.permute.xlu0 %2934
      %s2937 = sor.u32 256, 24
      %2938 = vbcast.lane.b32.xlu0 %v2924, %s2937
      %v2939 = vpop.permute.xlu0 %2938
      %v2940 = vlaneseq
      %v2941 = vshrl.u32 %v2940, 7
      %v2942 = vsub.s32 2, %v2941
      %v2943 = vrot.slane %v621, %v2942
      %2945 = vbcast.lane.b32.xlu0 %v2943, 256
      %v2946 = vpop.permute.xlu0 %2945
      %s2948 = sor.u32 256, 8
      %2949 = vbcast.lane.b32.xlu0 %v2943, %s2948
      %v2950 = vpop.permute.xlu0 %2949
      %s2952 = sor.u32 256, 16
      %2953 = vbcast.lane.b32.xlu0 %v2943, %s2952
      %v2954 = vpop.permute.xlu0 %2953
      %s2956 = sor.u32 256, 24
      %2957 = vbcast.lane.b32.xlu0 %v2943, %s2956
      %v2958 = vpop.permute.xlu0 %2957
      %v2959 = vlaneseq
      %v2960 = vshrl.u32 %v2959, 7
      %v2961 = vsub.s32 3, %v2960
      %v2962 = vrot.slane %v621, %v2961
      %2964 = vbcast.lane.b32.xlu0 %v2962, 256
      %v2965 = vpop.permute.xlu0 %2964
      %s2967 = sor.u32 256, 8
      %2968 = vbcast.lane.b32.xlu0 %v2962, %s2967
      %v2969 = vpop.permute.xlu0 %2968
      %s2971 = sor.u32 256, 16
      %2972 = vbcast.lane.b32.xlu0 %v2962, %s2971
      %v2973 = vpop.permute.xlu0 %2972
      %s2975 = sor.u32 256, 24
      %2976 = vbcast.lane.b32.xlu0 %v2962, %s2975
      %v2977 = vpop.permute.xlu0 %2976
      %v2978 = vlaneseq
      %v2979 = vshrl.u32 %v2978, 7
      %v2980 = vsub.s32 4, %v2979
      %v2981 = vrot.slane %v621, %v2980
      %2983 = vbcast.lane.b32.xlu0 %v2981, 256
      %v2984 = vpop.permute.xlu0 %2983
      %s2986 = sor.u32 256, 8
      %2987 = vbcast.lane.b32.xlu0 %v2981, %s2986
      %v2988 = vpop.permute.xlu0 %2987
      %s2990 = sor.u32 256, 16
      %2991 = vbcast.lane.b32.xlu0 %v2981, %s2990
      %v2992 = vpop.permute.xlu0 %2991
      %s2994 = sor.u32 256, 24
      %2995 = vbcast.lane.b32.xlu0 %v2981, %s2994
      %v2996 = vpop.permute.xlu0 %2995
      %v2997 = vlaneseq
      %v2998 = vshrl.u32 %v2997, 7
      %v2999 = vsub.s32 5, %v2998
      %v3000 = vrot.slane %v621, %v2999
      %3002 = vbcast.lane.b32.xlu0 %v3000, 256
      %v3003 = vpop.permute.xlu0 %3002
      %s3005 = sor.u32 256, 8
      %3006 = vbcast.lane.b32.xlu0 %v3000, %s3005
      %v3007 = vpop.permute.xlu0 %3006
      %s3009 = sor.u32 256, 16
      %3010 = vbcast.lane.b32.xlu0 %v3000, %s3009
      %v3011 = vpop.permute.xlu0 %3010
      %s3013 = sor.u32 256, 24
      %3014 = vbcast.lane.b32.xlu0 %v3000, %s3013
      %v3015 = vpop.permute.xlu0 %3014
      %v3016 = vlaneseq
      %v3017 = vshrl.u32 %v3016, 7
      %v3018 = vsub.s32 6, %v3017
      %v3019 = vrot.slane %v621, %v3018
      %3021 = vbcast.lane.b32.xlu0 %v3019, 256
      %v3022 = vpop.permute.xlu0 %3021
      %s3024 = sor.u32 256, 8
      %3025 = vbcast.lane.b32.xlu0 %v3019, %s3024
      %v3026 = vpop.permute.xlu0 %3025
      %s3028 = sor.u32 256, 16
      %3029 = vbcast.lane.b32.xlu0 %v3019, %s3028
      %v3030 = vpop.permute.xlu0 %3029
      %s3032 = sor.u32 256, 24
      %3033 = vbcast.lane.b32.xlu0 %v3019, %s3032
      %v3034 = vpop.permute.xlu0 %3033
      %v3035 = vlaneseq
      %v3036 = vshrl.u32 %v3035, 7
      %v3037 = vsub.s32 7, %v3036
      %v3038 = vrot.slane %v621, %v3037
      %3040 = vbcast.lane.b32.xlu0 %v3038, 256
      %v3041 = vpop.permute.xlu0 %3040
      %s3043 = sor.u32 256, 8
      %3044 = vbcast.lane.b32.xlu0 %v3038, %s3043
      %v3045 = vpop.permute.xlu0 %3044
      %s3047 = sor.u32 256, 16
      %3048 = vbcast.lane.b32.xlu0 %v3038, %s3047
      %v3049 = vpop.permute.xlu0 %3048
      %s3051 = sor.u32 256, 24
      %3052 = vbcast.lane.b32.xlu0 %v3038, %s3051
      %v3053 = vpop.permute.xlu0 %3052
      %v3070 = vcombine.high %v476, %v476
      %v3072 = vunpack.c.l.s4 1966171168
      %v3073 = vunpack.c.0.s8 %v3072
      %v3074 = vlaneseq
      %v3075 = vshrl.u32 %v3074, 7
      %v3076 = vsub.s32 %v3073, %v3075
      %v3077 = vrot.slane %v476, %v3076
      %v3079 = vunpack.c.l.s4 1966171168
      %v3080 = vunpack.c.0.s8 %v3079
      %v3081 = vlaneseq
      %v3082 = vshrl.u32 %v3081, 7
      %v3083 = vsub.s32 %v3080, %v3082
      %v3084 = vrot.slane %v3070, %v3083
      %v3085 = vcombine.high %v3077, %v3077
      %v3086 = vcombine.high %v3084, %v3084
      %v3088 = vunpack.c.l.s4 1966171168
      %v3089 = vunpack.c.0.s8 %v3088
      %v3090 = vlaneseq
      %v3091 = vshrl.u32 %v3090, 7
      %v3092 = vsub.s32 %v3089, %v3091
      %v3093 = vrot.slane %v3077, %v3092
      %v3095 = vunpack.c.l.s4 1966171168
      %v3096 = vunpack.c.0.s8 %v3095
      %v3097 = vlaneseq
      %v3098 = vshrl.u32 %v3097, 7
      %v3099 = vsub.s32 %v3096, %v3098
      %v3100 = vrot.slane %v3084, %v3099
      %v3102 = vunpack.c.l.s4 1966171168
      %v3103 = vunpack.c.0.s8 %v3102
      %v3104 = vlaneseq
      %v3105 = vshrl.u32 %v3104, 7
      %v3106 = vsub.s32 %v3103, %v3105
      %v3107 = vrot.slane %v3085, %v3106
      %v3109 = vunpack.c.l.s4 1966171168
      %v3110 = vunpack.c.0.s8 %v3109
      %v3111 = vlaneseq
      %v3112 = vshrl.u32 %v3111, 7
      %v3113 = vsub.s32 %v3110, %v3112
      %v3114 = vrot.slane %v3086, %v3113
      %v3115 = vcombine.high %v3093, %v3093
      %v3116 = vcombine.high %v3100, %v3100
      %v3117 = vcombine.high %v3107, %v3107
      %v3118 = vcombine.high %v3114, %v3114
      %v3119 = vcombine.high %v477, %v477
      %v3121 = vunpack.c.l.s4 1966171168
      %v3122 = vunpack.c.0.s8 %v3121
      %v3123 = vlaneseq
      %v3124 = vshrl.u32 %v3123, 7
      %v3125 = vsub.s32 %v3122, %v3124
      %v3126 = vrot.slane %v477, %v3125
      %v3128 = vunpack.c.l.s4 1966171168
      %v3129 = vunpack.c.0.s8 %v3128
      %v3130 = vlaneseq
      %v3131 = vshrl.u32 %v3130, 7
      %v3132 = vsub.s32 %v3129, %v3131
      %v3133 = vrot.slane %v3119, %v3132
      %v3134 = vcombine.high %v3126, %v3126
      %v3135 = vcombine.high %v3133, %v3133
      %v3137 = vunpack.c.l.s4 1966171168
      %v3138 = vunpack.c.0.s8 %v3137
      %v3139 = vlaneseq
      %v3140 = vshrl.u32 %v3139, 7
      %v3141 = vsub.s32 %v3138, %v3140
      %v3142 = vrot.slane %v3126, %v3141
      %v3144 = vunpack.c.l.s4 1966171168
      %v3145 = vunpack.c.0.s8 %v3144
      %v3146 = vlaneseq
      %v3147 = vshrl.u32 %v3146, 7
      %v3148 = vsub.s32 %v3145, %v3147
      %v3149 = vrot.slane %v3133, %v3148
      %v3151 = vunpack.c.l.s4 1966171168
      %v3152 = vunpack.c.0.s8 %v3151
      %v3153 = vlaneseq
      %v3154 = vshrl.u32 %v3153, 7
      %v3155 = vsub.s32 %v3152, %v3154
      %v3156 = vrot.slane %v3134, %v3155
      %v3158 = vunpack.c.l.s4 1966171168
      %v3159 = vunpack.c.0.s8 %v3158
      %v3160 = vlaneseq
      %v3161 = vshrl.u32 %v3160, 7
      %v3162 = vsub.s32 %v3159, %v3161
      %v3163 = vrot.slane %v3135, %v3162
      %v3164 = vcombine.high %v3142, %v3142
      %v3165 = vcombine.high %v3149, %v3149
      %v3166 = vcombine.high %v3156, %v3156
      %v3167 = vcombine.high %v3163, %v3163
      %v3168 = vcombine.high %v478, %v478
      %v3170 = vunpack.c.l.s4 1966171168
      %v3171 = vunpack.c.0.s8 %v3170
      %v3172 = vlaneseq
      %v3173 = vshrl.u32 %v3172, 7
      %v3174 = vsub.s32 %v3171, %v3173
      %v3175 = vrot.slane %v478, %v3174
      %v3177 = vunpack.c.l.s4 1966171168
      %v3178 = vunpack.c.0.s8 %v3177
      %v3179 = vlaneseq
      %v3180 = vshrl.u32 %v3179, 7
      %v3181 = vsub.s32 %v3178, %v3180
      %v3182 = vrot.slane %v3168, %v3181
      %v3183 = vcombine.high %v3175, %v3175
      %v3184 = vcombine.high %v3182, %v3182
      %v3186 = vunpack.c.l.s4 1966171168
      %v3187 = vunpack.c.0.s8 %v3186
      %v3188 = vlaneseq
      %v3189 = vshrl.u32 %v3188, 7
      %v3190 = vsub.s32 %v3187, %v3189
      %v3191 = vrot.slane %v3175, %v3190
      %v3193 = vunpack.c.l.s4 1966171168
      %v3194 = vunpack.c.0.s8 %v3193
      %v3195 = vlaneseq
      %v3196 = vshrl.u32 %v3195, 7
      %v3197 = vsub.s32 %v3194, %v3196
      %v3198 = vrot.slane %v3182, %v3197
      %v3200 = vunpack.c.l.s4 1966171168
      %v3201 = vunpack.c.0.s8 %v3200
      %v3202 = vlaneseq
      %v3203 = vshrl.u32 %v3202, 7
      %v3204 = vsub.s32 %v3201, %v3203
      %v3205 = vrot.slane %v3183, %v3204
      %v3207 = vunpack.c.l.s4 1966171168
      %v3208 = vunpack.c.0.s8 %v3207
      %v3209 = vlaneseq
      %v3210 = vshrl.u32 %v3209, 7
      %v3211 = vsub.s32 %v3208, %v3210
      %v3212 = vrot.slane %v3184, %v3211
      %v3213 = vcombine.high %v3191, %v3191
      %v3214 = vcombine.high %v3198, %v3198
      %v3215 = vcombine.high %v3205, %v3205
      %v3216 = vcombine.high %v3212, %v3212
      %v3217 = vcombine.high %v479, %v479
      %v3219 = vunpack.c.l.s4 1966171168
      %v3220 = vunpack.c.0.s8 %v3219
      %v3221 = vlaneseq
      %v3222 = vshrl.u32 %v3221, 7
      %v3223 = vsub.s32 %v3220, %v3222
      %v3224 = vrot.slane %v479, %v3223
      %v3226 = vunpack.c.l.s4 1966171168
      %v3227 = vunpack.c.0.s8 %v3226
      %v3228 = vlaneseq
      %v3229 = vshrl.u32 %v3228, 7
      %v3230 = vsub.s32 %v3227, %v3229
      %v3231 = vrot.slane %v3217, %v3230
      %v3232 = vcombine.high %v3224, %v3224
      %v3233 = vcombine.high %v3231, %v3231
      %v3235 = vunpack.c.l.s4 1966171168
      %v3236 = vunpack.c.0.s8 %v3235
      %v3237 = vlaneseq
      %v3238 = vshrl.u32 %v3237, 7
      %v3239 = vsub.s32 %v3236, %v3238
      %v3240 = vrot.slane %v3224, %v3239
      %v3242 = vunpack.c.l.s4 1966171168
      %v3243 = vunpack.c.0.s8 %v3242
      %v3244 = vlaneseq
      %v3245 = vshrl.u32 %v3244, 7
      %v3246 = vsub.s32 %v3243, %v3245
      %v3247 = vrot.slane %v3231, %v3246
      %v3249 = vunpack.c.l.s4 1966171168
      %v3250 = vunpack.c.0.s8 %v3249
      %v3251 = vlaneseq
      %v3252 = vshrl.u32 %v3251, 7
      %v3253 = vsub.s32 %v3250, %v3252
      %v3254 = vrot.slane %v3232, %v3253
      %v3256 = vunpack.c.l.s4 1966171168
      %v3257 = vunpack.c.0.s8 %v3256
      %v3258 = vlaneseq
      %v3259 = vshrl.u32 %v3258, 7
      %v3260 = vsub.s32 %v3257, %v3259
      %v3261 = vrot.slane %v3233, %v3260
      %v3262 = vcombine.high %v3240, %v3240
      %v3263 = vcombine.high %v3247, %v3247
      %v3264 = vcombine.high %v3254, %v3254
      %v3265 = vcombine.high %v3261, %v3261
      %v3266 = vcombine.high %v480, %v480
      %v3268 = vunpack.c.l.s4 1966171168
      %v3269 = vunpack.c.0.s8 %v3268
      %v3270 = vlaneseq
      %v3271 = vshrl.u32 %v3270, 7
      %v3272 = vsub.s32 %v3269, %v3271
      %v3273 = vrot.slane %v480, %v3272
      %v3275 = vunpack.c.l.s4 1966171168
      %v3276 = vunpack.c.0.s8 %v3275
      %v3277 = vlaneseq
      %v3278 = vshrl.u32 %v3277, 7
      %v3279 = vsub.s32 %v3276, %v3278
      %v3280 = vrot.slane %v3266, %v3279
      %v3281 = vcombine.high %v3273, %v3273
      %v3282 = vcombine.high %v3280, %v3280
      %v3284 = vunpack.c.l.s4 1966171168
      %v3285 = vunpack.c.0.s8 %v3284
      %v3286 = vlaneseq
      %v3287 = vshrl.u32 %v3286, 7
      %v3288 = vsub.s32 %v3285, %v3287
      %v3289 = vrot.slane %v3273, %v3288
      %v3291 = vunpack.c.l.s4 1966171168
      %v3292 = vunpack.c.0.s8 %v3291
      %v3293 = vlaneseq
      %v3294 = vshrl.u32 %v3293, 7
      %v3295 = vsub.s32 %v3292, %v3294
      %v3296 = vrot.slane %v3280, %v3295
      %v3298 = vunpack.c.l.s4 1966171168
      %v3299 = vunpack.c.0.s8 %v3298
      %v3300 = vlaneseq
      %v3301 = vshrl.u32 %v3300, 7
      %v3302 = vsub.s32 %v3299, %v3301
      %v3303 = vrot.slane %v3281, %v3302
      %v3305 = vunpack.c.l.s4 1966171168
      %v3306 = vunpack.c.0.s8 %v3305
      %v3307 = vlaneseq
      %v3308 = vshrl.u32 %v3307, 7
      %v3309 = vsub.s32 %v3306, %v3308
      %v3310 = vrot.slane %v3282, %v3309
      %v3311 = vcombine.high %v3289, %v3289
      %v3312 = vcombine.high %v3296, %v3296
      %v3313 = vcombine.high %v3303, %v3303
      %v3314 = vcombine.high %v3310, %v3310
      %v3315 = vcombine.high %v481, %v481
      %v3317 = vunpack.c.l.s4 1966171168
      %v3318 = vunpack.c.0.s8 %v3317
      %v3319 = vlaneseq
      %v3320 = vshrl.u32 %v3319, 7
      %v3321 = vsub.s32 %v3318, %v3320
      %v3322 = vrot.slane %v481, %v3321
      %v3324 = vunpack.c.l.s4 1966171168
      %v3325 = vunpack.c.0.s8 %v3324
      %v3326 = vlaneseq
      %v3327 = vshrl.u32 %v3326, 7
      %v3328 = vsub.s32 %v3325, %v3327
      %v3329 = vrot.slane %v3315, %v3328
      %v3330 = vcombine.high %v3322, %v3322
      %v3331 = vcombine.high %v3329, %v3329
      %v3333 = vunpack.c.l.s4 1966171168
      %v3334 = vunpack.c.0.s8 %v3333
      %v3335 = vlaneseq
      %v3336 = vshrl.u32 %v3335, 7
      %v3337 = vsub.s32 %v3334, %v3336
      %v3338 = vrot.slane %v3322, %v3337
      %v3340 = vunpack.c.l.s4 1966171168
      %v3341 = vunpack.c.0.s8 %v3340
      %v3342 = vlaneseq
      %v3343 = vshrl.u32 %v3342, 7
      %v3344 = vsub.s32 %v3341, %v3343
      %v3345 = vrot.slane %v3329, %v3344
      %v3347 = vunpack.c.l.s4 1966171168
      %v3348 = vunpack.c.0.s8 %v3347
      %v3349 = vlaneseq
      %v3350 = vshrl.u32 %v3349, 7
      %v3351 = vsub.s32 %v3348, %v3350
      %v3352 = vrot.slane %v3330, %v3351
      %v3354 = vunpack.c.l.s4 1966171168
      %v3355 = vunpack.c.0.s8 %v3354
      %v3356 = vlaneseq
      %v3357 = vshrl.u32 %v3356, 7
      %v3358 = vsub.s32 %v3355, %v3357
      %v3359 = vrot.slane %v3331, %v3358
      %v3360 = vcombine.high %v3338, %v3338
      %v3361 = vcombine.high %v3345, %v3345
      %v3362 = vcombine.high %v3352, %v3352
      %v3363 = vcombine.high %v3359, %v3359
      %v3364 = vcombine.high %v482, %v482
      %v3366 = vunpack.c.l.s4 1966171168
      %v3367 = vunpack.c.0.s8 %v3366
      %v3368 = vlaneseq
      %v3369 = vshrl.u32 %v3368, 7
      %v3370 = vsub.s32 %v3367, %v3369
      %v3371 = vrot.slane %v482, %v3370
      %v3373 = vunpack.c.l.s4 1966171168
      %v3374 = vunpack.c.0.s8 %v3373
      %v3375 = vlaneseq
      %v3376 = vshrl.u32 %v3375, 7
      %v3377 = vsub.s32 %v3374, %v3376
      %v3378 = vrot.slane %v3364, %v3377
      %v3379 = vcombine.high %v3371, %v3371
      %v3380 = vcombine.high %v3378, %v3378
      %v3382 = vunpack.c.l.s4 1966171168
      %v3383 = vunpack.c.0.s8 %v3382
      %v3384 = vlaneseq
      %v3385 = vshrl.u32 %v3384, 7
      %v3386 = vsub.s32 %v3383, %v3385
      %v3387 = vrot.slane %v3371, %v3386
      %v3389 = vunpack.c.l.s4 1966171168
      %v3390 = vunpack.c.0.s8 %v3389
      %v3391 = vlaneseq
      %v3392 = vshrl.u32 %v3391, 7
      %v3393 = vsub.s32 %v3390, %v3392
      %v3394 = vrot.slane %v3378, %v3393
      %v3396 = vunpack.c.l.s4 1966171168
      %v3397 = vunpack.c.0.s8 %v3396
      %v3398 = vlaneseq
      %v3399 = vshrl.u32 %v3398, 7
      %v3400 = vsub.s32 %v3397, %v3399
      %v3401 = vrot.slane %v3379, %v3400
      %v3403 = vunpack.c.l.s4 1966171168
      %v3404 = vunpack.c.0.s8 %v3403
      %v3405 = vlaneseq
      %v3406 = vshrl.u32 %v3405, 7
      %v3407 = vsub.s32 %v3404, %v3406
      %v3408 = vrot.slane %v3380, %v3407
      %v3409 = vcombine.high %v3387, %v3387
      %v3410 = vcombine.high %v3394, %v3394
      %v3411 = vcombine.high %v3401, %v3401
      %v3412 = vcombine.high %v3408, %v3408
      %v3413 = vcombine.high %v483, %v483
      %v3415 = vunpack.c.l.s4 1966171168
      %v3416 = vunpack.c.0.s8 %v3415
      %v3417 = vlaneseq
      %v3418 = vshrl.u32 %v3417, 7
      %v3419 = vsub.s32 %v3416, %v3418
      %v3420 = vrot.slane %v483, %v3419
      %v3422 = vunpack.c.l.s4 1966171168
      %v3423 = vunpack.c.0.s8 %v3422
      %v3424 = vlaneseq
      %v3425 = vshrl.u32 %v3424, 7
      %v3426 = vsub.s32 %v3423, %v3425
      %v3427 = vrot.slane %v3413, %v3426
      %v3428 = vcombine.high %v3420, %v3420
      %v3429 = vcombine.high %v3427, %v3427
      %v3431 = vunpack.c.l.s4 1966171168
      %v3432 = vunpack.c.0.s8 %v3431
      %v3433 = vlaneseq
      %v3434 = vshrl.u32 %v3433, 7
      %v3435 = vsub.s32 %v3432, %v3434
      %v3436 = vrot.slane %v3420, %v3435
      %v3438 = vunpack.c.l.s4 1966171168
      %v3439 = vunpack.c.0.s8 %v3438
      %v3440 = vlaneseq
      %v3441 = vshrl.u32 %v3440, 7
      %v3442 = vsub.s32 %v3439, %v3441
      %v3443 = vrot.slane %v3427, %v3442
      %v3445 = vunpack.c.l.s4 1966171168
      %v3446 = vunpack.c.0.s8 %v3445
      %v3447 = vlaneseq
      %v3448 = vshrl.u32 %v3447, 7
      %v3449 = vsub.s32 %v3446, %v3448
      %v3450 = vrot.slane %v3428, %v3449
      %v3452 = vunpack.c.l.s4 1966171168
      %v3453 = vunpack.c.0.s8 %v3452
      %v3454 = vlaneseq
      %v3455 = vshrl.u32 %v3454, 7
      %v3456 = vsub.s32 %v3453, %v3455
      %v3457 = vrot.slane %v3429, %v3456
      %v3458 = vcombine.high %v3436, %v3436
      %v3459 = vcombine.high %v3443, %v3443
      %v3460 = vcombine.high %v3450, %v3450
      %v3461 = vcombine.high %v3457, %v3457
      %v3462 = vcombine.high %v484, %v484
      %v3464 = vunpack.c.l.s4 1966171168
      %v3465 = vunpack.c.0.s8 %v3464
      %v3466 = vlaneseq
      %v3467 = vshrl.u32 %v3466, 7
      %v3468 = vsub.s32 %v3465, %v3467
      %v3469 = vrot.slane %v484, %v3468
      %v3471 = vunpack.c.l.s4 1966171168
      %v3472 = vunpack.c.0.s8 %v3471
      %v3473 = vlaneseq
      %v3474 = vshrl.u32 %v3473, 7
      %v3475 = vsub.s32 %v3472, %v3474
      %v3476 = vrot.slane %v3462, %v3475
      %v3477 = vcombine.high %v3469, %v3469
      %v3478 = vcombine.high %v3476, %v3476
      %v3480 = vunpack.c.l.s4 1966171168
      %v3481 = vunpack.c.0.s8 %v3480
      %v3482 = vlaneseq
      %v3483 = vshrl.u32 %v3482, 7
      %v3484 = vsub.s32 %v3481, %v3483
      %v3485 = vrot.slane %v3469, %v3484
      %v3487 = vunpack.c.l.s4 1966171168
      %v3488 = vunpack.c.0.s8 %v3487
      %v3489 = vlaneseq
      %v3490 = vshrl.u32 %v3489, 7
      %v3491 = vsub.s32 %v3488, %v3490
      %v3492 = vrot.slane %v3476, %v3491
      %v3494 = vunpack.c.l.s4 1966171168
      %v3495 = vunpack.c.0.s8 %v3494
      %v3496 = vlaneseq
      %v3497 = vshrl.u32 %v3496, 7
      %v3498 = vsub.s32 %v3495, %v3497
      %v3499 = vrot.slane %v3477, %v3498
      %v3501 = vunpack.c.l.s4 1966171168
      %v3502 = vunpack.c.0.s8 %v3501
      %v3503 = vlaneseq
      %v3504 = vshrl.u32 %v3503, 7
      %v3505 = vsub.s32 %v3502, %v3504
      %v3506 = vrot.slane %v3478, %v3505
      %v3507 = vcombine.high %v3485, %v3485
      %v3508 = vcombine.high %v3492, %v3492
      %v3509 = vcombine.high %v3499, %v3499
      %v3510 = vcombine.high %v3506, %v3506
      %v3511 = vcombine.high %v485, %v485
      %v3513 = vunpack.c.l.s4 1966171168
      %v3514 = vunpack.c.0.s8 %v3513
      %v3515 = vlaneseq
      %v3516 = vshrl.u32 %v3515, 7
      %v3517 = vsub.s32 %v3514, %v3516
      %v3518 = vrot.slane %v485, %v3517
      %v3520 = vunpack.c.l.s4 1966171168
      %v3521 = vunpack.c.0.s8 %v3520
      %v3522 = vlaneseq
      %v3523 = vshrl.u32 %v3522, 7
      %v3524 = vsub.s32 %v3521, %v3523
      %v3525 = vrot.slane %v3511, %v3524
      %v3526 = vcombine.high %v3518, %v3518
      %v3527 = vcombine.high %v3525, %v3525
      %v3529 = vunpack.c.l.s4 1966171168
      %v3530 = vunpack.c.0.s8 %v3529
      %v3531 = vlaneseq
      %v3532 = vshrl.u32 %v3531, 7
      %v3533 = vsub.s32 %v3530, %v3532
      %v3534 = vrot.slane %v3518, %v3533
      %v3536 = vunpack.c.l.s4 1966171168
      %v3537 = vunpack.c.0.s8 %v3536
      %v3538 = vlaneseq
      %v3539 = vshrl.u32 %v3538, 7
      %v3540 = vsub.s32 %v3537, %v3539
      %v3541 = vrot.slane %v3525, %v3540
      %v3543 = vunpack.c.l.s4 1966171168
      %v3544 = vunpack.c.0.s8 %v3543
      %v3545 = vlaneseq
      %v3546 = vshrl.u32 %v3545, 7
      %v3547 = vsub.s32 %v3544, %v3546
      %v3548 = vrot.slane %v3526, %v3547
      %v3550 = vunpack.c.l.s4 1966171168
      %v3551 = vunpack.c.0.s8 %v3550
      %v3552 = vlaneseq
      %v3553 = vshrl.u32 %v3552, 7
      %v3554 = vsub.s32 %v3551, %v3553
      %v3555 = vrot.slane %v3527, %v3554
      %v3556 = vcombine.high %v3534, %v3534
      %v3557 = vcombine.high %v3541, %v3541
      %v3558 = vcombine.high %v3548, %v3548
      %v3559 = vcombine.high %v3555, %v3555
      %v3560 = vcombine.high %v486, %v486
      %v3562 = vunpack.c.l.s4 1966171168
      %v3563 = vunpack.c.0.s8 %v3562
      %v3564 = vlaneseq
      %v3565 = vshrl.u32 %v3564, 7
      %v3566 = vsub.s32 %v3563, %v3565
      %v3567 = vrot.slane %v486, %v3566
      %v3569 = vunpack.c.l.s4 1966171168
      %v3570 = vunpack.c.0.s8 %v3569
      %v3571 = vlaneseq
      %v3572 = vshrl.u32 %v3571, 7
      %v3573 = vsub.s32 %v3570, %v3572
      %v3574 = vrot.slane %v3560, %v3573
      %v3575 = vcombine.high %v3567, %v3567
      %v3576 = vcombine.high %v3574, %v3574
      %v3578 = vunpack.c.l.s4 1966171168
      %v3579 = vunpack.c.0.s8 %v3578
      %v3580 = vlaneseq
      %v3581 = vshrl.u32 %v3580, 7
      %v3582 = vsub.s32 %v3579, %v3581
      %v3583 = vrot.slane %v3567, %v3582
      %v3585 = vunpack.c.l.s4 1966171168
      %v3586 = vunpack.c.0.s8 %v3585
      %v3587 = vlaneseq
      %v3588 = vshrl.u32 %v3587, 7
      %v3589 = vsub.s32 %v3586, %v3588
      %v3590 = vrot.slane %v3574, %v3589
      %v3592 = vunpack.c.l.s4 1966171168
      %v3593 = vunpack.c.0.s8 %v3592
      %v3594 = vlaneseq
      %v3595 = vshrl.u32 %v3594, 7
      %v3596 = vsub.s32 %v3593, %v3595
      %v3597 = vrot.slane %v3575, %v3596
      %v3599 = vunpack.c.l.s4 1966171168
      %v3600 = vunpack.c.0.s8 %v3599
      %v3601 = vlaneseq
      %v3602 = vshrl.u32 %v3601, 7
      %v3603 = vsub.s32 %v3600, %v3602
      %v3604 = vrot.slane %v3576, %v3603
      %v3605 = vcombine.high %v3583, %v3583
      %v3606 = vcombine.high %v3590, %v3590
      %v3607 = vcombine.high %v3597, %v3597
      %v3608 = vcombine.high %v3604, %v3604
      %v3609 = vcombine.high %v487, %v487
      %v3611 = vunpack.c.l.s4 1966171168
      %v3612 = vunpack.c.0.s8 %v3611
      %v3613 = vlaneseq
      %v3614 = vshrl.u32 %v3613, 7
      %v3615 = vsub.s32 %v3612, %v3614
      %v3616 = vrot.slane %v487, %v3615
      %v3618 = vunpack.c.l.s4 1966171168
      %v3619 = vunpack.c.0.s8 %v3618
      %v3620 = vlaneseq
      %v3621 = vshrl.u32 %v3620, 7
      %v3622 = vsub.s32 %v3619, %v3621
      %v3623 = vrot.slane %v3609, %v3622
      %v3624 = vcombine.high %v3616, %v3616
      %v3625 = vcombine.high %v3623, %v3623
      %v3627 = vunpack.c.l.s4 1966171168
      %v3628 = vunpack.c.0.s8 %v3627
      %v3629 = vlaneseq
      %v3630 = vshrl.u32 %v3629, 7
      %v3631 = vsub.s32 %v3628, %v3630
      %v3632 = vrot.slane %v3616, %v3631
      %v3634 = vunpack.c.l.s4 1966171168
      %v3635 = vunpack.c.0.s8 %v3634
      %v3636 = vlaneseq
      %v3637 = vshrl.u32 %v3636, 7
      %v3638 = vsub.s32 %v3635, %v3637
      %v3639 = vrot.slane %v3623, %v3638
      %v3641 = vunpack.c.l.s4 1966171168
      %v3642 = vunpack.c.0.s8 %v3641
      %v3643 = vlaneseq
      %v3644 = vshrl.u32 %v3643, 7
      %v3645 = vsub.s32 %v3642, %v3644
      %v3646 = vrot.slane %v3624, %v3645
      %v3648 = vunpack.c.l.s4 1966171168
      %v3649 = vunpack.c.0.s8 %v3648
      %v3650 = vlaneseq
      %v3651 = vshrl.u32 %v3650, 7
      %v3652 = vsub.s32 %v3649, %v3651
      %v3653 = vrot.slane %v3625, %v3652
      %v3654 = vcombine.high %v3632, %v3632
      %v3655 = vcombine.high %v3639, %v3639
      %v3656 = vcombine.high %v3646, %v3646
      %v3657 = vcombine.high %v3653, %v3653
      %v3658 = vcombine.high %v488, %v488
      %v3660 = vunpack.c.l.s4 1966171168
      %v3661 = vunpack.c.0.s8 %v3660
      %v3662 = vlaneseq
      %v3663 = vshrl.u32 %v3662, 7
      %v3664 = vsub.s32 %v3661, %v3663
      %v3665 = vrot.slane %v488, %v3664
      %v3667 = vunpack.c.l.s4 1966171168
      %v3668 = vunpack.c.0.s8 %v3667
      %v3669 = vlaneseq
      %v3670 = vshrl.u32 %v3669, 7
      %v3671 = vsub.s32 %v3668, %v3670
      %v3672 = vrot.slane %v3658, %v3671
      %v3673 = vcombine.high %v3665, %v3665
      %v3674 = vcombine.high %v3672, %v3672
      %v3676 = vunpack.c.l.s4 1966171168
      %v3677 = vunpack.c.0.s8 %v3676
      %v3678 = vlaneseq
      %v3679 = vshrl.u32 %v3678, 7
      %v3680 = vsub.s32 %v3677, %v3679
      %v3681 = vrot.slane %v3665, %v3680
      %v3683 = vunpack.c.l.s4 1966171168
      %v3684 = vunpack.c.0.s8 %v3683
      %v3685 = vlaneseq
      %v3686 = vshrl.u32 %v3685, 7
      %v3687 = vsub.s32 %v3684, %v3686
      %v3688 = vrot.slane %v3672, %v3687
      %v3690 = vunpack.c.l.s4 1966171168
      %v3691 = vunpack.c.0.s8 %v3690
      %v3692 = vlaneseq
      %v3693 = vshrl.u32 %v3692, 7
      %v3694 = vsub.s32 %v3691, %v3693
      %v3695 = vrot.slane %v3673, %v3694
      %v3697 = vunpack.c.l.s4 1966171168
      %v3698 = vunpack.c.0.s8 %v3697
      %v3699 = vlaneseq
      %v3700 = vshrl.u32 %v3699, 7
      %v3701 = vsub.s32 %v3698, %v3700
      %v3702 = vrot.slane %v3674, %v3701
      %v3703 = vcombine.high %v3681, %v3681
      %v3704 = vcombine.high %v3688, %v3688
      %v3705 = vcombine.high %v3695, %v3695
      %v3706 = vcombine.high %v3702, %v3702
      %v3707 = vcombine.high %v489, %v489
      %v3709 = vunpack.c.l.s4 1966171168
      %v3710 = vunpack.c.0.s8 %v3709
      %v3711 = vlaneseq
      %v3712 = vshrl.u32 %v3711, 7
      %v3713 = vsub.s32 %v3710, %v3712
      %v3714 = vrot.slane %v489, %v3713
      %v3716 = vunpack.c.l.s4 1966171168
      %v3717 = vunpack.c.0.s8 %v3716
      %v3718 = vlaneseq
      %v3719 = vshrl.u32 %v3718, 7
      %v3720 = vsub.s32 %v3717, %v3719
      %v3721 = vrot.slane %v3707, %v3720
      %v3722 = vcombine.high %v3714, %v3714
      %v3723 = vcombine.high %v3721, %v3721
      %v3725 = vunpack.c.l.s4 1966171168
      %v3726 = vunpack.c.0.s8 %v3725
      %v3727 = vlaneseq
      %v3728 = vshrl.u32 %v3727, 7
      %v3729 = vsub.s32 %v3726, %v3728
      %v3730 = vrot.slane %v3714, %v3729
      %v3732 = vunpack.c.l.s4 1966171168
      %v3733 = vunpack.c.0.s8 %v3732
      %v3734 = vlaneseq
      %v3735 = vshrl.u32 %v3734, 7
      %v3736 = vsub.s32 %v3733, %v3735
      %v3737 = vrot.slane %v3721, %v3736
      %v3739 = vunpack.c.l.s4 1966171168
      %v3740 = vunpack.c.0.s8 %v3739
      %v3741 = vlaneseq
      %v3742 = vshrl.u32 %v3741, 7
      %v3743 = vsub.s32 %v3740, %v3742
      %v3744 = vrot.slane %v3722, %v3743
      %v3746 = vunpack.c.l.s4 1966171168
      %v3747 = vunpack.c.0.s8 %v3746
      %v3748 = vlaneseq
      %v3749 = vshrl.u32 %v3748, 7
      %v3750 = vsub.s32 %v3747, %v3749
      %v3751 = vrot.slane %v3723, %v3750
      %v3752 = vcombine.high %v3730, %v3730
      %v3753 = vcombine.high %v3737, %v3737
      %v3754 = vcombine.high %v3744, %v3744
      %v3755 = vcombine.high %v3751, %v3751
      %v3756 = vcombine.high %v490, %v490
      %v3758 = vunpack.c.l.s4 1966171168
      %v3759 = vunpack.c.0.s8 %v3758
      %v3760 = vlaneseq
      %v3761 = vshrl.u32 %v3760, 7
      %v3762 = vsub.s32 %v3759, %v3761
      %v3763 = vrot.slane %v490, %v3762
      %v3765 = vunpack.c.l.s4 1966171168
      %v3766 = vunpack.c.0.s8 %v3765
      %v3767 = vlaneseq
      %v3768 = vshrl.u32 %v3767, 7
      %v3769 = vsub.s32 %v3766, %v3768
      %v3770 = vrot.slane %v3756, %v3769
      %v3771 = vcombine.high %v3763, %v3763
      %v3772 = vcombine.high %v3770, %v3770
      %v3774 = vunpack.c.l.s4 1966171168
      %v3775 = vunpack.c.0.s8 %v3774
      %v3776 = vlaneseq
      %v3777 = vshrl.u32 %v3776, 7
      %v3778 = vsub.s32 %v3775, %v3777
      %v3779 = vrot.slane %v3763, %v3778
      %v3781 = vunpack.c.l.s4 1966171168
      %v3782 = vunpack.c.0.s8 %v3781
      %v3783 = vlaneseq
      %v3784 = vshrl.u32 %v3783, 7
      %v3785 = vsub.s32 %v3782, %v3784
      %v3786 = vrot.slane %v3770, %v3785
      %v3788 = vunpack.c.l.s4 1966171168
      %v3789 = vunpack.c.0.s8 %v3788
      %v3790 = vlaneseq
      %v3791 = vshrl.u32 %v3790, 7
      %v3792 = vsub.s32 %v3789, %v3791
      %v3793 = vrot.slane %v3771, %v3792
      %v3795 = vunpack.c.l.s4 1966171168
      %v3796 = vunpack.c.0.s8 %v3795
      %v3797 = vlaneseq
      %v3798 = vshrl.u32 %v3797, 7
      %v3799 = vsub.s32 %v3796, %v3798
      %v3800 = vrot.slane %v3772, %v3799
      %v3801 = vcombine.high %v3779, %v3779
      %v3802 = vcombine.high %v3786, %v3786
      %v3803 = vcombine.high %v3793, %v3793
      %v3804 = vcombine.high %v3800, %v3800
      %v3805 = vcombine.high %v491, %v491
      %v3807 = vunpack.c.l.s4 1966171168
      %v3808 = vunpack.c.0.s8 %v3807
      %v3809 = vlaneseq
      %v3810 = vshrl.u32 %v3809, 7
      %v3811 = vsub.s32 %v3808, %v3810
      %v3812 = vrot.slane %v491, %v3811
      %v3814 = vunpack.c.l.s4 1966171168
      %v3815 = vunpack.c.0.s8 %v3814
      %v3816 = vlaneseq
      %v3817 = vshrl.u32 %v3816, 7
      %v3818 = vsub.s32 %v3815, %v3817
      %v3819 = vrot.slane %v3805, %v3818
      %v3820 = vcombine.high %v3812, %v3812
      %v3821 = vcombine.high %v3819, %v3819
      %v3823 = vunpack.c.l.s4 1966171168
      %v3824 = vunpack.c.0.s8 %v3823
      %v3825 = vlaneseq
      %v3826 = vshrl.u32 %v3825, 7
      %v3827 = vsub.s32 %v3824, %v3826
      %v3828 = vrot.slane %v3812, %v3827
      %v3830 = vunpack.c.l.s4 1966171168
      %v3831 = vunpack.c.0.s8 %v3830
      %v3832 = vlaneseq
      %v3833 = vshrl.u32 %v3832, 7
      %v3834 = vsub.s32 %v3831, %v3833
      %v3835 = vrot.slane %v3819, %v3834
      %v3837 = vunpack.c.l.s4 1966171168
      %v3838 = vunpack.c.0.s8 %v3837
      %v3839 = vlaneseq
      %v3840 = vshrl.u32 %v3839, 7
      %v3841 = vsub.s32 %v3838, %v3840
      %v3842 = vrot.slane %v3820, %v3841
      %v3844 = vunpack.c.l.s4 1966171168
      %v3845 = vunpack.c.0.s8 %v3844
      %v3846 = vlaneseq
      %v3847 = vshrl.u32 %v3846, 7
      %v3848 = vsub.s32 %v3845, %v3847
      %v3849 = vrot.slane %v3821, %v3848
      %v3850 = vcombine.high %v3828, %v3828
      %v3851 = vcombine.high %v3835, %v3835
      %v3852 = vcombine.high %v3842, %v3842
      %v3853 = vcombine.high %v3849, %v3849
      %v3854 = vlaneseq
      %v3855 = vshrl.u32 %v3854, 7
      %v3856 = vsub.s32 0, %v3855
      %v3857 = vrot.slane %v3093, %v3856
      %v3858 = vlaneseq
      %v3859 = vshrl.u32 %v3858, 7
      %v3860 = vsub.s32 0, %v3859
      %v3861 = vrot.slane %v3107, %v3860
      %v3862 = vlaneseq
      %v3863 = vshrl.u32 %v3862, 7
      %v3864 = vsub.s32 0, %v3863
      %v3865 = vrot.slane %v3115, %v3864
      %v3866 = vlaneseq
      %v3867 = vshrl.u32 %v3866, 7
      %v3868 = vsub.s32 0, %v3867
      %v3869 = vrot.slane %v3117, %v3868
      %v3870 = vlaneseq
      %v3871 = vshrl.u32 %v3870, 7
      %v3872 = vsub.s32 0, %v3871
      %v3873 = vrot.slane %v3100, %v3872
      %v3874 = vlaneseq
      %v3875 = vshrl.u32 %v3874, 7
      %v3876 = vsub.s32 0, %v3875
      %v3877 = vrot.slane %v3114, %v3876
      %v3878 = vlaneseq
      %v3879 = vshrl.u32 %v3878, 7
      %v3880 = vsub.s32 0, %v3879
      %v3881 = vrot.slane %v3116, %v3880
      %v3882 = vlaneseq
      %v3883 = vshrl.u32 %v3882, 7
      %v3884 = vsub.s32 0, %v3883
      %v3885 = vrot.slane %v3118, %v3884
      %v3886 = vlaneseq
      %v3887 = vshrl.u32 %v3886, 7
      %v3888 = vsub.s32 0, %v3887
      %v3889 = vrot.slane %v3142, %v3888
      %v3890 = vlaneseq
      %v3891 = vshrl.u32 %v3890, 7
      %v3892 = vsub.s32 0, %v3891
      %v3893 = vrot.slane %v3156, %v3892
      %v3894 = vlaneseq
      %v3895 = vshrl.u32 %v3894, 7
      %v3896 = vsub.s32 0, %v3895
      %v3897 = vrot.slane %v3164, %v3896
      %v3898 = vlaneseq
      %v3899 = vshrl.u32 %v3898, 7
      %v3900 = vsub.s32 0, %v3899
      %v3901 = vrot.slane %v3166, %v3900
      %v3902 = vlaneseq
      %v3903 = vshrl.u32 %v3902, 7
      %v3904 = vsub.s32 0, %v3903
      %v3905 = vrot.slane %v3149, %v3904
      %v3906 = vlaneseq
      %v3907 = vshrl.u32 %v3906, 7
      %v3908 = vsub.s32 0, %v3907
      %v3909 = vrot.slane %v3163, %v3908
      %v3910 = vlaneseq
      %v3911 = vshrl.u32 %v3910, 7
      %v3912 = vsub.s32 0, %v3911
      %v3913 = vrot.slane %v3165, %v3912
      %v3914 = vlaneseq
      %v3915 = vshrl.u32 %v3914, 7
      %v3916 = vsub.s32 0, %v3915
      %v3917 = vrot.slane %v3167, %v3916
      %v3918 = vlaneseq
      %v3919 = vshrl.u32 %v3918, 7
      %v3920 = vsub.s32 0, %v3919
      %v3921 = vrot.slane %v3191, %v3920
      %v3922 = vlaneseq
      %v3923 = vshrl.u32 %v3922, 7
      %v3924 = vsub.s32 0, %v3923
      %v3925 = vrot.slane %v3205, %v3924
      %v3926 = vlaneseq
      %v3927 = vshrl.u32 %v3926, 7
      %v3928 = vsub.s32 0, %v3927
      %v3929 = vrot.slane %v3213, %v3928
      %v3930 = vlaneseq
      %v3931 = vshrl.u32 %v3930, 7
      %v3932 = vsub.s32 0, %v3931
      %v3933 = vrot.slane %v3215, %v3932
      %v3934 = vlaneseq
      %v3935 = vshrl.u32 %v3934, 7
      %v3936 = vsub.s32 0, %v3935
      %v3937 = vrot.slane %v3198, %v3936
      %v3938 = vlaneseq
      %v3939 = vshrl.u32 %v3938, 7
      %v3940 = vsub.s32 0, %v3939
      %v3941 = vrot.slane %v3212, %v3940
      %v3942 = vlaneseq
      %v3943 = vshrl.u32 %v3942, 7
      %v3944 = vsub.s32 0, %v3943
      %v3945 = vrot.slane %v3214, %v3944
      %v3946 = vlaneseq
      %v3947 = vshrl.u32 %v3946, 7
      %v3948 = vsub.s32 0, %v3947
      %v3949 = vrot.slane %v3216, %v3948
      %v3950 = vlaneseq
      %v3951 = vshrl.u32 %v3950, 7
      %v3952 = vsub.s32 0, %v3951
      %v3953 = vrot.slane %v3240, %v3952
      %v3954 = vlaneseq
      %v3955 = vshrl.u32 %v3954, 7
      %v3956 = vsub.s32 0, %v3955
      %v3957 = vrot.slane %v3254, %v3956
      %v3958 = vlaneseq
      %v3959 = vshrl.u32 %v3958, 7
      %v3960 = vsub.s32 0, %v3959
      %v3961 = vrot.slane %v3262, %v3960
      %v3962 = vlaneseq
      %v3963 = vshrl.u32 %v3962, 7
      %v3964 = vsub.s32 0, %v3963
      %v3965 = vrot.slane %v3264, %v3964
      %v3966 = vlaneseq
      %v3967 = vshrl.u32 %v3966, 7
      %v3968 = vsub.s32 0, %v3967
      %v3969 = vrot.slane %v3247, %v3968
      %v3970 = vlaneseq
      %v3971 = vshrl.u32 %v3970, 7
      %v3972 = vsub.s32 0, %v3971
      %v3973 = vrot.slane %v3261, %v3972
      %v3974 = vlaneseq
      %v3975 = vshrl.u32 %v3974, 7
      %v3976 = vsub.s32 0, %v3975
      %v3977 = vrot.slane %v3263, %v3976
      %v3978 = vlaneseq
      %v3979 = vshrl.u32 %v3978, 7
      %v3980 = vsub.s32 0, %v3979
      %v3981 = vrot.slane %v3265, %v3980
      %v3982 = vlaneseq
      %v3983 = vshrl.u32 %v3982, 7
      %v3984 = vsub.s32 0, %v3983
      %v3985 = vrot.slane %v3289, %v3984
      %v3986 = vlaneseq
      %v3987 = vshrl.u32 %v3986, 7
      %v3988 = vsub.s32 0, %v3987
      %v3989 = vrot.slane %v3303, %v3988
      %v3990 = vlaneseq
      %v3991 = vshrl.u32 %v3990, 7
      %v3992 = vsub.s32 0, %v3991
      %v3993 = vrot.slane %v3311, %v3992
      %v3994 = vlaneseq
      %v3995 = vshrl.u32 %v3994, 7
      %v3996 = vsub.s32 0, %v3995
      %v3997 = vrot.slane %v3313, %v3996
      %v3998 = vlaneseq
      %v3999 = vshrl.u32 %v3998, 7
      %v4000 = vsub.s32 0, %v3999
      %v4001 = vrot.slane %v3296, %v4000
      %v4002 = vlaneseq
      %v4003 = vshrl.u32 %v4002, 7
      %v4004 = vsub.s32 0, %v4003
      %v4005 = vrot.slane %v3310, %v4004
      %v4006 = vlaneseq
      %v4007 = vshrl.u32 %v4006, 7
      %v4008 = vsub.s32 0, %v4007
      %v4009 = vrot.slane %v3312, %v4008
      %v4010 = vlaneseq
      %v4011 = vshrl.u32 %v4010, 7
      %v4012 = vsub.s32 0, %v4011
      %v4013 = vrot.slane %v3314, %v4012
      %v4014 = vlaneseq
      %v4015 = vshrl.u32 %v4014, 7
      %v4016 = vsub.s32 0, %v4015
      %v4017 = vrot.slane %v3338, %v4016
      %v4018 = vlaneseq
      %v4019 = vshrl.u32 %v4018, 7
      %v4020 = vsub.s32 0, %v4019
      %v4021 = vrot.slane %v3352, %v4020
      %v4022 = vlaneseq
      %v4023 = vshrl.u32 %v4022, 7
      %v4024 = vsub.s32 0, %v4023
      %v4025 = vrot.slane %v3360, %v4024
      %v4026 = vlaneseq
      %v4027 = vshrl.u32 %v4026, 7
      %v4028 = vsub.s32 0, %v4027
      %v4029 = vrot.slane %v3362, %v4028
      %v4030 = vlaneseq
      %v4031 = vshrl.u32 %v4030, 7
      %v4032 = vsub.s32 0, %v4031
      %v4033 = vrot.slane %v3345, %v4032
      %v4034 = vlaneseq
      %v4035 = vshrl.u32 %v4034, 7
      %v4036 = vsub.s32 0, %v4035
      %v4037 = vrot.slane %v3359, %v4036
      %v4038 = vlaneseq
      %v4039 = vshrl.u32 %v4038, 7
      %v4040 = vsub.s32 0, %v4039
      %v4041 = vrot.slane %v3361, %v4040
      %v4042 = vlaneseq
      %v4043 = vshrl.u32 %v4042, 7
      %v4044 = vsub.s32 0, %v4043
      %v4045 = vrot.slane %v3363, %v4044
      %v4046 = vlaneseq
      %v4047 = vshrl.u32 %v4046, 7
      %v4048 = vsub.s32 0, %v4047
      %v4049 = vrot.slane %v3387, %v4048
      %v4050 = vlaneseq
      %v4051 = vshrl.u32 %v4050, 7
      %v4052 = vsub.s32 0, %v4051
      %v4053 = vrot.slane %v3401, %v4052
      %v4054 = vlaneseq
      %v4055 = vshrl.u32 %v4054, 7
      %v4056 = vsub.s32 0, %v4055
      %v4057 = vrot.slane %v3409, %v4056
      %v4058 = vlaneseq
      %v4059 = vshrl.u32 %v4058, 7
      %v4060 = vsub.s32 0, %v4059
      %v4061 = vrot.slane %v3411, %v4060
      %v4062 = vlaneseq
      %v4063 = vshrl.u32 %v4062, 7
      %v4064 = vsub.s32 0, %v4063
      %v4065 = vrot.slane %v3394, %v4064
      %v4066 = vlaneseq
      %v4067 = vshrl.u32 %v4066, 7
      %v4068 = vsub.s32 0, %v4067
      %v4069 = vrot.slane %v3408, %v4068
      %v4070 = vlaneseq
      %v4071 = vshrl.u32 %v4070, 7
      %v4072 = vsub.s32 0, %v4071
      %v4073 = vrot.slane %v3410, %v4072
      %v4074 = vlaneseq
      %v4075 = vshrl.u32 %v4074, 7
      %v4076 = vsub.s32 0, %v4075
      %v4077 = vrot.slane %v3412, %v4076
      %v4078 = vlaneseq
      %v4079 = vshrl.u32 %v4078, 7
      %v4080 = vsub.s32 0, %v4079
      %v4081 = vrot.slane %v3436, %v4080
      %v4082 = vlaneseq
      %v4083 = vshrl.u32 %v4082, 7
      %v4084 = vsub.s32 0, %v4083
      %v4085 = vrot.slane %v3450, %v4084
      %v4086 = vlaneseq
      %v4087 = vshrl.u32 %v4086, 7
      %v4088 = vsub.s32 0, %v4087
      %v4089 = vrot.slane %v3458, %v4088
      %v4090 = vlaneseq
      %v4091 = vshrl.u32 %v4090, 7
      %v4092 = vsub.s32 0, %v4091
      %v4093 = vrot.slane %v3460, %v4092
      %v4094 = vlaneseq
      %v4095 = vshrl.u32 %v4094, 7
      %v4096 = vsub.s32 0, %v4095
      %v4097 = vrot.slane %v3443, %v4096
      %v4098 = vlaneseq
      %v4099 = vshrl.u32 %v4098, 7
      %v4100 = vsub.s32 0, %v4099
      %v4101 = vrot.slane %v3457, %v4100
      %v4102 = vlaneseq
      %v4103 = vshrl.u32 %v4102, 7
      %v4104 = vsub.s32 0, %v4103
      %v4105 = vrot.slane %v3459, %v4104
      %v4106 = vlaneseq
      %v4107 = vshrl.u32 %v4106, 7
      %v4108 = vsub.s32 0, %v4107
      %v4109 = vrot.slane %v3461, %v4108
      %v4110 = vlaneseq
      %v4111 = vshrl.u32 %v4110, 7
      %v4112 = vsub.s32 0, %v4111
      %v4113 = vrot.slane %v3485, %v4112
      %v4114 = vlaneseq
      %v4115 = vshrl.u32 %v4114, 7
      %v4116 = vsub.s32 0, %v4115
      %v4117 = vrot.slane %v3499, %v4116
      %v4118 = vlaneseq
      %v4119 = vshrl.u32 %v4118, 7
      %v4120 = vsub.s32 0, %v4119
      %v4121 = vrot.slane %v3507, %v4120
      %v4122 = vlaneseq
      %v4123 = vshrl.u32 %v4122, 7
      %v4124 = vsub.s32 0, %v4123
      %v4125 = vrot.slane %v3509, %v4124
      %v4126 = vlaneseq
      %v4127 = vshrl.u32 %v4126, 7
      %v4128 = vsub.s32 0, %v4127
      %v4129 = vrot.slane %v3492, %v4128
      %v4130 = vlaneseq
      %v4131 = vshrl.u32 %v4130, 7
      %v4132 = vsub.s32 0, %v4131
      %v4133 = vrot.slane %v3506, %v4132
      %v4134 = vlaneseq
      %v4135 = vshrl.u32 %v4134, 7
      %v4136 = vsub.s32 0, %v4135
      %v4137 = vrot.slane %v3508, %v4136
      %v4138 = vlaneseq
      %v4139 = vshrl.u32 %v4138, 7
      %v4140 = vsub.s32 0, %v4139
      %v4141 = vrot.slane %v3510, %v4140
      %v4142 = vlaneseq
      %v4143 = vshrl.u32 %v4142, 7
      %v4144 = vsub.s32 0, %v4143
      %v4145 = vrot.slane %v3534, %v4144
      %v4146 = vlaneseq
      %v4147 = vshrl.u32 %v4146, 7
      %v4148 = vsub.s32 0, %v4147
      %v4149 = vrot.slane %v3548, %v4148
      %v4150 = vlaneseq
      %v4151 = vshrl.u32 %v4150, 7
      %v4152 = vsub.s32 0, %v4151
      %v4153 = vrot.slane %v3556, %v4152
      %v4154 = vlaneseq
      %v4155 = vshrl.u32 %v4154, 7
      %v4156 = vsub.s32 0, %v4155
      %v4157 = vrot.slane %v3558, %v4156
      %v4158 = vlaneseq
      %v4159 = vshrl.u32 %v4158, 7
      %v4160 = vsub.s32 0, %v4159
      %v4161 = vrot.slane %v3541, %v4160
      %v4162 = vlaneseq
      %v4163 = vshrl.u32 %v4162, 7
      %v4164 = vsub.s32 0, %v4163
      %v4165 = vrot.slane %v3555, %v4164
      %v4166 = vlaneseq
      %v4167 = vshrl.u32 %v4166, 7
      %v4168 = vsub.s32 0, %v4167
      %v4169 = vrot.slane %v3557, %v4168
      %v4170 = vlaneseq
      %v4171 = vshrl.u32 %v4170, 7
      %v4172 = vsub.s32 0, %v4171
      %v4173 = vrot.slane %v3559, %v4172
      %v4174 = vlaneseq
      %v4175 = vshrl.u32 %v4174, 7
      %v4176 = vsub.s32 0, %v4175
      %v4177 = vrot.slane %v3583, %v4176
      %v4178 = vlaneseq
      %v4179 = vshrl.u32 %v4178, 7
      %v4180 = vsub.s32 0, %v4179
      %v4181 = vrot.slane %v3597, %v4180
      %v4182 = vlaneseq
      %v4183 = vshrl.u32 %v4182, 7
      %v4184 = vsub.s32 0, %v4183
      %v4185 = vrot.slane %v3605, %v4184
      %v4186 = vlaneseq
      %v4187 = vshrl.u32 %v4186, 7
      %v4188 = vsub.s32 0, %v4187
      %v4189 = vrot.slane %v3607, %v4188
      %v4190 = vlaneseq
      %v4191 = vshrl.u32 %v4190, 7
      %v4192 = vsub.s32 0, %v4191
      %v4193 = vrot.slane %v3590, %v4192
      %v4194 = vlaneseq
      %v4195 = vshrl.u32 %v4194, 7
      %v4196 = vsub.s32 0, %v4195
      %v4197 = vrot.slane %v3604, %v4196
      %v4198 = vlaneseq
      %v4199 = vshrl.u32 %v4198, 7
      %v4200 = vsub.s32 0, %v4199
      %v4201 = vrot.slane %v3606, %v4200
      %v4202 = vlaneseq
      %v4203 = vshrl.u32 %v4202, 7
      %v4204 = vsub.s32 0, %v4203
      %v4205 = vrot.slane %v3608, %v4204
      %v4206 = vlaneseq
      %v4207 = vshrl.u32 %v4206, 7
      %v4208 = vsub.s32 0, %v4207
      %v4209 = vrot.slane %v3632, %v4208
      %v4210 = vlaneseq
      %v4211 = vshrl.u32 %v4210, 7
      %v4212 = vsub.s32 0, %v4211
      %v4213 = vrot.slane %v3646, %v4212
      %v4214 = vlaneseq
      %v4215 = vshrl.u32 %v4214, 7
      %v4216 = vsub.s32 0, %v4215
      %v4217 = vrot.slane %v3654, %v4216
      %v4218 = vlaneseq
      %v4219 = vshrl.u32 %v4218, 7
      %v4220 = vsub.s32 0, %v4219
      %v4221 = vrot.slane %v3656, %v4220
      %v4222 = vlaneseq
      %v4223 = vshrl.u32 %v4222, 7
      %v4224 = vsub.s32 0, %v4223
      %v4225 = vrot.slane %v3639, %v4224
      %v4226 = vlaneseq
      %v4227 = vshrl.u32 %v4226, 7
      %v4228 = vsub.s32 0, %v4227
      %v4229 = vrot.slane %v3653, %v4228
      %v4230 = vlaneseq
      %v4231 = vshrl.u32 %v4230, 7
      %v4232 = vsub.s32 0, %v4231
      %v4233 = vrot.slane %v3655, %v4232
      %v4234 = vlaneseq
      %v4235 = vshrl.u32 %v4234, 7
      %v4236 = vsub.s32 0, %v4235
      %v4237 = vrot.slane %v3657, %v4236
      %v4238 = vlaneseq
      %v4239 = vshrl.u32 %v4238, 7
      %v4240 = vsub.s32 0, %v4239
      %v4241 = vrot.slane %v3681, %v4240
      %v4242 = vlaneseq
      %v4243 = vshrl.u32 %v4242, 7
      %v4244 = vsub.s32 0, %v4243
      %v4245 = vrot.slane %v3695, %v4244
      %v4246 = vlaneseq
      %v4247 = vshrl.u32 %v4246, 7
      %v4248 = vsub.s32 0, %v4247
      %v4249 = vrot.slane %v3703, %v4248
      %v4250 = vlaneseq
      %v4251 = vshrl.u32 %v4250, 7
      %v4252 = vsub.s32 0, %v4251
      %v4253 = vrot.slane %v3705, %v4252
      %v4254 = vlaneseq
      %v4255 = vshrl.u32 %v4254, 7
      %v4256 = vsub.s32 0, %v4255
      %v4257 = vrot.slane %v3688, %v4256
      %v4258 = vlaneseq
      %v4259 = vshrl.u32 %v4258, 7
      %v4260 = vsub.s32 0, %v4259
      %v4261 = vrot.slane %v3702, %v4260
      %v4262 = vlaneseq
      %v4263 = vshrl.u32 %v4262, 7
      %v4264 = vsub.s32 0, %v4263
      %v4265 = vrot.slane %v3704, %v4264
      %v4266 = vlaneseq
      %v4267 = vshrl.u32 %v4266, 7
      %v4268 = vsub.s32 0, %v4267
      %v4269 = vrot.slane %v3706, %v4268
      %v4270 = vlaneseq
      %v4271 = vshrl.u32 %v4270, 7
      %v4272 = vsub.s32 0, %v4271
      %v4273 = vrot.slane %v3730, %v4272
      %v4274 = vlaneseq
      %v4275 = vshrl.u32 %v4274, 7
      %v4276 = vsub.s32 0, %v4275
      %v4277 = vrot.slane %v3744, %v4276
      %v4278 = vlaneseq
      %v4279 = vshrl.u32 %v4278, 7
      %v4280 = vsub.s32 0, %v4279
      %v4281 = vrot.slane %v3752, %v4280
      %v4282 = vlaneseq
      %v4283 = vshrl.u32 %v4282, 7
      %v4284 = vsub.s32 0, %v4283
      %v4285 = vrot.slane %v3754, %v4284
      %v4286 = vlaneseq
      %v4287 = vshrl.u32 %v4286, 7
      %v4288 = vsub.s32 0, %v4287
      %v4289 = vrot.slane %v3737, %v4288
      %v4290 = vlaneseq
      %v4291 = vshrl.u32 %v4290, 7
      %v4292 = vsub.s32 0, %v4291
      %v4293 = vrot.slane %v3751, %v4292
      %v4294 = vlaneseq
      %v4295 = vshrl.u32 %v4294, 7
      %v4296 = vsub.s32 0, %v4295
      %v4297 = vrot.slane %v3753, %v4296
      %v4298 = vlaneseq
      %v4299 = vshrl.u32 %v4298, 7
      %v4300 = vsub.s32 0, %v4299
      %v4301 = vrot.slane %v3755, %v4300
      %v4302 = vlaneseq
      %v4303 = vshrl.u32 %v4302, 7
      %v4304 = vsub.s32 0, %v4303
      %v4305 = vrot.slane %v3779, %v4304
      %v4306 = vlaneseq
      %v4307 = vshrl.u32 %v4306, 7
      %v4308 = vsub.s32 0, %v4307
      %v4309 = vrot.slane %v3793, %v4308
      %v4310 = vlaneseq
      %v4311 = vshrl.u32 %v4310, 7
      %v4312 = vsub.s32 0, %v4311
      %v4313 = vrot.slane %v3801, %v4312
      %v4314 = vlaneseq
      %v4315 = vshrl.u32 %v4314, 7
      %v4316 = vsub.s32 0, %v4315
      %v4317 = vrot.slane %v3803, %v4316
      %v4318 = vlaneseq
      %v4319 = vshrl.u32 %v4318, 7
      %v4320 = vsub.s32 0, %v4319
      %v4321 = vrot.slane %v3786, %v4320
      %v4322 = vlaneseq
      %v4323 = vshrl.u32 %v4322, 7
      %v4324 = vsub.s32 0, %v4323
      %v4325 = vrot.slane %v3800, %v4324
      %v4326 = vlaneseq
      %v4327 = vshrl.u32 %v4326, 7
      %v4328 = vsub.s32 0, %v4327
      %v4329 = vrot.slane %v3802, %v4328
      %v4330 = vlaneseq
      %v4331 = vshrl.u32 %v4330, 7
      %v4332 = vsub.s32 0, %v4331
      %v4333 = vrot.slane %v3804, %v4332
      %v4334 = vlaneseq
      %v4335 = vshrl.u32 %v4334, 7
      %v4336 = vsub.s32 0, %v4335
      %v4337 = vrot.slane %v3828, %v4336
      %v4338 = vlaneseq
      %v4339 = vshrl.u32 %v4338, 7
      %v4340 = vsub.s32 0, %v4339
      %v4341 = vrot.slane %v3842, %v4340
      %v4342 = vlaneseq
      %v4343 = vshrl.u32 %v4342, 7
      %v4344 = vsub.s32 0, %v4343
      %v4345 = vrot.slane %v3850, %v4344
      %v4346 = vlaneseq
      %v4347 = vshrl.u32 %v4346, 7
      %v4348 = vsub.s32 0, %v4347
      %v4349 = vrot.slane %v3852, %v4348
      %v4350 = vlaneseq
      %v4351 = vshrl.u32 %v4350, 7
      %v4352 = vsub.s32 0, %v4351
      %v4353 = vrot.slane %v3835, %v4352
      %v4354 = vlaneseq
      %v4355 = vshrl.u32 %v4354, 7
      %v4356 = vsub.s32 0, %v4355
      %v4357 = vrot.slane %v3849, %v4356
      %v4358 = vlaneseq
      %v4359 = vshrl.u32 %v4358, 7
      %v4360 = vsub.s32 0, %v4359
      %v4361 = vrot.slane %v3851, %v4360
      %v4362 = vlaneseq
      %v4363 = vshrl.u32 %v4362, 7
      %v4364 = vsub.s32 0, %v4363
      %v4365 = vrot.slane %v3853, %v4364
      %v4494 = vmul.f32 %v628, %v3857
      %v4495 = vmul.f32 %v632, %v3857
      %v4496 = vmul.f32 %v636, %v3857
      %v4497 = vmul.f32 %v640, %v3857
      %v4498 = vmul.f32 %v647, %v3861
      %v4499 = vmul.f32 %v651, %v3861
      %v4500 = vmul.f32 %v655, %v3861
      %v4501 = vmul.f32 %v659, %v3861
      %v4502 = vmul.f32 %v666, %v3865
      %v4503 = vmul.f32 %v670, %v3865
      %v4504 = vmul.f32 %v674, %v3865
      %v4505 = vmul.f32 %v678, %v3865
      %v4506 = vmul.f32 %v685, %v3869
      %v4507 = vmul.f32 %v689, %v3869
      %v4508 = vmul.f32 %v693, %v3869
      %v4509 = vmul.f32 %v697, %v3869
      %v4510 = vmul.f32 %v704, %v3873
      %v4511 = vmul.f32 %v708, %v3873
      %v4512 = vmul.f32 %v712, %v3873
      %v4513 = vmul.f32 %v716, %v3873
      %v4514 = vmul.f32 %v723, %v3877
      %v4515 = vmul.f32 %v727, %v3877
      %v4516 = vmul.f32 %v731, %v3877
      %v4517 = vmul.f32 %v735, %v3877
      %v4518 = vmul.f32 %v742, %v3881
      %v4519 = vmul.f32 %v746, %v3881
      %v4520 = vmul.f32 %v750, %v3881
      %v4521 = vmul.f32 %v754, %v3881
      %v4522 = vmul.f32 %v761, %v3885
      %v4523 = vmul.f32 %v765, %v3885
      %v4524 = vmul.f32 %v769, %v3885
      %v4525 = vmul.f32 %v773, %v3885
      %v4526 = vmul.f32 %v780, %v3889
      %v4527 = vmul.f32 %v784, %v3889
      %v4528 = vmul.f32 %v788, %v3889
      %v4529 = vmul.f32 %v792, %v3889
      %v4530 = vmul.f32 %v799, %v3893
      %v4531 = vmul.f32 %v803, %v3893
      %v4532 = vmul.f32 %v807, %v3893
      %v4533 = vmul.f32 %v811, %v3893
      %v4534 = vmul.f32 %v818, %v3897
      %v4535 = vmul.f32 %v822, %v3897
      %v4536 = vmul.f32 %v826, %v3897
      %v4537 = vmul.f32 %v830, %v3897
      %v4538 = vmul.f32 %v837, %v3901
      %v4539 = vmul.f32 %v841, %v3901
      %v4540 = vmul.f32 %v845, %v3901
      %v4541 = vmul.f32 %v849, %v3901
      %v4542 = vmul.f32 %v856, %v3905
      %v4543 = vmul.f32 %v860, %v3905
      %v4544 = vmul.f32 %v864, %v3905
      %v4545 = vmul.f32 %v868, %v3905
      %v4546 = vmul.f32 %v875, %v3909
      %v4547 = vmul.f32 %v879, %v3909
      %v4548 = vmul.f32 %v883, %v3909
      %v4549 = vmul.f32 %v887, %v3909
      %v4550 = vmul.f32 %v894, %v3913
      %v4551 = vmul.f32 %v898, %v3913
      %v4552 = vmul.f32 %v902, %v3913
      %v4553 = vmul.f32 %v906, %v3913
      %v4554 = vmul.f32 %v913, %v3917
      %v4555 = vmul.f32 %v917, %v3917
      %v4556 = vmul.f32 %v921, %v3917
      %v4557 = vmul.f32 %v925, %v3917
      %v4558 = vmul.f32 %v932, %v3921
      %v4559 = vmul.f32 %v936, %v3921
      %v4560 = vmul.f32 %v940, %v3921
      %v4561 = vmul.f32 %v944, %v3921
      %v4562 = vmul.f32 %v951, %v3925
      %v4563 = vmul.f32 %v955, %v3925
      %v4564 = vmul.f32 %v959, %v3925
      %v4565 = vmul.f32 %v963, %v3925
      %v4566 = vmul.f32 %v970, %v3929
      %v4567 = vmul.f32 %v974, %v3929
      %v4568 = vmul.f32 %v978, %v3929
      %v4569 = vmul.f32 %v982, %v3929
      %v4570 = vmul.f32 %v989, %v3933
      %v4571 = vmul.f32 %v993, %v3933
      %v4572 = vmul.f32 %v997, %v3933
      %v4573 = vmul.f32 %v1001, %v3933
      %v4574 = vmul.f32 %v1008, %v3937
      %v4575 = vmul.f32 %v1012, %v3937
      %v4576 = vmul.f32 %v1016, %v3937
      %v4577 = vmul.f32 %v1020, %v3937
      %v4578 = vmul.f32 %v1027, %v3941
      %v4579 = vmul.f32 %v1031, %v3941
      %v4580 = vmul.f32 %v1035, %v3941
      %v4581 = vmul.f32 %v1039, %v3941
      %v4582 = vmul.f32 %v1046, %v3945
      %v4583 = vmul.f32 %v1050, %v3945
      %v4584 = vmul.f32 %v1054, %v3945
      %v4585 = vmul.f32 %v1058, %v3945
      %v4586 = vmul.f32 %v1065, %v3949
      %v4587 = vmul.f32 %v1069, %v3949
      %v4588 = vmul.f32 %v1073, %v3949
      %v4589 = vmul.f32 %v1077, %v3949
      %v4590 = vmul.f32 %v1084, %v3953
      %v4591 = vmul.f32 %v1088, %v3953
      %v4592 = vmul.f32 %v1092, %v3953
      %v4593 = vmul.f32 %v1096, %v3953
      %v4594 = vmul.f32 %v1103, %v3957
      %v4595 = vmul.f32 %v1107, %v3957
      %v4596 = vmul.f32 %v1111, %v3957
      %v4597 = vmul.f32 %v1115, %v3957
      %v4598 = vmul.f32 %v1122, %v3961
      %v4599 = vmul.f32 %v1126, %v3961
      %v4600 = vmul.f32 %v1130, %v3961
      %v4601 = vmul.f32 %v1134, %v3961
      %v4602 = vmul.f32 %v1141, %v3965
      %v4603 = vmul.f32 %v1145, %v3965
      %v4604 = vmul.f32 %v1149, %v3965
      %v4605 = vmul.f32 %v1153, %v3965
      %v4606 = vmul.f32 %v1160, %v3969
      %v4607 = vmul.f32 %v1164, %v3969
      %v4608 = vmul.f32 %v1168, %v3969
      %v4609 = vmul.f32 %v1172, %v3969
      %v4610 = vmul.f32 %v1179, %v3973
      %v4611 = vmul.f32 %v1183, %v3973
      %v4612 = vmul.f32 %v1187, %v3973
      %v4613 = vmul.f32 %v1191, %v3973
      %v4614 = vmul.f32 %v1198, %v3977
      %v4615 = vmul.f32 %v1202, %v3977
      %v4616 = vmul.f32 %v1206, %v3977
      %v4617 = vmul.f32 %v1210, %v3977
      %v4618 = vmul.f32 %v1217, %v3981
      %v4619 = vmul.f32 %v1221, %v3981
      %v4620 = vmul.f32 %v1225, %v3981
      %v4621 = vmul.f32 %v1229, %v3981
      %v4622 = vmul.f32 %v1236, %v3985
      %v4623 = vmul.f32 %v1240, %v3985
      %v4624 = vmul.f32 %v1244, %v3985
      %v4625 = vmul.f32 %v1248, %v3985
      %v4626 = vmul.f32 %v1255, %v3989
      %v4627 = vmul.f32 %v1259, %v3989
      %v4628 = vmul.f32 %v1263, %v3989
      %v4629 = vmul.f32 %v1267, %v3989
      %v4630 = vmul.f32 %v1274, %v3993
      %v4631 = vmul.f32 %v1278, %v3993
      %v4632 = vmul.f32 %v1282, %v3993
      %v4633 = vmul.f32 %v1286, %v3993
      %v4634 = vmul.f32 %v1293, %v3997
      %v4635 = vmul.f32 %v1297, %v3997
      %v4636 = vmul.f32 %v1301, %v3997
      %v4637 = vmul.f32 %v1305, %v3997
      %v4638 = vmul.f32 %v1312, %v4001
      %v4639 = vmul.f32 %v1316, %v4001
      %v4640 = vmul.f32 %v1320, %v4001
      %v4641 = vmul.f32 %v1324, %v4001
      %v4642 = vmul.f32 %v1331, %v4005
      %v4643 = vmul.f32 %v1335, %v4005
      %v4644 = vmul.f32 %v1339, %v4005
      %v4645 = vmul.f32 %v1343, %v4005
      %v4646 = vmul.f32 %v1350, %v4009
      %v4647 = vmul.f32 %v1354, %v4009
      %v4648 = vmul.f32 %v1358, %v4009
      %v4649 = vmul.f32 %v1362, %v4009
      %v4650 = vmul.f32 %v1369, %v4013
      %v4651 = vmul.f32 %v1373, %v4013
      %v4652 = vmul.f32 %v1377, %v4013
      %v4653 = vmul.f32 %v1381, %v4013
      %v4654 = vmul.f32 %v1388, %v4017
      %v4655 = vmul.f32 %v1392, %v4017
      %v4656 = vmul.f32 %v1396, %v4017
      %v4657 = vmul.f32 %v1400, %v4017
      %v4658 = vmul.f32 %v1407, %v4021
      %v4659 = vmul.f32 %v1411, %v4021
      %v4660 = vmul.f32 %v1415, %v4021
      %v4661 = vmul.f32 %v1419, %v4021
      %v4662 = vmul.f32 %v1426, %v4025
      %v4663 = vmul.f32 %v1430, %v4025
      %v4664 = vmul.f32 %v1434, %v4025
      %v4665 = vmul.f32 %v1438, %v4025
      %v4666 = vmul.f32 %v1445, %v4029
      %v4667 = vmul.f32 %v1449, %v4029
      %v4668 = vmul.f32 %v1453, %v4029
      %v4669 = vmul.f32 %v1457, %v4029
      %v4670 = vmul.f32 %v1464, %v4033
      %v4671 = vmul.f32 %v1468, %v4033
      %v4672 = vmul.f32 %v1472, %v4033
      %v4673 = vmul.f32 %v1476, %v4033
      %v4674 = vmul.f32 %v1483, %v4037
      %v4675 = vmul.f32 %v1487, %v4037
      %v4676 = vmul.f32 %v1491, %v4037
      %v4677 = vmul.f32 %v1495, %v4037
      %v4678 = vmul.f32 %v1502, %v4041
      %v4679 = vmul.f32 %v1506, %v4041
      %v4680 = vmul.f32 %v1510, %v4041
      %v4681 = vmul.f32 %v1514, %v4041
      %v4682 = vmul.f32 %v1521, %v4045
      %v4683 = vmul.f32 %v1525, %v4045
      %v4684 = vmul.f32 %v1529, %v4045
      %v4685 = vmul.f32 %v1533, %v4045
      %v4686 = vmul.f32 %v1540, %v4049
      %v4687 = vmul.f32 %v1544, %v4049
      %v4688 = vmul.f32 %v1548, %v4049
      %v4689 = vmul.f32 %v1552, %v4049
      %v4690 = vmul.f32 %v1559, %v4053
      %v4691 = vmul.f32 %v1563, %v4053
      %v4692 = vmul.f32 %v1567, %v4053
      %v4693 = vmul.f32 %v1571, %v4053
      %v4694 = vmul.f32 %v1578, %v4057
      %v4695 = vmul.f32 %v1582, %v4057
      %v4696 = vmul.f32 %v1586, %v4057
      %v4697 = vmul.f32 %v1590, %v4057
      %v4698 = vmul.f32 %v1597, %v4061
      %v4699 = vmul.f32 %v1601, %v4061
      %v4700 = vmul.f32 %v1605, %v4061
      %v4701 = vmul.f32 %v1609, %v4061
      %v4702 = vmul.f32 %v1616, %v4065
      %v4703 = vmul.f32 %v1620, %v4065
      %v4704 = vmul.f32 %v1624, %v4065
      %v4705 = vmul.f32 %v1628, %v4065
      %v4706 = vmul.f32 %v1635, %v4069
      %v4707 = vmul.f32 %v1639, %v4069
      %v4708 = vmul.f32 %v1643, %v4069
      %v4709 = vmul.f32 %v1647, %v4069
      %v4710 = vmul.f32 %v1654, %v4073
      %v4711 = vmul.f32 %v1658, %v4073
      %v4712 = vmul.f32 %v1662, %v4073
      %v4713 = vmul.f32 %v1666, %v4073
      %v4714 = vmul.f32 %v1673, %v4077
      %v4715 = vmul.f32 %v1677, %v4077
      %v4716 = vmul.f32 %v1681, %v4077
      %v4717 = vmul.f32 %v1685, %v4077
      %v4718 = vmul.f32 %v1692, %v4081
      %v4719 = vmul.f32 %v1696, %v4081
      %v4720 = vmul.f32 %v1700, %v4081
      %v4721 = vmul.f32 %v1704, %v4081
      %v4722 = vmul.f32 %v1711, %v4085
      %v4723 = vmul.f32 %v1715, %v4085
      %v4724 = vmul.f32 %v1719, %v4085
      %v4725 = vmul.f32 %v1723, %v4085
      %v4726 = vmul.f32 %v1730, %v4089
      %v4727 = vmul.f32 %v1734, %v4089
      %v4728 = vmul.f32 %v1738, %v4089
      %v4729 = vmul.f32 %v1742, %v4089
      %v4730 = vmul.f32 %v1749, %v4093
      %v4731 = vmul.f32 %v1753, %v4093
      %v4732 = vmul.f32 %v1757, %v4093
      %v4733 = vmul.f32 %v1761, %v4093
      %v4734 = vmul.f32 %v1768, %v4097
      %v4735 = vmul.f32 %v1772, %v4097
      %v4736 = vmul.f32 %v1776, %v4097
      %v4737 = vmul.f32 %v1780, %v4097
      %v4738 = vmul.f32 %v1787, %v4101
      %v4739 = vmul.f32 %v1791, %v4101
      %v4740 = vmul.f32 %v1795, %v4101
      %v4741 = vmul.f32 %v1799, %v4101
      %v4742 = vmul.f32 %v1806, %v4105
      %v4743 = vmul.f32 %v1810, %v4105
      %v4744 = vmul.f32 %v1814, %v4105
      %v4745 = vmul.f32 %v1818, %v4105
      %v4746 = vmul.f32 %v1825, %v4109
      %v4747 = vmul.f32 %v1829, %v4109
      %v4748 = vmul.f32 %v1833, %v4109
      %v4749 = vmul.f32 %v1837, %v4109
      %v4750 = vmul.f32 %v1844, %v4113
      %v4751 = vmul.f32 %v1848, %v4113
      %v4752 = vmul.f32 %v1852, %v4113
      %v4753 = vmul.f32 %v1856, %v4113
      %v4754 = vmul.f32 %v1863, %v4117
      %v4755 = vmul.f32 %v1867, %v4117
      %v4756 = vmul.f32 %v1871, %v4117
      %v4757 = vmul.f32 %v1875, %v4117
      %v4758 = vmul.f32 %v1882, %v4121
      %v4759 = vmul.f32 %v1886, %v4121
      %v4760 = vmul.f32 %v1890, %v4121
      %v4761 = vmul.f32 %v1894, %v4121
      %v4762 = vmul.f32 %v1901, %v4125
      %v4763 = vmul.f32 %v1905, %v4125
      %v4764 = vmul.f32 %v1909, %v4125
      %v4765 = vmul.f32 %v1913, %v4125
      %v4766 = vmul.f32 %v1920, %v4129
      %v4767 = vmul.f32 %v1924, %v4129
      %v4768 = vmul.f32 %v1928, %v4129
      %v4769 = vmul.f32 %v1932, %v4129
      %v4770 = vmul.f32 %v1939, %v4133
      %v4771 = vmul.f32 %v1943, %v4133
      %v4772 = vmul.f32 %v1947, %v4133
      %v4773 = vmul.f32 %v1951, %v4133
      %v4774 = vmul.f32 %v1958, %v4137
      %v4775 = vmul.f32 %v1962, %v4137
      %v4776 = vmul.f32 %v1966, %v4137
      %v4777 = vmul.f32 %v1970, %v4137
      %v4778 = vmul.f32 %v1977, %v4141
      %v4779 = vmul.f32 %v1981, %v4141
      %v4780 = vmul.f32 %v1985, %v4141
      %v4781 = vmul.f32 %v1989, %v4141
      %v4782 = vmul.f32 %v1996, %v4145
      %v4783 = vmul.f32 %v2000, %v4145
      %v4784 = vmul.f32 %v2004, %v4145
      %v4785 = vmul.f32 %v2008, %v4145
      %v4786 = vmul.f32 %v2015, %v4149
      %v4787 = vmul.f32 %v2019, %v4149
      %v4788 = vmul.f32 %v2023, %v4149
      %v4789 = vmul.f32 %v2027, %v4149
      %v4790 = vmul.f32 %v2034, %v4153
      %v4791 = vmul.f32 %v2038, %v4153
      %v4792 = vmul.f32 %v2042, %v4153
      %v4793 = vmul.f32 %v2046, %v4153
      %v4794 = vmul.f32 %v2053, %v4157
      %v4795 = vmul.f32 %v2057, %v4157
      %v4796 = vmul.f32 %v2061, %v4157
      %v4797 = vmul.f32 %v2065, %v4157
      %v4798 = vmul.f32 %v2072, %v4161
      %v4799 = vmul.f32 %v2076, %v4161
      %v4800 = vmul.f32 %v2080, %v4161
      %v4801 = vmul.f32 %v2084, %v4161
      %v4802 = vmul.f32 %v2091, %v4165
      %v4803 = vmul.f32 %v2095, %v4165
      %v4804 = vmul.f32 %v2099, %v4165
      %v4805 = vmul.f32 %v2103, %v4165
      %v4806 = vmul.f32 %v2110, %v4169
      %v4807 = vmul.f32 %v2114, %v4169
      %v4808 = vmul.f32 %v2118, %v4169
      %v4809 = vmul.f32 %v2122, %v4169
      %v4810 = vmul.f32 %v2129, %v4173
      %v4811 = vmul.f32 %v2133, %v4173
      %v4812 = vmul.f32 %v2137, %v4173
      %v4813 = vmul.f32 %v2141, %v4173
      %v4814 = vmul.f32 %v2148, %v4177
      %v4815 = vmul.f32 %v2152, %v4177
      %v4816 = vmul.f32 %v2156, %v4177
      %v4817 = vmul.f32 %v2160, %v4177
      %v4818 = vmul.f32 %v2167, %v4181
      %v4819 = vmul.f32 %v2171, %v4181
      %v4820 = vmul.f32 %v2175, %v4181
      %v4821 = vmul.f32 %v2179, %v4181
      %v4822 = vmul.f32 %v2186, %v4185
      %v4823 = vmul.f32 %v2190, %v4185
      %v4824 = vmul.f32 %v2194, %v4185
      %v4825 = vmul.f32 %v2198, %v4185
      %v4826 = vmul.f32 %v2205, %v4189
      %v4827 = vmul.f32 %v2209, %v4189
      %v4828 = vmul.f32 %v2213, %v4189
      %v4829 = vmul.f32 %v2217, %v4189
      %v4830 = vmul.f32 %v2224, %v4193
      %v4831 = vmul.f32 %v2228, %v4193
      %v4832 = vmul.f32 %v2232, %v4193
      %v4833 = vmul.f32 %v2236, %v4193
      %v4834 = vmul.f32 %v2243, %v4197
      %v4835 = vmul.f32 %v2247, %v4197
      %v4836 = vmul.f32 %v2251, %v4197
      %v4837 = vmul.f32 %v2255, %v4197
      %v4838 = vmul.f32 %v2262, %v4201
      %v4839 = vmul.f32 %v2266, %v4201
      %v4840 = vmul.f32 %v2270, %v4201
      %v4841 = vmul.f32 %v2274, %v4201
      %v4842 = vmul.f32 %v2281, %v4205
      %v4843 = vmul.f32 %v2285, %v4205
      %v4844 = vmul.f32 %v2289, %v4205
      %v4845 = vmul.f32 %v2293, %v4205
      %v4846 = vmul.f32 %v2300, %v4209
      %v4847 = vmul.f32 %v2304, %v4209
      %v4848 = vmul.f32 %v2308, %v4209
      %v4849 = vmul.f32 %v2312, %v4209
      %v4850 = vmul.f32 %v2319, %v4213
      %v4851 = vmul.f32 %v2323, %v4213
      %v4852 = vmul.f32 %v2327, %v4213
      %v4853 = vmul.f32 %v2331, %v4213
      %v4854 = vmul.f32 %v2338, %v4217
      %v4855 = vmul.f32 %v2342, %v4217
      %v4856 = vmul.f32 %v2346, %v4217
      %v4857 = vmul.f32 %v2350, %v4217
      %v4858 = vmul.f32 %v2357, %v4221
      %v4859 = vmul.f32 %v2361, %v4221
      %v4860 = vmul.f32 %v2365, %v4221
      %v4861 = vmul.f32 %v2369, %v4221
      %v4862 = vmul.f32 %v2376, %v4225
      %v4863 = vmul.f32 %v2380, %v4225
      %v4864 = vmul.f32 %v2384, %v4225
      %v4865 = vmul.f32 %v2388, %v4225
      %v4866 = vmul.f32 %v2395, %v4229
      %v4867 = vmul.f32 %v2399, %v4229
      %v4868 = vmul.f32 %v2403, %v4229
      %v4869 = vmul.f32 %v2407, %v4229
      %v4870 = vmul.f32 %v2414, %v4233
      %v4871 = vmul.f32 %v2418, %v4233
      %v4872 = vmul.f32 %v2422, %v4233
      %v4873 = vmul.f32 %v2426, %v4233
      %v4874 = vmul.f32 %v2433, %v4237
      %v4875 = vmul.f32 %v2437, %v4237
      %v4876 = vmul.f32 %v2441, %v4237
      %v4877 = vmul.f32 %v2445, %v4237
      %v4878 = vmul.f32 %v2452, %v4241
      %v4879 = vmul.f32 %v2456, %v4241
      %v4880 = vmul.f32 %v2460, %v4241
      %v4881 = vmul.f32 %v2464, %v4241
      %v4882 = vmul.f32 %v2471, %v4245
      %v4883 = vmul.f32 %v2475, %v4245
      %v4884 = vmul.f32 %v2479, %v4245
      %v4885 = vmul.f32 %v2483, %v4245
      %v4886 = vmul.f32 %v2490, %v4249
      %v4887 = vmul.f32 %v2494, %v4249
      %v4888 = vmul.f32 %v2498, %v4249
      %v4889 = vmul.f32 %v2502, %v4249
      %v4890 = vmul.f32 %v2509, %v4253
      %v4891 = vmul.f32 %v2513, %v4253
      %v4892 = vmul.f32 %v2517, %v4253
      %v4893 = vmul.f32 %v2521, %v4253
      %v4894 = vmul.f32 %v2528, %v4257
      %v4895 = vmul.f32 %v2532, %v4257
      %v4896 = vmul.f32 %v2536, %v4257
      %v4897 = vmul.f32 %v2540, %v4257
      %v4898 = vmul.f32 %v2547, %v4261
      %v4899 = vmul.f32 %v2551, %v4261
      %v4900 = vmul.f32 %v2555, %v4261
      %v4901 = vmul.f32 %v2559, %v4261
      %v4902 = vmul.f32 %v2566, %v4265
      %v4903 = vmul.f32 %v2570, %v4265
      %v4904 = vmul.f32 %v2574, %v4265
      %v4905 = vmul.f32 %v2578, %v4265
      %v4906 = vmul.f32 %v2585, %v4269
      %v4907 = vmul.f32 %v2589, %v4269
      %v4908 = vmul.f32 %v2593, %v4269
      %v4909 = vmul.f32 %v2597, %v4269
      %v4910 = vmul.f32 %v2604, %v4273
      %v4911 = vmul.f32 %v2608, %v4273
      %v4912 = vmul.f32 %v2612, %v4273
      %v4913 = vmul.f32 %v2616, %v4273
      %v4914 = vmul.f32 %v2623, %v4277
      %v4915 = vmul.f32 %v2627, %v4277
      %v4916 = vmul.f32 %v2631, %v4277
      %v4917 = vmul.f32 %v2635, %v4277
      %v4918 = vmul.f32 %v2642, %v4281
      %v4919 = vmul.f32 %v2646, %v4281
      %v4920 = vmul.f32 %v2650, %v4281
      %v4921 = vmul.f32 %v2654, %v4281
      %v4922 = vmul.f32 %v2661, %v4285
      %v4923 = vmul.f32 %v2665, %v4285
      %v4924 = vmul.f32 %v2669, %v4285
      %v4925 = vmul.f32 %v2673, %v4285
      %v4926 = vmul.f32 %v2680, %v4289
      %v4927 = vmul.f32 %v2684, %v4289
      %v4928 = vmul.f32 %v2688, %v4289
      %v4929 = vmul.f32 %v2692, %v4289
      %v4930 = vmul.f32 %v2699, %v4293
      %v4931 = vmul.f32 %v2703, %v4293
      %v4932 = vmul.f32 %v2707, %v4293
      %v4933 = vmul.f32 %v2711, %v4293
      %v4934 = vmul.f32 %v2718, %v4297
      %v4935 = vmul.f32 %v2722, %v4297
      %v4936 = vmul.f32 %v2726, %v4297
      %v4937 = vmul.f32 %v2730, %v4297
      %v4938 = vmul.f32 %v2737, %v4301
      %v4939 = vmul.f32 %v2741, %v4301
      %v4940 = vmul.f32 %v2745, %v4301
      %v4941 = vmul.f32 %v2749, %v4301
      %v4942 = vmul.f32 %v2756, %v4305
      %v4943 = vmul.f32 %v2760, %v4305
      %v4944 = vmul.f32 %v2764, %v4305
      %v4945 = vmul.f32 %v2768, %v4305
      %v4946 = vmul.f32 %v2775, %v4309
      %v4947 = vmul.f32 %v2779, %v4309
      %v4948 = vmul.f32 %v2783, %v4309
      %v4949 = vmul.f32 %v2787, %v4309
      %v4950 = vmul.f32 %v2794, %v4313
      %v4951 = vmul.f32 %v2798, %v4313
      %v4952 = vmul.f32 %v2802, %v4313
      %v4953 = vmul.f32 %v2806, %v4313
      %v4954 = vmul.f32 %v2813, %v4317
      %v4955 = vmul.f32 %v2817, %v4317
      %v4956 = vmul.f32 %v2821, %v4317
      %v4957 = vmul.f32 %v2825, %v4317
      %v4958 = vmul.f32 %v2832, %v4321
      %v4959 = vmul.f32 %v2836, %v4321
      %v4960 = vmul.f32 %v2840, %v4321
      %v4961 = vmul.f32 %v2844, %v4321
      %v4962 = vmul.f32 %v2851, %v4325
      %v4963 = vmul.f32 %v2855, %v4325
      %v4964 = vmul.f32 %v2859, %v4325
      %v4965 = vmul.f32 %v2863, %v4325
      %v4966 = vmul.f32 %v2870, %v4329
      %v4967 = vmul.f32 %v2874, %v4329
      %v4968 = vmul.f32 %v2878, %v4329
      %v4969 = vmul.f32 %v2882, %v4329
      %v4970 = vmul.f32 %v2889, %v4333
      %v4971 = vmul.f32 %v2893, %v4333
      %v4972 = vmul.f32 %v2897, %v4333
      %v4973 = vmul.f32 %v2901, %v4333
      %v4974 = vmul.f32 %v2908, %v4337
      %v4975 = vmul.f32 %v2912, %v4337
      %v4976 = vmul.f32 %v2916, %v4337
      %v4977 = vmul.f32 %v2920, %v4337
      %v4978 = vmul.f32 %v2927, %v4341
      %v4979 = vmul.f32 %v2931, %v4341
      %v4980 = vmul.f32 %v2935, %v4341
      %v4981 = vmul.f32 %v2939, %v4341
      %v4982 = vmul.f32 %v2946, %v4345
      %v4983 = vmul.f32 %v2950, %v4345
      %v4984 = vmul.f32 %v2954, %v4345
      %v4985 = vmul.f32 %v2958, %v4345
      %v4986 = vmul.f32 %v2965, %v4349
      %v4987 = vmul.f32 %v2969, %v4349
      %v4988 = vmul.f32 %v2973, %v4349
      %v4989 = vmul.f32 %v2977, %v4349
      %v4990 = vmul.f32 %v2984, %v4353
      %v4991 = vmul.f32 %v2988, %v4353
      %v4992 = vmul.f32 %v2992, %v4353
      %v4993 = vmul.f32 %v2996, %v4353
      %v4994 = vmul.f32 %v3003, %v4357
      %v4995 = vmul.f32 %v3007, %v4357
      %v4996 = vmul.f32 %v3011, %v4357
      %v4997 = vmul.f32 %v3015, %v4357
      %v4998 = vmul.f32 %v3022, %v4361
      %v4999 = vmul.f32 %v3026, %v4361
      %v5000 = vmul.f32 %v3030, %v4361
      %v5001 = vmul.f32 %v3034, %v4361
      %v5002 = vmul.f32 %v3041, %v4365
      %v5003 = vmul.f32 %v3045, %v4365
      %v5004 = vmul.f32 %v3049, %v4365
      %v5005 = vmul.f32 %v3053, %v4365
      %v5006 = vsel %vm282, %v4494, -inf
      %v5007 = vsel %vm282, %v4498, -inf
      %v5008 = vmax.f32 %v5006, %v5007
      %v5009 = vsel %vm282, %v4502, -inf
      %v5010 = vmax.f32 %v5008, %v5009
      %v5011 = vsel %vm282, %v4506, -inf
      %v5012 = vmax.f32 %v5010, %v5011
      %v5013 = vsel %vm282, %v4510, -inf
      %v5014 = vmax.f32 %v5012, %v5013
      %v5015 = vsel %vm282, %v4514, -inf
      %v5016 = vmax.f32 %v5014, %v5015
      %v5017 = vsel %vm282, %v4518, -inf
      %v5018 = vmax.f32 %v5016, %v5017
      %v5019 = vsel %vm282, %v4522, -inf
      %v5020 = vmax.f32 %v5018, %v5019
      %v5021 = vsel %vm282, %v4526, -inf
      %v5022 = vmax.f32 %v5020, %v5021
      %v5023 = vsel %vm282, %v4530, -inf
      %v5024 = vmax.f32 %v5022, %v5023
      %v5025 = vsel %vm282, %v4534, -inf
      %v5026 = vmax.f32 %v5024, %v5025
      %v5027 = vsel %vm282, %v4538, -inf
      %v5028 = vmax.f32 %v5026, %v5027
      %v5029 = vsel %vm282, %v4542, -inf
      %v5030 = vmax.f32 %v5028, %v5029
      %v5031 = vsel %vm282, %v4546, -inf
      %v5032 = vmax.f32 %v5030, %v5031
      %v5033 = vsel %vm282, %v4550, -inf
      %v5034 = vmax.f32 %v5032, %v5033
      %v5035 = vsel %vm282, %v4554, -inf
      %v5036 = vmax.f32 %v5034, %v5035
      %v5037 = vsel %vm282, %v4558, -inf
      %v5038 = vmax.f32 %v5036, %v5037
      %v5039 = vsel %vm282, %v4562, -inf
      %v5040 = vmax.f32 %v5038, %v5039
      %v5041 = vsel %vm282, %v4566, -inf
      %v5042 = vmax.f32 %v5040, %v5041
      %v5043 = vsel %vm282, %v4570, -inf
      %v5044 = vmax.f32 %v5042, %v5043
      %v5045 = vsel %vm282, %v4574, -inf
      %v5046 = vmax.f32 %v5044, %v5045
      %v5047 = vsel %vm282, %v4578, -inf
      %v5048 = vmax.f32 %v5046, %v5047
      %v5049 = vsel %vm282, %v4582, -inf
      %v5050 = vmax.f32 %v5048, %v5049
      %v5051 = vsel %vm282, %v4586, -inf
      %v5052 = vmax.f32 %v5050, %v5051
      %v5053 = vsel %vm282, %v4590, -inf
      %v5054 = vmax.f32 %v5052, %v5053
      %v5055 = vsel %vm282, %v4594, -inf
      %v5056 = vmax.f32 %v5054, %v5055
      %v5057 = vsel %vm282, %v4598, -inf
      %v5058 = vmax.f32 %v5056, %v5057
      %v5059 = vsel %vm282, %v4602, -inf
      %v5060 = vmax.f32 %v5058, %v5059
      %v5061 = vsel %vm282, %v4606, -inf
      %v5062 = vmax.f32 %v5060, %v5061
      %v5063 = vsel %vm282, %v4610, -inf
      %v5064 = vmax.f32 %v5062, %v5063
      %v5065 = vsel %vm282, %v4614, -inf
      %v5066 = vmax.f32 %v5064, %v5065
      %v5067 = vsel %vm282, %v4618, -inf
      %v5068 = vmax.f32 %v5066, %v5067
      %v5069 = vsel %vm282, %v4622, -inf
      %v5070 = vmax.f32 %v5068, %v5069
      %v5071 = vsel %vm282, %v4626, -inf
      %v5072 = vmax.f32 %v5070, %v5071
      %v5073 = vsel %vm282, %v4630, -inf
      %v5074 = vmax.f32 %v5072, %v5073
      %v5075 = vsel %vm282, %v4634, -inf
      %v5076 = vmax.f32 %v5074, %v5075
      %v5077 = vsel %vm282, %v4638, -inf
      %v5078 = vmax.f32 %v5076, %v5077
      %v5079 = vsel %vm282, %v4642, -inf
      %v5080 = vmax.f32 %v5078, %v5079
      %v5081 = vsel %vm282, %v4646, -inf
      %v5082 = vmax.f32 %v5080, %v5081
      %v5083 = vsel %vm282, %v4650, -inf
      %v5084 = vmax.f32 %v5082, %v5083
      %v5085 = vsel %vm282, %v4654, -inf
      %v5086 = vmax.f32 %v5084, %v5085
      %v5087 = vsel %vm282, %v4658, -inf
      %v5088 = vmax.f32 %v5086, %v5087
      %v5089 = vsel %vm282, %v4662, -inf
      %v5090 = vmax.f32 %v5088, %v5089
      %v5091 = vsel %vm282, %v4666, -inf
      %v5092 = vmax.f32 %v5090, %v5091
      %v5093 = vsel %vm282, %v4670, -inf
      %v5094 = vmax.f32 %v5092, %v5093
      %v5095 = vsel %vm282, %v4674, -inf
      %v5096 = vmax.f32 %v5094, %v5095
      %v5097 = vsel %vm282, %v4678, -inf
      %v5098 = vmax.f32 %v5096, %v5097
      %v5099 = vsel %vm282, %v4682, -inf
      %v5100 = vmax.f32 %v5098, %v5099
      %v5101 = vsel %vm282, %v4686, -inf
      %v5102 = vmax.f32 %v5100, %v5101
      %v5103 = vsel %vm282, %v4690, -inf
      %v5104 = vmax.f32 %v5102, %v5103
      %v5105 = vsel %vm282, %v4694, -inf
      %v5106 = vmax.f32 %v5104, %v5105
      %v5107 = vsel %vm282, %v4698, -inf
      %v5108 = vmax.f32 %v5106, %v5107
      %v5109 = vsel %vm282, %v4702, -inf
      %v5110 = vmax.f32 %v5108, %v5109
      %v5111 = vsel %vm282, %v4706, -inf
      %v5112 = vmax.f32 %v5110, %v5111
      %v5113 = vsel %vm282, %v4710, -inf
      %v5114 = vmax.f32 %v5112, %v5113
      %v5115 = vsel %vm282, %v4714, -inf
      %v5116 = vmax.f32 %v5114, %v5115
      %v5117 = vsel %vm282, %v4718, -inf
      %v5118 = vmax.f32 %v5116, %v5117
      %v5119 = vsel %vm282, %v4722, -inf
      %v5120 = vmax.f32 %v5118, %v5119
      %v5121 = vsel %vm282, %v4726, -inf
      %v5122 = vmax.f32 %v5120, %v5121
      %v5123 = vsel %vm282, %v4730, -inf
      %v5124 = vmax.f32 %v5122, %v5123
      %v5125 = vsel %vm282, %v4734, -inf
      %v5126 = vmax.f32 %v5124, %v5125
      %v5127 = vsel %vm282, %v4738, -inf
      %v5128 = vmax.f32 %v5126, %v5127
      %v5129 = vsel %vm282, %v4742, -inf
      %v5130 = vmax.f32 %v5128, %v5129
      %v5131 = vsel %vm282, %v4746, -inf
      %v5132 = vmax.f32 %v5130, %v5131
      %v5133 = vsel %vm282, %v4750, -inf
      %v5134 = vmax.f32 %v5132, %v5133
      %v5135 = vsel %vm282, %v4754, -inf
      %v5136 = vmax.f32 %v5134, %v5135
      %v5137 = vsel %vm282, %v4758, -inf
      %v5138 = vmax.f32 %v5136, %v5137
      %v5139 = vsel %vm282, %v4762, -inf
      %v5140 = vmax.f32 %v5138, %v5139
      %v5141 = vsel %vm282, %v4766, -inf
      %v5142 = vmax.f32 %v5140, %v5141
      %v5143 = vsel %vm282, %v4770, -inf
      %v5144 = vmax.f32 %v5142, %v5143
      %v5145 = vsel %vm282, %v4774, -inf
      %v5146 = vmax.f32 %v5144, %v5145
      %v5147 = vsel %vm282, %v4778, -inf
      %v5148 = vmax.f32 %v5146, %v5147
      %v5149 = vsel %vm282, %v4782, -inf
      %v5150 = vmax.f32 %v5148, %v5149
      %v5151 = vsel %vm282, %v4786, -inf
      %v5152 = vmax.f32 %v5150, %v5151
      %v5153 = vsel %vm282, %v4790, -inf
      %v5154 = vmax.f32 %v5152, %v5153
      %v5155 = vsel %vm282, %v4794, -inf
      %v5156 = vmax.f32 %v5154, %v5155
      %v5157 = vsel %vm282, %v4798, -inf
      %v5158 = vmax.f32 %v5156, %v5157
      %v5159 = vsel %vm282, %v4802, -inf
      %v5160 = vmax.f32 %v5158, %v5159
      %v5161 = vsel %vm282, %v4806, -inf
      %v5162 = vmax.f32 %v5160, %v5161
      %v5163 = vsel %vm282, %v4810, -inf
      %v5164 = vmax.f32 %v5162, %v5163
      %v5165 = vsel %vm282, %v4814, -inf
      %v5166 = vmax.f32 %v5164, %v5165
      %v5167 = vsel %vm282, %v4818, -inf
      %v5168 = vmax.f32 %v5166, %v5167
      %v5169 = vsel %vm282, %v4822, -inf
      %v5170 = vmax.f32 %v5168, %v5169
      %v5171 = vsel %vm282, %v4826, -inf
      %v5172 = vmax.f32 %v5170, %v5171
      %v5173 = vsel %vm282, %v4830, -inf
      %v5174 = vmax.f32 %v5172, %v5173
      %v5175 = vsel %vm282, %v4834, -inf
      %v5176 = vmax.f32 %v5174, %v5175
      %v5177 = vsel %vm282, %v4838, -inf
      %v5178 = vmax.f32 %v5176, %v5177
      %v5179 = vsel %vm282, %v4842, -inf
      %v5180 = vmax.f32 %v5178, %v5179
      %v5181 = vsel %vm282, %v4846, -inf
      %v5182 = vmax.f32 %v5180, %v5181
      %v5183 = vsel %vm282, %v4850, -inf
      %v5184 = vmax.f32 %v5182, %v5183
      %v5185 = vsel %vm282, %v4854, -inf
      %v5186 = vmax.f32 %v5184, %v5185
      %v5187 = vsel %vm282, %v4858, -inf
      %v5188 = vmax.f32 %v5186, %v5187
      %v5189 = vsel %vm282, %v4862, -inf
      %v5190 = vmax.f32 %v5188, %v5189
      %v5191 = vsel %vm282, %v4866, -inf
      %v5192 = vmax.f32 %v5190, %v5191
      %v5193 = vsel %vm282, %v4870, -inf
      %v5194 = vmax.f32 %v5192, %v5193
      %v5195 = vsel %vm282, %v4874, -inf
      %v5196 = vmax.f32 %v5194, %v5195
      %v5197 = vsel %vm282, %v4878, -inf
      %v5198 = vmax.f32 %v5196, %v5197
      %v5199 = vsel %vm282, %v4882, -inf
      %v5200 = vmax.f32 %v5198, %v5199
      %v5201 = vsel %vm282, %v4886, -inf
      %v5202 = vmax.f32 %v5200, %v5201
      %v5203 = vsel %vm282, %v4890, -inf
      %v5204 = vmax.f32 %v5202, %v5203
      %v5205 = vsel %vm282, %v4894, -inf
      %v5206 = vmax.f32 %v5204, %v5205
      %v5207 = vsel %vm282, %v4898, -inf
      %v5208 = vmax.f32 %v5206, %v5207
      %v5209 = vsel %vm282, %v4902, -inf
      %v5210 = vmax.f32 %v5208, %v5209
      %v5211 = vsel %vm282, %v4906, -inf
      %v5212 = vmax.f32 %v5210, %v5211
      %v5213 = vsel %vm282, %v4910, -inf
      %v5214 = vmax.f32 %v5212, %v5213
      %v5215 = vsel %vm282, %v4914, -inf
      %v5216 = vmax.f32 %v5214, %v5215
      %v5217 = vsel %vm282, %v4918, -inf
      %v5218 = vmax.f32 %v5216, %v5217
      %v5219 = vsel %vm282, %v4922, -inf
      %v5220 = vmax.f32 %v5218, %v5219
      %v5221 = vsel %vm282, %v4926, -inf
      %v5222 = vmax.f32 %v5220, %v5221
      %v5223 = vsel %vm282, %v4930, -inf
      %v5224 = vmax.f32 %v5222, %v5223
      %v5225 = vsel %vm282, %v4934, -inf
      %v5226 = vmax.f32 %v5224, %v5225
      %v5227 = vsel %vm282, %v4938, -inf
      %v5228 = vmax.f32 %v5226, %v5227
      %v5229 = vsel %vm282, %v4942, -inf
      %v5230 = vmax.f32 %v5228, %v5229
      %v5231 = vsel %vm282, %v4946, -inf
      %v5232 = vmax.f32 %v5230, %v5231
      %v5233 = vsel %vm282, %v4950, -inf
      %v5234 = vmax.f32 %v5232, %v5233
      %v5235 = vsel %vm282, %v4954, -inf
      %v5236 = vmax.f32 %v5234, %v5235
      %v5237 = vsel %vm282, %v4958, -inf
      %v5238 = vmax.f32 %v5236, %v5237
      %v5239 = vsel %vm282, %v4962, -inf
      %v5240 = vmax.f32 %v5238, %v5239
      %v5241 = vsel %vm282, %v4966, -inf
      %v5242 = vmax.f32 %v5240, %v5241
      %v5243 = vsel %vm282, %v4970, -inf
      %v5244 = vmax.f32 %v5242, %v5243
      %v5245 = vsel %vm282, %v4974, -inf
      %v5246 = vmax.f32 %v5244, %v5245
      %v5247 = vsel %vm282, %v4978, -inf
      %v5248 = vmax.f32 %v5246, %v5247
      %v5249 = vsel %vm282, %v4982, -inf
      %v5250 = vmax.f32 %v5248, %v5249
      %v5251 = vsel %vm282, %v4986, -inf
      %v5252 = vmax.f32 %v5250, %v5251
      %v5253 = vsel %vm282, %v4990, -inf
      %v5254 = vmax.f32 %v5252, %v5253
      %v5255 = vsel %vm282, %v4994, -inf
      %v5256 = vmax.f32 %v5254, %v5255
      %v5257 = vsel %vm282, %v4998, -inf
      %v5258 = vmax.f32 %v5256, %v5257
      %v5259 = vsel %vm282, %v5002, -inf
      %v5260 = vmax.f32 %v5258, %v5259
      %v5261 = vsel %vm282, %v4495, -inf
      %v5262 = vsel %vm282, %v4499, -inf
      %v5263 = vmax.f32 %v5261, %v5262
      %v5264 = vsel %vm282, %v4503, -inf
      %v5265 = vmax.f32 %v5263, %v5264
      %v5266 = vsel %vm282, %v4507, -inf
      %v5267 = vmax.f32 %v5265, %v5266
      %v5268 = vsel %vm282, %v4511, -inf
      %v5269 = vmax.f32 %v5267, %v5268
      %v5270 = vsel %vm282, %v4515, -inf
      %v5271 = vmax.f32 %v5269, %v5270
      %v5272 = vsel %vm282, %v4519, -inf
      %v5273 = vmax.f32 %v5271, %v5272
      %v5274 = vsel %vm282, %v4523, -inf
      %v5275 = vmax.f32 %v5273, %v5274
      %v5276 = vsel %vm282, %v4527, -inf
      %v5277 = vmax.f32 %v5275, %v5276
      %v5278 = vsel %vm282, %v4531, -inf
      %v5279 = vmax.f32 %v5277, %v5278
      %v5280 = vsel %vm282, %v4535, -inf
      %v5281 = vmax.f32 %v5279, %v5280
      %v5282 = vsel %vm282, %v4539, -inf
      %v5283 = vmax.f32 %v5281, %v5282
      %v5284 = vsel %vm282, %v4543, -inf
      %v5285 = vmax.f32 %v5283, %v5284
      %v5286 = vsel %vm282, %v4547, -inf
      %v5287 = vmax.f32 %v5285, %v5286
      %v5288 = vsel %vm282, %v4551, -inf
      %v5289 = vmax.f32 %v5287, %v5288
      %v5290 = vsel %vm282, %v4555, -inf
      %v5291 = vmax.f32 %v5289, %v5290
      %v5292 = vsel %vm282, %v4559, -inf
      %v5293 = vmax.f32 %v5291, %v5292
      %v5294 = vsel %vm282, %v4563, -inf
      %v5295 = vmax.f32 %v5293, %v5294
      %v5296 = vsel %vm282, %v4567, -inf
      %v5297 = vmax.f32 %v5295, %v5296
      %v5298 = vsel %vm282, %v4571, -inf
      %v5299 = vmax.f32 %v5297, %v5298
      %v5300 = vsel %vm282, %v4575, -inf
      %v5301 = vmax.f32 %v5299, %v5300
      %v5302 = vsel %vm282, %v4579, -inf
      %v5303 = vmax.f32 %v5301, %v5302
      %v5304 = vsel %vm282, %v4583, -inf
      %v5305 = vmax.f32 %v5303, %v5304
      %v5306 = vsel %vm282, %v4587, -inf
      %v5307 = vmax.f32 %v5305, %v5306
      %v5308 = vsel %vm282, %v4591, -inf
      %v5309 = vmax.f32 %v5307, %v5308
      %v5310 = vsel %vm282, %v4595, -inf
      %v5311 = vmax.f32 %v5309, %v5310
      %v5312 = vsel %vm282, %v4599, -inf
      %v5313 = vmax.f32 %v5311, %v5312
      %v5314 = vsel %vm282, %v4603, -inf
      %v5315 = vmax.f32 %v5313, %v5314
      %v5316 = vsel %vm282, %v4607, -inf
      %v5317 = vmax.f32 %v5315, %v5316
      %v5318 = vsel %vm282, %v4611, -inf
      %v5319 = vmax.f32 %v5317, %v5318
      %v5320 = vsel %vm282, %v4615, -inf
      %v5321 = vmax.f32 %v5319, %v5320
      %v5322 = vsel %vm282, %v4619, -inf
      %v5323 = vmax.f32 %v5321, %v5322
      %v5324 = vsel %vm282, %v4623, -inf
      %v5325 = vmax.f32 %v5323, %v5324
      %v5326 = vsel %vm282, %v4627, -inf
      %v5327 = vmax.f32 %v5325, %v5326
      %v5328 = vsel %vm282, %v4631, -inf
      %v5329 = vmax.f32 %v5327, %v5328
      %v5330 = vsel %vm282, %v4635, -inf
      %v5331 = vmax.f32 %v5329, %v5330
      %v5332 = vsel %vm282, %v4639, -inf
      %v5333 = vmax.f32 %v5331, %v5332
      %v5334 = vsel %vm282, %v4643, -inf
      %v5335 = vmax.f32 %v5333, %v5334
      %v5336 = vsel %vm282, %v4647, -inf
      %v5337 = vmax.f32 %v5335, %v5336
      %v5338 = vsel %vm282, %v4651, -inf
      %v5339 = vmax.f32 %v5337, %v5338
      %v5340 = vsel %vm282, %v4655, -inf
      %v5341 = vmax.f32 %v5339, %v5340
      %v5342 = vsel %vm282, %v4659, -inf
      %v5343 = vmax.f32 %v5341, %v5342
      %v5344 = vsel %vm282, %v4663, -inf
      %v5345 = vmax.f32 %v5343, %v5344
      %v5346 = vsel %vm282, %v4667, -inf
      %v5347 = vmax.f32 %v5345, %v5346
      %v5348 = vsel %vm282, %v4671, -inf
      %v5349 = vmax.f32 %v5347, %v5348
      %v5350 = vsel %vm282, %v4675, -inf
      %v5351 = vmax.f32 %v5349, %v5350
      %v5352 = vsel %vm282, %v4679, -inf
      %v5353 = vmax.f32 %v5351, %v5352
      %v5354 = vsel %vm282, %v4683, -inf
      %v5355 = vmax.f32 %v5353, %v5354
      %v5356 = vsel %vm282, %v4687, -inf
      %v5357 = vmax.f32 %v5355, %v5356
      %v5358 = vsel %vm282, %v4691, -inf
      %v5359 = vmax.f32 %v5357, %v5358
      %v5360 = vsel %vm282, %v4695, -inf
      %v5361 = vmax.f32 %v5359, %v5360
      %v5362 = vsel %vm282, %v4699, -inf
      %v5363 = vmax.f32 %v5361, %v5362
      %v5364 = vsel %vm282, %v4703, -inf
      %v5365 = vmax.f32 %v5363, %v5364
      %v5366 = vsel %vm282, %v4707, -inf
      %v5367 = vmax.f32 %v5365, %v5366
      %v5368 = vsel %vm282, %v4711, -inf
      %v5369 = vmax.f32 %v5367, %v5368
      %v5370 = vsel %vm282, %v4715, -inf
      %v5371 = vmax.f32 %v5369, %v5370
      %v5372 = vsel %vm282, %v4719, -inf
      %v5373 = vmax.f32 %v5371, %v5372
      %v5374 = vsel %vm282, %v4723, -inf
      %v5375 = vmax.f32 %v5373, %v5374
      %v5376 = vsel %vm282, %v4727, -inf
      %v5377 = vmax.f32 %v5375, %v5376
      %v5378 = vsel %vm282, %v4731, -inf
      %v5379 = vmax.f32 %v5377, %v5378
      %v5380 = vsel %vm282, %v4735, -inf
      %v5381 = vmax.f32 %v5379, %v5380
      %v5382 = vsel %vm282, %v4739, -inf
      %v5383 = vmax.f32 %v5381, %v5382
      %v5384 = vsel %vm282, %v4743, -inf
      %v5385 = vmax.f32 %v5383, %v5384
      %v5386 = vsel %vm282, %v4747, -inf
      %v5387 = vmax.f32 %v5385, %v5386
      %v5388 = vsel %vm282, %v4751, -inf
      %v5389 = vmax.f32 %v5387, %v5388
      %v5390 = vsel %vm282, %v4755, -inf
      %v5391 = vmax.f32 %v5389, %v5390
      %v5392 = vsel %vm282, %v4759, -inf
      %v5393 = vmax.f32 %v5391, %v5392
      %v5394 = vsel %vm282, %v4763, -inf
      %v5395 = vmax.f32 %v5393, %v5394
      %v5396 = vsel %vm282, %v4767, -inf
      %v5397 = vmax.f32 %v5395, %v5396
      %v5398 = vsel %vm282, %v4771, -inf
      %v5399 = vmax.f32 %v5397, %v5398
      %v5400 = vsel %vm282, %v4775, -inf
      %v5401 = vmax.f32 %v5399, %v5400
      %v5402 = vsel %vm282, %v4779, -inf
      %v5403 = vmax.f32 %v5401, %v5402
      %v5404 = vsel %vm282, %v4783, -inf
      %v5405 = vmax.f32 %v5403, %v5404
      %v5406 = vsel %vm282, %v4787, -inf
      %v5407 = vmax.f32 %v5405, %v5406
      %v5408 = vsel %vm282, %v4791, -inf
      %v5409 = vmax.f32 %v5407, %v5408
      %v5410 = vsel %vm282, %v4795, -inf
      %v5411 = vmax.f32 %v5409, %v5410
      %v5412 = vsel %vm282, %v4799, -inf
      %v5413 = vmax.f32 %v5411, %v5412
      %v5414 = vsel %vm282, %v4803, -inf
      %v5415 = vmax.f32 %v5413, %v5414
      %v5416 = vsel %vm282, %v4807, -inf
      %v5417 = vmax.f32 %v5415, %v5416
      %v5418 = vsel %vm282, %v4811, -inf
      %v5419 = vmax.f32 %v5417, %v5418
      %v5420 = vsel %vm282, %v4815, -inf
      %v5421 = vmax.f32 %v5419, %v5420
      %v5422 = vsel %vm282, %v4819, -inf
      %v5423 = vmax.f32 %v5421, %v5422
      %v5424 = vsel %vm282, %v4823, -inf
      %v5425 = vmax.f32 %v5423, %v5424
      %v5426 = vsel %vm282, %v4827, -inf
      %v5427 = vmax.f32 %v5425, %v5426
      %v5428 = vsel %vm282, %v4831, -inf
      %v5429 = vmax.f32 %v5427, %v5428
      %v5430 = vsel %vm282, %v4835, -inf
      %v5431 = vmax.f32 %v5429, %v5430
      %v5432 = vsel %vm282, %v4839, -inf
      %v5433 = vmax.f32 %v5431, %v5432
      %v5434 = vsel %vm282, %v4843, -inf
      %v5435 = vmax.f32 %v5433, %v5434
      %v5436 = vsel %vm282, %v4847, -inf
      %v5437 = vmax.f32 %v5435, %v5436
      %v5438 = vsel %vm282, %v4851, -inf
      %v5439 = vmax.f32 %v5437, %v5438
      %v5440 = vsel %vm282, %v4855, -inf
      %v5441 = vmax.f32 %v5439, %v5440
      %v5442 = vsel %vm282, %v4859, -inf
      %v5443 = vmax.f32 %v5441, %v5442
      %v5444 = vsel %vm282, %v4863, -inf
      %v5445 = vmax.f32 %v5443, %v5444
      %v5446 = vsel %vm282, %v4867, -inf
      %v5447 = vmax.f32 %v5445, %v5446
      %v5448 = vsel %vm282, %v4871, -inf
      %v5449 = vmax.f32 %v5447, %v5448
      %v5450 = vsel %vm282, %v4875, -inf
      %v5451 = vmax.f32 %v5449, %v5450
      %v5452 = vsel %vm282, %v4879, -inf
      %v5453 = vmax.f32 %v5451, %v5452
      %v5454 = vsel %vm282, %v4883, -inf
      %v5455 = vmax.f32 %v5453, %v5454
      %v5456 = vsel %vm282, %v4887, -inf
      %v5457 = vmax.f32 %v5455, %v5456
      %v5458 = vsel %vm282, %v4891, -inf
      %v5459 = vmax.f32 %v5457, %v5458
      %v5460 = vsel %vm282, %v4895, -inf
      %v5461 = vmax.f32 %v5459, %v5460
      %v5462 = vsel %vm282, %v4899, -inf
      %v5463 = vmax.f32 %v5461, %v5462
      %v5464 = vsel %vm282, %v4903, -inf
      %v5465 = vmax.f32 %v5463, %v5464
      %v5466 = vsel %vm282, %v4907, -inf
      %v5467 = vmax.f32 %v5465, %v5466
      %v5468 = vsel %vm282, %v4911, -inf
      %v5469 = vmax.f32 %v5467, %v5468
      %v5470 = vsel %vm282, %v4915, -inf
      %v5471 = vmax.f32 %v5469, %v5470
      %v5472 = vsel %vm282, %v4919, -inf
      %v5473 = vmax.f32 %v5471, %v5472
      %v5474 = vsel %vm282, %v4923, -inf
      %v5475 = vmax.f32 %v5473, %v5474
      %v5476 = vsel %vm282, %v4927, -inf
      %v5477 = vmax.f32 %v5475, %v5476
      %v5478 = vsel %vm282, %v4931, -inf
      %v5479 = vmax.f32 %v5477, %v5478
      %v5480 = vsel %vm282, %v4935, -inf
      %v5481 = vmax.f32 %v5479, %v5480
      %v5482 = vsel %vm282, %v4939, -inf
      %v5483 = vmax.f32 %v5481, %v5482
      %v5484 = vsel %vm282, %v4943, -inf
      %v5485 = vmax.f32 %v5483, %v5484
      %v5486 = vsel %vm282, %v4947, -inf
      %v5487 = vmax.f32 %v5485, %v5486
      %v5488 = vsel %vm282, %v4951, -inf
      %v5489 = vmax.f32 %v5487, %v5488
      %v5490 = vsel %vm282, %v4955, -inf
      %v5491 = vmax.f32 %v5489, %v5490
      %v5492 = vsel %vm282, %v4959, -inf
      %v5493 = vmax.f32 %v5491, %v5492
      %v5494 = vsel %vm282, %v4963, -inf
      %v5495 = vmax.f32 %v5493, %v5494
      %v5496 = vsel %vm282, %v4967, -inf
      %v5497 = vmax.f32 %v5495, %v5496
      %v5498 = vsel %vm282, %v4971, -inf
      %v5499 = vmax.f32 %v5497, %v5498
      %v5500 = vsel %vm282, %v4975, -inf
      %v5501 = vmax.f32 %v5499, %v5500
      %v5502 = vsel %vm282, %v4979, -inf
      %v5503 = vmax.f32 %v5501, %v5502
      %v5504 = vsel %vm282, %v4983, -inf
      %v5505 = vmax.f32 %v5503, %v5504
      %v5506 = vsel %vm282, %v4987, -inf
      %v5507 = vmax.f32 %v5505, %v5506
      %v5508 = vsel %vm282, %v4991, -inf
      %v5509 = vmax.f32 %v5507, %v5508
      %v5510 = vsel %vm282, %v4995, -inf
      %v5511 = vmax.f32 %v5509, %v5510
      %v5512 = vsel %vm282, %v4999, -inf
      %v5513 = vmax.f32 %v5511, %v5512
      %v5514 = vsel %vm282, %v5003, -inf
      %v5515 = vmax.f32 %v5513, %v5514
      %v5516 = vsel %vm282, %v4496, -inf
      %v5517 = vsel %vm282, %v4500, -inf
      %v5518 = vmax.f32 %v5516, %v5517
      %v5519 = vsel %vm282, %v4504, -inf
      %v5520 = vmax.f32 %v5518, %v5519
      %v5521 = vsel %vm282, %v4508, -inf
      %v5522 = vmax.f32 %v5520, %v5521
      %v5523 = vsel %vm282, %v4512, -inf
      %v5524 = vmax.f32 %v5522, %v5523
      %v5525 = vsel %vm282, %v4516, -inf
      %v5526 = vmax.f32 %v5524, %v5525
      %v5527 = vsel %vm282, %v4520, -inf
      %v5528 = vmax.f32 %v5526, %v5527
      %v5529 = vsel %vm282, %v4524, -inf
      %v5530 = vmax.f32 %v5528, %v5529
      %v5531 = vsel %vm282, %v4528, -inf
      %v5532 = vmax.f32 %v5530, %v5531
      %v5533 = vsel %vm282, %v4532, -inf
      %v5534 = vmax.f32 %v5532, %v5533
      %v5535 = vsel %vm282, %v4536, -inf
      %v5536 = vmax.f32 %v5534, %v5535
      %v5537 = vsel %vm282, %v4540, -inf
      %v5538 = vmax.f32 %v5536, %v5537
      %v5539 = vsel %vm282, %v4544, -inf
      %v5540 = vmax.f32 %v5538, %v5539
      %v5541 = vsel %vm282, %v4548, -inf
      %v5542 = vmax.f32 %v5540, %v5541
      %v5543 = vsel %vm282, %v4552, -inf
      %v5544 = vmax.f32 %v5542, %v5543
      %v5545 = vsel %vm282, %v4556, -inf
      %v5546 = vmax.f32 %v5544, %v5545
      %v5547 = vsel %vm282, %v4560, -inf
      %v5548 = vmax.f32 %v5546, %v5547
      %v5549 = vsel %vm282, %v4564, -inf
      %v5550 = vmax.f32 %v5548, %v5549
      %v5551 = vsel %vm282, %v4568, -inf
      %v5552 = vmax.f32 %v5550, %v5551
      %v5553 = vsel %vm282, %v4572, -inf
      %v5554 = vmax.f32 %v5552, %v5553
      %v5555 = vsel %vm282, %v4576, -inf
      %v5556 = vmax.f32 %v5554, %v5555
      %v5557 = vsel %vm282, %v4580, -inf
      %v5558 = vmax.f32 %v5556, %v5557
      %v5559 = vsel %vm282, %v4584, -inf
      %v5560 = vmax.f32 %v5558, %v5559
      %v5561 = vsel %vm282, %v4588, -inf
      %v5562 = vmax.f32 %v5560, %v5561
      %v5563 = vsel %vm282, %v4592, -inf
      %v5564 = vmax.f32 %v5562, %v5563
      %v5565 = vsel %vm282, %v4596, -inf
      %v5566 = vmax.f32 %v5564, %v5565
      %v5567 = vsel %vm282, %v4600, -inf
      %v5568 = vmax.f32 %v5566, %v5567
      %v5569 = vsel %vm282, %v4604, -inf
      %v5570 = vmax.f32 %v5568, %v5569
      %v5571 = vsel %vm282, %v4608, -inf
      %v5572 = vmax.f32 %v5570, %v5571
      %v5573 = vsel %vm282, %v4612, -inf
      %v5574 = vmax.f32 %v5572, %v5573
      %v5575 = vsel %vm282, %v4616, -inf
      %v5576 = vmax.f32 %v5574, %v5575
      %v5577 = vsel %vm282, %v4620, -inf
      %v5578 = vmax.f32 %v5576, %v5577
      %v5579 = vsel %vm282, %v4624, -inf
      %v5580 = vmax.f32 %v5578, %v5579
      %v5581 = vsel %vm282, %v4628, -inf
      %v5582 = vmax.f32 %v5580, %v5581
      %v5583 = vsel %vm282, %v4632, -inf
      %v5584 = vmax.f32 %v5582, %v5583
      %v5585 = vsel %vm282, %v4636, -inf
      %v5586 = vmax.f32 %v5584, %v5585
      %v5587 = vsel %vm282, %v4640, -inf
      %v5588 = vmax.f32 %v5586, %v5587
      %v5589 = vsel %vm282, %v4644, -inf
      %v5590 = vmax.f32 %v5588, %v5589
      %v5591 = vsel %vm282, %v4648, -inf
      %v5592 = vmax.f32 %v5590, %v5591
      %v5593 = vsel %vm282, %v4652, -inf
      %v5594 = vmax.f32 %v5592, %v5593
      %v5595 = vsel %vm282, %v4656, -inf
      %v5596 = vmax.f32 %v5594, %v5595
      %v5597 = vsel %vm282, %v4660, -inf
      %v5598 = vmax.f32 %v5596, %v5597
      %v5599 = vsel %vm282, %v4664, -inf
      %v5600 = vmax.f32 %v5598, %v5599
      %v5601 = vsel %vm282, %v4668, -inf
      %v5602 = vmax.f32 %v5600, %v5601
      %v5603 = vsel %vm282, %v4672, -inf
      %v5604 = vmax.f32 %v5602, %v5603
      %v5605 = vsel %vm282, %v4676, -inf
      %v5606 = vmax.f32 %v5604, %v5605
      %v5607 = vsel %vm282, %v4680, -inf
      %v5608 = vmax.f32 %v5606, %v5607
      %v5609 = vsel %vm282, %v4684, -inf
      %v5610 = vmax.f32 %v5608, %v5609
      %v5611 = vsel %vm282, %v4688, -inf
      %v5612 = vmax.f32 %v5610, %v5611
      %v5613 = vsel %vm282, %v4692, -inf
      %v5614 = vmax.f32 %v5612, %v5613
      %v5615 = vsel %vm282, %v4696, -inf
      %v5616 = vmax.f32 %v5614, %v5615
      %v5617 = vsel %vm282, %v4700, -inf
      %v5618 = vmax.f32 %v5616, %v5617
      %v5619 = vsel %vm282, %v4704, -inf
      %v5620 = vmax.f32 %v5618, %v5619
      %v5621 = vsel %vm282, %v4708, -inf
      %v5622 = vmax.f32 %v5620, %v5621
      %v5623 = vsel %vm282, %v4712, -inf
      %v5624 = vmax.f32 %v5622, %v5623
      %v5625 = vsel %vm282, %v4716, -inf
      %v5626 = vmax.f32 %v5624, %v5625
      %v5627 = vsel %vm282, %v4720, -inf
      %v5628 = vmax.f32 %v5626, %v5627
      %v5629 = vsel %vm282, %v4724, -inf
      %v5630 = vmax.f32 %v5628, %v5629
      %v5631 = vsel %vm282, %v4728, -inf
      %v5632 = vmax.f32 %v5630, %v5631
      %v5633 = vsel %vm282, %v4732, -inf
      %v5634 = vmax.f32 %v5632, %v5633
      %v5635 = vsel %vm282, %v4736, -inf
      %v5636 = vmax.f32 %v5634, %v5635
      %v5637 = vsel %vm282, %v4740, -inf
      %v5638 = vmax.f32 %v5636, %v5637
      %v5639 = vsel %vm282, %v4744, -inf
      %v5640 = vmax.f32 %v5638, %v5639
      %v5641 = vsel %vm282, %v4748, -inf
      %v5642 = vmax.f32 %v5640, %v5641
      %v5643 = vsel %vm282, %v4752, -inf
      %v5644 = vmax.f32 %v5642, %v5643
      %v5645 = vsel %vm282, %v4756, -inf
      %v5646 = vmax.f32 %v5644, %v5645
      %v5647 = vsel %vm282, %v4760, -inf
      %v5648 = vmax.f32 %v5646, %v5647
      %v5649 = vsel %vm282, %v4764, -inf
      %v5650 = vmax.f32 %v5648, %v5649
      %v5651 = vsel %vm282, %v4768, -inf
      %v5652 = vmax.f32 %v5650, %v5651
      %v5653 = vsel %vm282, %v4772, -inf
      %v5654 = vmax.f32 %v5652, %v5653
      %v5655 = vsel %vm282, %v4776, -inf
      %v5656 = vmax.f32 %v5654, %v5655
      %v5657 = vsel %vm282, %v4780, -inf
      %v5658 = vmax.f32 %v5656, %v5657
      %v5659 = vsel %vm282, %v4784, -inf
      %v5660 = vmax.f32 %v5658, %v5659
      %v5661 = vsel %vm282, %v4788, -inf
      %v5662 = vmax.f32 %v5660, %v5661
      %v5663 = vsel %vm282, %v4792, -inf
      %v5664 = vmax.f32 %v5662, %v5663
      %v5665 = vsel %vm282, %v4796, -inf
      %v5666 = vmax.f32 %v5664, %v5665
      %v5667 = vsel %vm282, %v4800, -inf
      %v5668 = vmax.f32 %v5666, %v5667
      %v5669 = vsel %vm282, %v4804, -inf
      %v5670 = vmax.f32 %v5668, %v5669
      %v5671 = vsel %vm282, %v4808, -inf
      %v5672 = vmax.f32 %v5670, %v5671
      %v5673 = vsel %vm282, %v4812, -inf
      %v5674 = vmax.f32 %v5672, %v5673
      %v5675 = vsel %vm282, %v4816, -inf
      %v5676 = vmax.f32 %v5674, %v5675
      %v5677 = vsel %vm282, %v4820, -inf
      %v5678 = vmax.f32 %v5676, %v5677
      %v5679 = vsel %vm282, %v4824, -inf
      %v5680 = vmax.f32 %v5678, %v5679
      %v5681 = vsel %vm282, %v4828, -inf
      %v5682 = vmax.f32 %v5680, %v5681
      %v5683 = vsel %vm282, %v4832, -inf
      %v5684 = vmax.f32 %v5682, %v5683
      %v5685 = vsel %vm282, %v4836, -inf
      %v5686 = vmax.f32 %v5684, %v5685
      %v5687 = vsel %vm282, %v4840, -inf
      %v5688 = vmax.f32 %v5686, %v5687
      %v5689 = vsel %vm282, %v4844, -inf
      %v5690 = vmax.f32 %v5688, %v5689
      %v5691 = vsel %vm282, %v4848, -inf
      %v5692 = vmax.f32 %v5690, %v5691
      %v5693 = vsel %vm282, %v4852, -inf
      %v5694 = vmax.f32 %v5692, %v5693
      %v5695 = vsel %vm282, %v4856, -inf
      %v5696 = vmax.f32 %v5694, %v5695
      %v5697 = vsel %vm282, %v4860, -inf
      %v5698 = vmax.f32 %v5696, %v5697
      %v5699 = vsel %vm282, %v4864, -inf
      %v5700 = vmax.f32 %v5698, %v5699
      %v5701 = vsel %vm282, %v4868, -inf
      %v5702 = vmax.f32 %v5700, %v5701
      %v5703 = vsel %vm282, %v4872, -inf
      %v5704 = vmax.f32 %v5702, %v5703
      %v5705 = vsel %vm282, %v4876, -inf
      %v5706 = vmax.f32 %v5704, %v5705
      %v5707 = vsel %vm282, %v4880, -inf
      %v5708 = vmax.f32 %v5706, %v5707
      %v5709 = vsel %vm282, %v4884, -inf
      %v5710 = vmax.f32 %v5708, %v5709
      %v5711 = vsel %vm282, %v4888, -inf
      %v5712 = vmax.f32 %v5710, %v5711
      %v5713 = vsel %vm282, %v4892, -inf
      %v5714 = vmax.f32 %v5712, %v5713
      %v5715 = vsel %vm282, %v4896, -inf
      %v5716 = vmax.f32 %v5714, %v5715
      %v5717 = vsel %vm282, %v4900, -inf
      %v5718 = vmax.f32 %v5716, %v5717
      %v5719 = vsel %vm282, %v4904, -inf
      %v5720 = vmax.f32 %v5718, %v5719
      %v5721 = vsel %vm282, %v4908, -inf
      %v5722 = vmax.f32 %v5720, %v5721
      %v5723 = vsel %vm282, %v4912, -inf
      %v5724 = vmax.f32 %v5722, %v5723
      %v5725 = vsel %vm282, %v4916, -inf
      %v5726 = vmax.f32 %v5724, %v5725
      %v5727 = vsel %vm282, %v4920, -inf
      %v5728 = vmax.f32 %v5726, %v5727
      %v5729 = vsel %vm282, %v4924, -inf
      %v5730 = vmax.f32 %v5728, %v5729
      %v5731 = vsel %vm282, %v4928, -inf
      %v5732 = vmax.f32 %v5730, %v5731
      %v5733 = vsel %vm282, %v4932, -inf
      %v5734 = vmax.f32 %v5732, %v5733
      %v5735 = vsel %vm282, %v4936, -inf
      %v5736 = vmax.f32 %v5734, %v5735
      %v5737 = vsel %vm282, %v4940, -inf
      %v5738 = vmax.f32 %v5736, %v5737
      %v5739 = vsel %vm282, %v4944, -inf
      %v5740 = vmax.f32 %v5738, %v5739
      %v5741 = vsel %vm282, %v4948, -inf
      %v5742 = vmax.f32 %v5740, %v5741
      %v5743 = vsel %vm282, %v4952, -inf
      %v5744 = vmax.f32 %v5742, %v5743
      %v5745 = vsel %vm282, %v4956, -inf
      %v5746 = vmax.f32 %v5744, %v5745
      %v5747 = vsel %vm282, %v4960, -inf
      %v5748 = vmax.f32 %v5746, %v5747
      %v5749 = vsel %vm282, %v4964, -inf
      %v5750 = vmax.f32 %v5748, %v5749
      %v5751 = vsel %vm282, %v4968, -inf
      %v5752 = vmax.f32 %v5750, %v5751
      %v5753 = vsel %vm282, %v4972, -inf
      %v5754 = vmax.f32 %v5752, %v5753
      %v5755 = vsel %vm282, %v4976, -inf
      %v5756 = vmax.f32 %v5754, %v5755
      %v5757 = vsel %vm282, %v4980, -inf
      %v5758 = vmax.f32 %v5756, %v5757
      %v5759 = vsel %vm282, %v4984, -inf
      %v5760 = vmax.f32 %v5758, %v5759
      %v5761 = vsel %vm282, %v4988, -inf
      %v5762 = vmax.f32 %v5760, %v5761
      %v5763 = vsel %vm282, %v4992, -inf
      %v5764 = vmax.f32 %v5762, %v5763
      %v5765 = vsel %vm282, %v4996, -inf
      %v5766 = vmax.f32 %v5764, %v5765
      %v5767 = vsel %vm282, %v5000, -inf
      %v5768 = vmax.f32 %v5766, %v5767
      %v5769 = vsel %vm282, %v5004, -inf
      %v5770 = vmax.f32 %v5768, %v5769
      %v5771 = vsel %vm282, %v4497, -inf
      %v5772 = vsel %vm282, %v4501, -inf
      %v5773 = vmax.f32 %v5771, %v5772
      %v5774 = vsel %vm282, %v4505, -inf
      %v5775 = vmax.f32 %v5773, %v5774
      %v5776 = vsel %vm282, %v4509, -inf
      %v5777 = vmax.f32 %v5775, %v5776
      %v5778 = vsel %vm282, %v4513, -inf
      %v5779 = vmax.f32 %v5777, %v5778
      %v5780 = vsel %vm282, %v4517, -inf
      %v5781 = vmax.f32 %v5779, %v5780
      %v5782 = vsel %vm282, %v4521, -inf
      %v5783 = vmax.f32 %v5781, %v5782
      %v5784 = vsel %vm282, %v4525, -inf
      %v5785 = vmax.f32 %v5783, %v5784
      %v5786 = vsel %vm282, %v4529, -inf
      %v5787 = vmax.f32 %v5785, %v5786
      %v5788 = vsel %vm282, %v4533, -inf
      %v5789 = vmax.f32 %v5787, %v5788
      %v5790 = vsel %vm282, %v4537, -inf
      %v5791 = vmax.f32 %v5789, %v5790
      %v5792 = vsel %vm282, %v4541, -inf
      %v5793 = vmax.f32 %v5791, %v5792
      %v5794 = vsel %vm282, %v4545, -inf
      %v5795 = vmax.f32 %v5793, %v5794
      %v5796 = vsel %vm282, %v4549, -inf
      %v5797 = vmax.f32 %v5795, %v5796
      %v5798 = vsel %vm282, %v4553, -inf
      %v5799 = vmax.f32 %v5797, %v5798
      %v5800 = vsel %vm282, %v4557, -inf
      %v5801 = vmax.f32 %v5799, %v5800
      %v5802 = vsel %vm282, %v4561, -inf
      %v5803 = vmax.f32 %v5801, %v5802
      %v5804 = vsel %vm282, %v4565, -inf
      %v5805 = vmax.f32 %v5803, %v5804
      %v5806 = vsel %vm282, %v4569, -inf
      %v5807 = vmax.f32 %v5805, %v5806
      %v5808 = vsel %vm282, %v4573, -inf
      %v5809 = vmax.f32 %v5807, %v5808
      %v5810 = vsel %vm282, %v4577, -inf
      %v5811 = vmax.f32 %v5809, %v5810
      %v5812 = vsel %vm282, %v4581, -inf
      %v5813 = vmax.f32 %v5811, %v5812
      %v5814 = vsel %vm282, %v4585, -inf
      %v5815 = vmax.f32 %v5813, %v5814
      %v5816 = vsel %vm282, %v4589, -inf
      %v5817 = vmax.f32 %v5815, %v5816
      %v5818 = vsel %vm282, %v4593, -inf
      %v5819 = vmax.f32 %v5817, %v5818
      %v5820 = vsel %vm282, %v4597, -inf
      %v5821 = vmax.f32 %v5819, %v5820
      %v5822 = vsel %vm282, %v4601, -inf
      %v5823 = vmax.f32 %v5821, %v5822
      %v5824 = vsel %vm282, %v4605, -inf
      %v5825 = vmax.f32 %v5823, %v5824
      %v5826 = vsel %vm282, %v4609, -inf
      %v5827 = vmax.f32 %v5825, %v5826
      %v5828 = vsel %vm282, %v4613, -inf
      %v5829 = vmax.f32 %v5827, %v5828
      %v5830 = vsel %vm282, %v4617, -inf
      %v5831 = vmax.f32 %v5829, %v5830
      %v5832 = vsel %vm282, %v4621, -inf
      %v5833 = vmax.f32 %v5831, %v5832
      %v5834 = vsel %vm282, %v4625, -inf
      %v5835 = vmax.f32 %v5833, %v5834
      %v5836 = vsel %vm282, %v4629, -inf
      %v5837 = vmax.f32 %v5835, %v5836
      %v5838 = vsel %vm282, %v4633, -inf
      %v5839 = vmax.f32 %v5837, %v5838
      %v5840 = vsel %vm282, %v4637, -inf
      %v5841 = vmax.f32 %v5839, %v5840
      %v5842 = vsel %vm282, %v4641, -inf
      %v5843 = vmax.f32 %v5841, %v5842
      %v5844 = vsel %vm282, %v4645, -inf
      %v5845 = vmax.f32 %v5843, %v5844
      %v5846 = vsel %vm282, %v4649, -inf
      %v5847 = vmax.f32 %v5845, %v5846
      %v5848 = vsel %vm282, %v4653, -inf
      %v5849 = vmax.f32 %v5847, %v5848
      %v5850 = vsel %vm282, %v4657, -inf
      %v5851 = vmax.f32 %v5849, %v5850
      %v5852 = vsel %vm282, %v4661, -inf
      %v5853 = vmax.f32 %v5851, %v5852
      %v5854 = vsel %vm282, %v4665, -inf
      %v5855 = vmax.f32 %v5853, %v5854
      %v5856 = vsel %vm282, %v4669, -inf
      %v5857 = vmax.f32 %v5855, %v5856
      %v5858 = vsel %vm282, %v4673, -inf
      %v5859 = vmax.f32 %v5857, %v5858
      %v5860 = vsel %vm282, %v4677, -inf
      %v5861 = vmax.f32 %v5859, %v5860
      %v5862 = vsel %vm282, %v4681, -inf
      %v5863 = vmax.f32 %v5861, %v5862
      %v5864 = vsel %vm282, %v4685, -inf
      %v5865 = vmax.f32 %v5863, %v5864
      %v5866 = vsel %vm282, %v4689, -inf
      %v5867 = vmax.f32 %v5865, %v5866
      %v5868 = vsel %vm282, %v4693, -inf
      %v5869 = vmax.f32 %v5867, %v5868
      %v5870 = vsel %vm282, %v4697, -inf
      %v5871 = vmax.f32 %v5869, %v5870
      %v5872 = vsel %vm282, %v4701, -inf
      %v5873 = vmax.f32 %v5871, %v5872
      %v5874 = vsel %vm282, %v4705, -inf
      %v5875 = vmax.f32 %v5873, %v5874
      %v5876 = vsel %vm282, %v4709, -inf
      %v5877 = vmax.f32 %v5875, %v5876
      %v5878 = vsel %vm282, %v4713, -inf
      %v5879 = vmax.f32 %v5877, %v5878
      %v5880 = vsel %vm282, %v4717, -inf
      %v5881 = vmax.f32 %v5879, %v5880
      %v5882 = vsel %vm282, %v4721, -inf
      %v5883 = vmax.f32 %v5881, %v5882
      %v5884 = vsel %vm282, %v4725, -inf
      %v5885 = vmax.f32 %v5883, %v5884
      %v5886 = vsel %vm282, %v4729, -inf
      %v5887 = vmax.f32 %v5885, %v5886
      %v5888 = vsel %vm282, %v4733, -inf
      %v5889 = vmax.f32 %v5887, %v5888
      %v5890 = vsel %vm282, %v4737, -inf
      %v5891 = vmax.f32 %v5889, %v5890
      %v5892 = vsel %vm282, %v4741, -inf
      %v5893 = vmax.f32 %v5891, %v5892
      %v5894 = vsel %vm282, %v4745, -inf
      %v5895 = vmax.f32 %v5893, %v5894
      %v5896 = vsel %vm282, %v4749, -inf
      %v5897 = vmax.f32 %v5895, %v5896
      %v5898 = vsel %vm282, %v4753, -inf
      %v5899 = vmax.f32 %v5897, %v5898
      %v5900 = vsel %vm282, %v4757, -inf
      %v5901 = vmax.f32 %v5899, %v5900
      %v5902 = vsel %vm282, %v4761, -inf
      %v5903 = vmax.f32 %v5901, %v5902
      %v5904 = vsel %vm282, %v4765, -inf
      %v5905 = vmax.f32 %v5903, %v5904
      %v5906 = vsel %vm282, %v4769, -inf
      %v5907 = vmax.f32 %v5905, %v5906
      %v5908 = vsel %vm282, %v4773, -inf
      %v5909 = vmax.f32 %v5907, %v5908
      %v5910 = vsel %vm282, %v4777, -inf
      %v5911 = vmax.f32 %v5909, %v5910
      %v5912 = vsel %vm282, %v4781, -inf
      %v5913 = vmax.f32 %v5911, %v5912
      %v5914 = vsel %vm282, %v4785, -inf
      %v5915 = vmax.f32 %v5913, %v5914
      %v5916 = vsel %vm282, %v4789, -inf
      %v5917 = vmax.f32 %v5915, %v5916
      %v5918 = vsel %vm282, %v4793, -inf
      %v5919 = vmax.f32 %v5917, %v5918
      %v5920 = vsel %vm282, %v4797, -inf
      %v5921 = vmax.f32 %v5919, %v5920
      %v5922 = vsel %vm282, %v4801, -inf
      %v5923 = vmax.f32 %v5921, %v5922
      %v5924 = vsel %vm282, %v4805, -inf
      %v5925 = vmax.f32 %v5923, %v5924
      %v5926 = vsel %vm282, %v4809, -inf
      %v5927 = vmax.f32 %v5925, %v5926
      %v5928 = vsel %vm282, %v4813, -inf
      %v5929 = vmax.f32 %v5927, %v5928
      %v5930 = vsel %vm282, %v4817, -inf
      %v5931 = vmax.f32 %v5929, %v5930
      %v5932 = vsel %vm282, %v4821, -inf
      %v5933 = vmax.f32 %v5931, %v5932
      %v5934 = vsel %vm282, %v4825, -inf
      %v5935 = vmax.f32 %v5933, %v5934
      %v5936 = vsel %vm282, %v4829, -inf
      %v5937 = vmax.f32 %v5935, %v5936
      %v5938 = vsel %vm282, %v4833, -inf
      %v5939 = vmax.f32 %v5937, %v5938
      %v5940 = vsel %vm282, %v4837, -inf
      %v5941 = vmax.f32 %v5939, %v5940
      %v5942 = vsel %vm282, %v4841, -inf
      %v5943 = vmax.f32 %v5941, %v5942
      %v5944 = vsel %vm282, %v4845, -inf
      %v5945 = vmax.f32 %v5943, %v5944
      %v5946 = vsel %vm282, %v4849, -inf
      %v5947 = vmax.f32 %v5945, %v5946
      %v5948 = vsel %vm282, %v4853, -inf
      %v5949 = vmax.f32 %v5947, %v5948
      %v5950 = vsel %vm282, %v4857, -inf
      %v5951 = vmax.f32 %v5949, %v5950
      %v5952 = vsel %vm282, %v4861, -inf
      %v5953 = vmax.f32 %v5951, %v5952
      %v5954 = vsel %vm282, %v4865, -inf
      %v5955 = vmax.f32 %v5953, %v5954
      %v5956 = vsel %vm282, %v4869, -inf
      %v5957 = vmax.f32 %v5955, %v5956
      %v5958 = vsel %vm282, %v4873, -inf
      %v5959 = vmax.f32 %v5957, %v5958
      %v5960 = vsel %vm282, %v4877, -inf
      %v5961 = vmax.f32 %v5959, %v5960
      %v5962 = vsel %vm282, %v4881, -inf
      %v5963 = vmax.f32 %v5961, %v5962
      %v5964 = vsel %vm282, %v4885, -inf
      %v5965 = vmax.f32 %v5963, %v5964
      %v5966 = vsel %vm282, %v4889, -inf
      %v5967 = vmax.f32 %v5965, %v5966
      %v5968 = vsel %vm282, %v4893, -inf
      %v5969 = vmax.f32 %v5967, %v5968
      %v5970 = vsel %vm282, %v4897, -inf
      %v5971 = vmax.f32 %v5969, %v5970
      %v5972 = vsel %vm282, %v4901, -inf
      %v5973 = vmax.f32 %v5971, %v5972
      %v5974 = vsel %vm282, %v4905, -inf
      %v5975 = vmax.f32 %v5973, %v5974
      %v5976 = vsel %vm282, %v4909, -inf
      %v5977 = vmax.f32 %v5975, %v5976
      %v5978 = vsel %vm282, %v4913, -inf
      %v5979 = vmax.f32 %v5977, %v5978
      %v5980 = vsel %vm282, %v4917, -inf
      %v5981 = vmax.f32 %v5979, %v5980
      %v5982 = vsel %vm282, %v4921, -inf
      %v5983 = vmax.f32 %v5981, %v5982
      %v5984 = vsel %vm282, %v4925, -inf
      %v5985 = vmax.f32 %v5983, %v5984
      %v5986 = vsel %vm282, %v4929, -inf
      %v5987 = vmax.f32 %v5985, %v5986
      %v5988 = vsel %vm282, %v4933, -inf
      %v5989 = vmax.f32 %v5987, %v5988
      %v5990 = vsel %vm282, %v4937, -inf
      %v5991 = vmax.f32 %v5989, %v5990
      %v5992 = vsel %vm282, %v4941, -inf
      %v5993 = vmax.f32 %v5991, %v5992
      %v5994 = vsel %vm282, %v4945, -inf
      %v5995 = vmax.f32 %v5993, %v5994
      %v5996 = vsel %vm282, %v4949, -inf
      %v5997 = vmax.f32 %v5995, %v5996
      %v5998 = vsel %vm282, %v4953, -inf
      %v5999 = vmax.f32 %v5997, %v5998
      %v6000 = vsel %vm282, %v4957, -inf
      %v6001 = vmax.f32 %v5999, %v6000
      %v6002 = vsel %vm282, %v4961, -inf
      %v6003 = vmax.f32 %v6001, %v6002
      %v6004 = vsel %vm282, %v4965, -inf
      %v6005 = vmax.f32 %v6003, %v6004
      %v6006 = vsel %vm282, %v4969, -inf
      %v6007 = vmax.f32 %v6005, %v6006
      %v6008 = vsel %vm282, %v4973, -inf
      %v6009 = vmax.f32 %v6007, %v6008
      %v6010 = vsel %vm282, %v4977, -inf
      %v6011 = vmax.f32 %v6009, %v6010
      %v6012 = vsel %vm282, %v4981, -inf
      %v6013 = vmax.f32 %v6011, %v6012
      %v6014 = vsel %vm282, %v4985, -inf
      %v6015 = vmax.f32 %v6013, %v6014
      %v6016 = vsel %vm282, %v4989, -inf
      %v6017 = vmax.f32 %v6015, %v6016
      %v6018 = vsel %vm282, %v4993, -inf
      %v6019 = vmax.f32 %v6017, %v6018
      %v6020 = vsel %vm282, %v4997, -inf
      %v6021 = vmax.f32 %v6019, %v6020
      %v6022 = vsel %vm282, %v5001, -inf
      %v6023 = vmax.f32 %v6021, %v6022
      %v6024 = vsel %vm282, %v5005, -inf
      %v6025 = vmax.f32 %v6023, %v6024
      %v6026 = vld [vmem:[%s5] sm:$0xff]
      %v6027 = vld [vmem:[%s5 + $0x8] sm:$0xff]
      %v6028 = vld [vmem:[%s5 + $0x10] sm:$0xff]
      %v6029 = vld [vmem:[%s5 + $0x18] sm:$0xff]
      %v6030 = vmax.f32 %v6026, %v5260
      %v6031 = vmax.f32 %v6027, %v5515
      %v6032 = vmax.f32 %v6028, %v5770
      %v6033 = vmax.f32 %v6029, %v6025
      %6034 = vst.msk [vmem:[%s5] sm:$0xff] %vm282, %v6030
      %6035 = vst.msk [vmem:[%s5 + $0x8] sm:$0xff] %vm282, %v6031
      %6036 = vst.msk [vmem:[%s5 + $0x10] sm:$0xff] %vm282, %v6032
      %6037 = vst.msk [vmem:[%s5 + $0x18] sm:$0xff] %vm282, %v6033
      %s6038 = smul.u32 16, %s17
      %p6039 = scmp.lt.s32.totalorder %s6038, 63
      %s6040 = scalar_select %p6039, %s6038, 63
      %s6041 = smul.addr %s6040, 8
      %s6042 = scalar_lea.vmem %s4, %s6041
      // Predicated region
      $region41: #{tpu_custom_call.1} parent=35 // pred_check
        %p6043 = pneg %p129
      $region42: #{tpu_custom_call.1} parent=35 // pred_check_branch
        %6045 = sbr.rel (%p6043) target = $region44
      $region43: #{tpu_custom_call.1} parent=35 // pred_region
        %s6046 = smul.u32 16, %s17
      $region44: #{tpu_custom_call.1} parent=35 // pred_fallthru
        _
      // Predicated region
      $region45: #{tpu_custom_call.1} parent=35 // pred_check
        %p6047 = pneg %p150
      $region46: #{tpu_custom_call.1} parent=35 // pred_check_branch
        %6049 = sbr.rel (%p6047) target = $region48
      $region47: #{tpu_custom_call.1} parent=35 // pred_region
        _
      $region48: #{tpu_custom_call.1} parent=35 // pred_fallthru
        _
      // Predicated region
      $region49: #{tpu_custom_call.1} parent=35 // pred_check
        %p6050 = pneg %p150
      $region50: #{tpu_custom_call.1} parent=35 // pred_check_branch
        %6052 = sbr.rel (%p6050) target = $region52
      $region51: #{tpu_custom_call.1} parent=35 // pred_region
        _
      $region52: #{tpu_custom_call.1} parent=35 // pred_fallthru
        _
    $region36: #{tpu_custom_call.1} parent=5 // pred_fallthru
      _
    %p6053 = scmp.le.s32.totalorder 2, %s12
    // Predicated region
    $region53: #{tpu_custom_call.1} parent=5 // pred_check
      %p6054 = pneg %p6053
    $region54: #{tpu_custom_call.1} parent=5 // pred_check_branch
      %6056 = sbr.rel (%p6054) target = $region56
    $region55: #{tpu_custom_call.1} parent=5 // pred_region
      %s6057 = ssub.s32 %s12, 2
      // Predicated region
      $region57: #{tpu_custom_call.1} parent=55 // pred_check
        %p6058 = pneg %p135
      $region58: #{tpu_custom_call.1} parent=55 // pred_check_branch
        %6060 = sbr.rel (%p6058) target = $region60
      $region59: #{tpu_custom_call.1} parent=55 // pred_region
        %s6061 = smul.u32 16, %s18
        %p6062 = scmp.lt.s32.totalorder %s6061, 63
        %s6063 = scalar_select %p6062, %s6061, 63
        %s6064 = smul.addr %s6063, 8
        %s6065 = scalar_lea.vmem %s4, %s6064
      $region60: #{tpu_custom_call.1} parent=55 // pred_fallthru
        _
    $region56: #{tpu_custom_call.1} parent=5 // pred_fallthru
      _
  $region6: #{tpu_custom_call.1} parent=0 // loop_footer
    %s16 = sadd.s32 1, %s12
  $region7: #{tpu_custom_call.1} parent=0 // loop_footer_branch
    %11 = sbr.rel target = $region3
  $region8: #{tpu_custom_call.1} parent=0 // loop_exit
    _

</llo_original>
